<compile_context>
chip_gen: v7x
topology: tpu7x:2x2x1
jax: 0.10.0
libtpu: 0.0.40
codegen_flags: <defaults>
</compile_context>

<pallas_src>
import functools

import jax
import jax.numpy as jnp
from jax.experimental import pallas as pl
from jax.experimental.pallas import tpu as pltpu


def _round_up(x, m):
    return (x + m - 1) // m * m


def _pad_axis_to(x, axis, target):
    size = x.shape[axis]
    if size == target:
        return x
    pads = [(0, 0)] * x.ndim
    pads[axis] = (0, target - size)
    return jnp.pad(x, pads)


# ---------------------------------------------------------------------------
# Fused kernel (single K step):
#   out[m, n] = relu( max_p( sum_k A[p, m, k] * W[k, n] ) + b[n] )
# With pool=False the leading P axis is 1 and the epilogue is bias (+ relu).
# ---------------------------------------------------------------------------
def _fused_gemm_kernel(a_ref, w_ref, b_ref, o_ref, *, relu, pool):
    P, tm, tk = a_ref.shape
    # One long LHS stream for the MXU: collapse the pool-offset axis.
    # Layout-preserving because tm is a multiple of the bf16 sublane tile (16).
    a = a_ref[...].reshape(P * tm, tk)
    acc = jnp.dot(a, w_ref[...], preferred_element_type=jnp.float32)  # (P*tm, tn)

    r = acc[:tm]
    if pool:
        for p in range(1, P):                  # elementwise max over 2x2 window
            r = jnp.maximum(r, acc[p * tm:(p + 1) * tm])
    r = r + b_ref[...]                         # single bias add on f32 accumulator
    if relu:
        r = jnp.maximum(r, 0.0)                # single ReLU
    o_ref[...] = r.astype(o_ref.dtype)         # lane-dense store (tn = 128)


def _fused_gemm(a, w, b, *, relu, pool, out_dtype=jnp.float32):
    """a: (P, M, K) patch groups; w: (K, N); b: (N,)  ->  (M, N)."""
    P, M, K = a.shape
    Kw, N = w.shape
    assert K == Kw and b.shape == (N,)
    # Entire K fits in one block for every layer of this model.
    assert K <= 2048
    # TODO(synk): add a K-loop + f32 VMEM accumulator path for K > ~2048.

    # bf16 operands for the MXU; accumulation stays f32 inside the kernel.
    a = a.astype(jnp.bfloat16)
    w = w.astype(jnp.bfloat16)
    b = b.astype(jnp.float32)

    # N padded to a lane-dense multiple of 128 (unmasked vst); K is NOT padded
    # (block K == full array K is legal and avoids 5x DMA inflation for conv1).
    Np = _round_up(N, 128)
    tn = 256 if (Np % 256 == 0 and Np >= 256) else 128

    # M tiling: at least 2 grid steps when M is non-trivial so the A-slab DMA
    # overlaps compute and v7x can shard across both TensorCores.
    target_tm = 256
    m_steps = max(2, -(-M // target_tm)) if M > 16 else 1
    tm = _round_up(-(-M // m_steps), 16)       # 16-aligned for bf16 sublane tiles
    Mp = m_steps * tm

    a = _pad_axis_to(a, 1, Mp)
    w = _pad_axis_to(w, 1, Np)
    b2 = _pad_axis_to(b.reshape(1, N), 1, Np)

    grid = (m_steps, Np // tn)

    out = pl.pallas_call(
        functools.partial(_fused_gemm_kernel, relu=relu, pool=pool),
        out_shape=jax.ShapeDtypeStruct((Mp, Np), out_dtype),
        grid_spec=pltpu.PrefetchScalarGridSpec(
            num_scalar_prefetch=0,
            grid=grid,
            in_specs=[
                pl.BlockSpec((P, tm, K), lambda i, j: (0, i, 0)),
                pl.BlockSpec((K, tn), lambda i, j: (0, j)),
                pl.BlockSpec((1, tn), lambda i, j: (0, j)),
            ],
            out_specs=pl.BlockSpec((tm, tn), lambda i, j: (i, j)),
        ),
        compiler_params=pltpu.CompilerParams(
            dimension_semantics=("parallel", "parallel"),
            vmem_limit_bytes=32 * 1024 * 1024,
        ),
    )(a, w, b2)
    return out[:M, :N]


# ---------------------------------------------------------------------------
# Wrapper-side layout plumbing (plain XLA ops).
# ---------------------------------------------------------------------------
def _pool_grouped_patches(x, ksize, pad, pool):
    """x: (B, H, W, C) NHWC -> (pool*pool, B*(H//pool)*(W//pool), ksize*ksize*C).

    Leading axis enumerates the 2x2 pool-window offsets so the kernel can fuse
    max-pooling as an elementwise max over 4 accumulator row-slabs.
    """
    B, H, W, C = x.shape
    assert H % pool == 0 and W % pool == 0
    xp = jnp.pad(x, ((0, 0), (pad, pad), (pad, pad), (0, 0)))
    slabs = [xp[:, kh:kh + H, kw:kw + W, :]
             for kh in range(ksize) for kw in range(ksize)]
    patches = jnp.stack(slabs, axis=3)                   # (B, H, W, k*k, C)
    Ho, Wo = H // pool, W // pool
    patches = patches.reshape(B, Ho, pool, Wo, pool, ksize * ksize, C)
    patches = patches.transpose(2, 4, 0, 1, 3, 5, 6)     # (ph, pw, B, Ho, Wo, kk, C)
    return patches.reshape(pool * pool, B * Ho * Wo, ksize * ksize * C)
# TODO(synk): for large feature maps, build patches inside the kernel from
# overlapping NHWC tiles (manual DMA) instead of materializing im2col in HBM.


def _conv_relu_pool(x, w, b, *, ksize=5, pad=2, pool=2, out_dtype=jnp.float32):
    """x: (B, H, W, Cin) NHWC; w: (kh, kw, Cin, Cout) HWIO -> (B, H//2, W//2, Cout)."""
    B, H, W, Cin = x.shape
    Cout = w.shape[-1]
    Ho, Wo = H // pool, W // pool
    a = _pool_grouped_patches(x, ksize, pad, pool)       # (4, B*Ho*Wo, k*k*Cin)
    wm = w.reshape(ksize * ksize * Cin, Cout)            # rows in (kh, kw, cin) order
    y = _fused_gemm(a, wm, b, relu=True, pool=True, out_dtype=out_dtype)
    return y.reshape(B, Ho, Wo, Cout)


def cnn_forward(x_nchw, params):
    """Pallas forward pass of the PyTorch CNN.  Returns (logits, flat_features)."""
    B = x_nchw.shape[0]
    x = jnp.transpose(x_nchw, (0, 2, 3, 1))              # NCHW -> NHWC at entry
    # conv1 output kept bf16: halves the wrapper-side im2col traffic for conv2.
    y = _conv_relu_pool(x, params["w1"], params["b1"],
                        out_dtype=jnp.bfloat16)           # (B, 14, 14, 16)
    y = _conv_relu_pool(y, params["w2"], params["b2"],
                        out_dtype=jnp.float32)            # (B, 7, 7, 32)
    # Flatten in NCHW order to match torch's x.view(B, -1).
    feat = jnp.transpose(y, (0, 3, 1, 2)).reshape(B, -1)  # (B, 32*7*7)
    logits = _fused_gemm(feat[None], params["wfc"], params["bfc"],
                         relu=False, pool=False, out_dtype=jnp.float32)  # (B, 10)
    return logits, feat


# ---------------------------------------------------------------------------
# Pure-XLA f32 reference (sanity check for the Pallas path).
# ---------------------------------------------------------------------------
def reference_forward(x_nchw, params):
    x = jnp.transpose(x_nchw, (0, 2, 3, 1))

    def block(x, w, b):
        y = jax.lax.conv_general_dilated(
            x, w, window_strides=(1, 1), padding=((2, 2), (2, 2)),
            dimension_numbers=("NHWC", "HWIO", "NHWC"),
            precision=jax.lax.Precision.HIGHEST)
        y = jnp.maximum(y + b, 0.0)
        B, H, W, C = y.shape
        return y.reshape(B, H // 2, 2, W // 2, 2, C).max(axis=(2, 4))

    y = block(x, params["w1"], params["b1"])
    y = block(y, params["w2"], params["b2"])
    feat = jnp.transpose(y, (0, 3, 1, 2)).reshape(y.shape[0], -1)
    logits = jnp.dot(feat, params["wfc"],
                     precision=jax.lax.Precision.HIGHEST) + params["bfc"]
    return logits, feat


if __name__ == "__main__":
    key = jax.random.PRNGKey(0)
    kx, k1, k2, k3, k4, k5, k6 = jax.random.split(key, 7)
    B = 2
    x = jax.random.uniform(kx, (B, 1, 28, 28), dtype=jnp.float32)
    params = {
        "w1": 0.1 * jax.random.normal(k1, (5, 5, 1, 16), jnp.float32),
        "b1": 0.1 * jax.random.normal(k2, (16,), jnp.float32),
        "w2": 0.05 * jax.random.normal(k3, (5, 5, 16, 32), jnp.float32),
        "b2": 0.1 * jax.random.normal(k4, (32,), jnp.float32),
        "wfc": 0.05 * jax.random.normal(k5, (32 * 7 * 7, 10), jnp.float32),
        "bfc": 0.1 * jax.random.normal(k6, (10,), jnp.float32),
    }

    logits, feat = jax.jit(cnn_forward)(x, params)
    jax.block_until_ready((logits, feat))

    ref_logits, ref_feat = reference_forward(x, params)
    assert logits.shape == (B, 10) and feat.shape == (B, 32 * 7 * 7)
    # bf16 MXU operands vs f32 reference -> loose-but-meaningful tolerance.
    assert bool(jnp.allclose(feat, ref_feat, rtol=5e-2, atol=5e-2))
    assert bool(jnp.allclose(logits, ref_logits, rtol=5e-2, atol=5e-2))
    print("KERNEL_OK")
</pallas_src>

<mosaic_0001>
module attributes {stable_mosaic.version = 11 : i64} {
  func.func @_fused_gemm_kernel(%arg0: i32, %arg1: i32, %arg2: memref<4x208x25xbf16, #tpu.memory_space<vmem>>, %arg3: memref<25x128xbf16, #tpu.memory_space<vmem>>, %arg4: memref<1x128xf32, #tpu.memory_space<vmem>>, %arg5: memref<208x128xbf16, #tpu.memory_space<vmem>>) attributes {dimension_semantics = [#tpu.dimension_semantics<parallel>, #tpu.dimension_semantics<parallel>], iteration_bounds = array<i64: 2, 1>, scalar_prefetch = 0 : i64, scratch_operands = 0 : i64, tpu.core_type = #tpu.core_type<tc>, window_params = [{transform_indices = @transform_0, window_bounds = array<i64: 4, 208, 25>}, {transform_indices = @transform_1, window_bounds = array<i64: 25, 128>}, {transform_indices = @transform_2, window_bounds = array<i64: 1, 128>}, {transform_indices = @transform_3, window_bounds = array<i64: 208, 128>}]} {
    %c0 = arith.constant 0 : index
    %c0_0 = arith.constant 0 : index
    %c0_1 = arith.constant 0 : index
    %0 = vector.load %arg2[%c0, %c0_0, %c0_1] : memref<4x208x25xbf16, #tpu.memory_space<vmem>>, vector<4x208x25xbf16>
    %1 = vector.shape_cast %0 : vector<4x208x25xbf16> to vector<832x25xbf16>
    %c0_2 = arith.constant 0 : index
    %c0_3 = arith.constant 0 : index
    %2 = vector.load %arg3[%c0_2, %c0_3] : memref<25x128xbf16, #tpu.memory_space<vmem>>, vector<25x128xbf16>
    %cst = arith.constant dense<0.000000e+00> : vector<832x128xf32>
    %3 = tpu.matmul %1, %2, %cst {dimension_numbers = #tpu.dot_dimension_numbers<[1], [0], [0], [1], [0, 0, 1, 1], [], []>} : vector<832x25xbf16>, vector<25x128xbf16>, vector<832x128xf32> -> vector<832x128xf32>
    %4 = vector.extract_strided_slice %3 {offsets = [0, 0], sizes = [208, 128], strides = [1, 1]} : vector<832x128xf32> to vector<208x128xf32>
    %5 = vector.extract_strided_slice %3 {offsets = [208, 0], sizes = [208, 128], strides = [1, 1]} : vector<832x128xf32> to vector<208x128xf32>
    %6 = arith.maximumf %4, %5 : vector<208x128xf32>
    %7 = vector.extract_strided_slice %3 {offsets = [416, 0], sizes = [208, 128], strides = [1, 1]} : vector<832x128xf32> to vector<208x128xf32>
    %8 = arith.maximumf %6, %7 : vector<208x128xf32>
    %9 = vector.extract_strided_slice %3 {offsets = [624, 0], sizes = [208, 128], strides = [1, 1]} : vector<832x128xf32> to vector<208x128xf32>
    %10 = arith.maximumf %8, %9 : vector<208x128xf32>
    %c0_4 = arith.constant 0 : index
    %c0_5 = arith.constant 0 : index
    %11 = vector.load %arg4[%c0_4, %c0_5] : memref<1x128xf32, #tpu.memory_space<vmem>>, vector<1x128xf32>
    %12 = vector.broadcast %11 : vector<1x128xf32> to vector<208x128xf32>
    %13 = arith.addf %10, %12 : vector<208x128xf32>
    %cst_6 = arith.constant 0.000000e+00 : f32
    %14 = vector.broadcast %cst_6 : f32 to vector<208x128xf32>
    %15 = arith.maximumf %13, %14 : vector<208x128xf32>
    %16 = arith.truncf %15 : vector<208x128xf32> to vector<208x128xbf16>
    %c0_7 = arith.constant 0 : index
    %c0_8 = arith.constant 0 : index
    %17 = vector.load %arg5[%c0_7, %c0_8] : memref<208x128xbf16, #tpu.memory_space<vmem>>, vector<208x128xbf16>
    tpu.vector_store %arg5[%c0_7, %c0_8], %16 {strides = array<i32>} : memref<208x128xbf16, #tpu.memory_space<vmem>>, vector<208x128xbf16>,
    return
  }
  func.func @transform_0(%arg0: i32, %arg1: i32) -> (i32, i32, i32) {
    %c0_i32 = arith.constant 0 : i32
    %c0_i32_0 = arith.constant 0 : i32
    %c0_i32_1 = arith.constant 0 : i32
    return %c0_i32, %arg0, %c0_i32_0 : i32, i32, i32
  }
  func.func @transform_1(%arg0: i32, %arg1: i32) -> (i32, i32) {
    %c0_i32 = arith.constant 0 : i32
    %c0_i32_0 = arith.constant 0 : i32
    return %c0_i32, %arg1 : i32, i32
  }
  func.func @transform_2(%arg0: i32, %arg1: i32) -> (i32, i32) {
    %c0_i32 = arith.constant 0 : i32
    %c0_i32_0 = arith.constant 0 : i32
    return %c0_i32, %arg1 : i32, i32
  }
  func.func @transform_3(%arg0: i32, %arg1: i32) -> (i32, i32) {
    %c0_i32 = arith.constant 0 : i32
    return %arg0, %arg1 : i32, i32
  }
}

module attributes {stable_mosaic.version = 11 : i64} {
  func.func @_fused_gemm_kernel(%arg0: i32, %arg1: i32, %arg2: memref<4x64x400xbf16, #tpu.memory_space<vmem>>, %arg3: memref<400x128xbf16, #tpu.memory_space<vmem>>, %arg4: memref<1x128xf32, #tpu.memory_space<vmem>>, %arg5: memref<64x128xf32, #tpu.memory_space<vmem>>) attributes {dimension_semantics = [#tpu.dimension_semantics<parallel>, #tpu.dimension_semantics<parallel>], iteration_bounds = array<i64: 2, 1>, scalar_prefetch = 0 : i64, scratch_operands = 0 : i64, tpu.core_type = #tpu.core_type<tc>, window_params = [{transform_indices = @transform_0, window_bounds = array<i64: 4, 64, 400>}, {transform_indices = @transform_1, window_bounds = array<i64: 400, 128>}, {transform_indices = @transform_2, window_bounds = array<i64: 1, 128>}, {transform_indices = @transform_3, window_bounds = array<i64: 64, 128>}]} {
    %c0 = arith.constant 0 : index
    %c0_0 = arith.constant 0 : index
    %c0_1 = arith.constant 0 : index
    %0 = vector.load %arg2[%c0, %c0_0, %c0_1] : memref<4x64x400xbf16, #tpu.memory_space<vmem>>, vector<4x64x400xbf16>
    %1 = vector.shape_cast %0 : vector<4x64x400xbf16> to vector<256x400xbf16>
    %c0_2 = arith.constant 0 : index
    %c0_3 = arith.constant 0 : index
    %2 = vector.load %arg3[%c0_2, %c0_3] : memref<400x128xbf16, #tpu.memory_space<vmem>>, vector<400x128xbf16>
    %cst = arith.constant dense<0.000000e+00> : vector<256x128xf32>
    %3 = tpu.matmul %1, %2, %cst {dimension_numbers = #tpu.dot_dimension_numbers<[1], [0], [0], [1], [0, 0, 1, 1], [], []>} : vector<256x400xbf16>, vector<400x128xbf16>, vector<256x128xf32> -> vector<256x128xf32>
    %4 = vector.extract_strided_slice %3 {offsets = [0, 0], sizes = [64, 128], strides = [1, 1]} : vector<256x128xf32> to vector<64x128xf32>
    %5 = vector.extract_strided_slice %3 {offsets = [64, 0], sizes = [64, 128], strides = [1, 1]} : vector<256x128xf32> to vector<64x128xf32>
    %6 = arith.maximumf %4, %5 : vector<64x128xf32>
    %7 = vector.extract_strided_slice %3 {offsets = [128, 0], sizes = [64, 128], strides = [1, 1]} : vector<256x128xf32> to vector<64x128xf32>
    %8 = arith.maximumf %6, %7 : vector<64x128xf32>
    %9 = vector.extract_strided_slice %3 {offsets = [192, 0], sizes = [64, 128], strides = [1, 1]} : vector<256x128xf32> to vector<64x128xf32>
    %10 = arith.maximumf %8, %9 : vector<64x128xf32>
    %c0_4 = arith.constant 0 : index
    %c0_5 = arith.constant 0 : index
    %11 = vector.load %arg4[%c0_4, %c0_5] : memref<1x128xf32, #tpu.memory_space<vmem>>, vector<1x128xf32>
    %12 = vector.broadcast %11 : vector<1x128xf32> to vector<64x128xf32>
    %13 = arith.addf %10, %12 : vector<64x128xf32>
    %cst_6 = arith.constant 0.000000e+00 : f32
    %14 = vector.broadcast %cst_6 : f32 to vector<64x128xf32>
    %15 = arith.maximumf %13, %14 : vector<64x128xf32>
    %c0_7 = arith.constant 0 : index
    %c0_8 = arith.constant 0 : index
    %16 = vector.load %arg5[%c0_7, %c0_8] : memref<64x128xf32, #tpu.memory_space<vmem>>, vector<64x128xf32>
    tpu.vector_store %arg5[%c0_7, %c0_8], %15 {strides = array<i32>} : memref<64x128xf32, #tpu.memory_space<vmem>>, vector<64x128xf32>,
    return
  }
  func.func @transform_0(%arg0: i32, %arg1: i32) -> (i32, i32, i32) {
    %c0_i32 = arith.constant 0 : i32
    %c0_i32_0 = arith.constant 0 : i32
    %c0_i32_1 = arith.constant 0 : i32
    return %c0_i32, %arg0, %c0_i32_0 : i32, i32, i32
  }
  func.func @transform_1(%arg0: i32, %arg1: i32) -> (i32, i32) {
    %c0_i32 = arith.constant 0 : i32
    %c0_i32_0 = arith.constant 0 : i32
    return %c0_i32, %arg1 : i32, i32
  }
  func.func @transform_2(%arg0: i32, %arg1: i32) -> (i32, i32) {
    %c0_i32 = arith.constant 0 : i32
    %c0_i32_0 = arith.constant 0 : i32
    return %c0_i32, %arg1 : i32, i32
  }
  func.func @transform_3(%arg0: i32, %arg1: i32) -> (i32, i32) {
    %c0_i32 = arith.constant 0 : i32
    return %arg0, %arg1 : i32, i32
  }
}

module attributes {stable_mosaic.version = 11 : i64} {
  func.func @_fused_gemm_kernel(%arg0: i32, %arg1: i32, %arg2: memref<1x16x1568xbf16, #tpu.memory_space<vmem>>, %arg3: memref<1568x128xbf16, #tpu.memory_space<vmem>>, %arg4: memref<1x128xf32, #tpu.memory_space<vmem>>, %arg5: memref<16x128xf32, #tpu.memory_space<vmem>>) attributes {dimension_semantics = [#tpu.dimension_semantics<parallel>, #tpu.dimension_semantics<parallel>], iteration_bounds = array<i64: 1, 1>, scalar_prefetch = 0 : i64, scratch_operands = 0 : i64, tpu.core_type = #tpu.core_type<tc>, window_params = [{transform_indices = @transform_0, window_bounds = array<i64: 1, 16, 1568>}, {transform_indices = @transform_1, window_bounds = array<i64: 1568, 128>}, {transform_indices = @transform_2, window_bounds = array<i64: 1, 128>}, {transform_indices = @transform_3, window_bounds = array<i64: 16, 128>}]} {
    %c0 = arith.constant 0 : index
    %c0_0 = arith.constant 0 : index
    %c0_1 = arith.constant 0 : index
    %0 = vector.load %arg2[%c0, %c0_0, %c0_1] : memref<1x16x1568xbf16, #tpu.memory_space<vmem>>, vector<1x16x1568xbf16>
    %1 = vector.shape_cast %0 : vector<1x16x1568xbf16> to vector<16x1568xbf16>
    %c0_2 = arith.constant 0 : index
    %c0_3 = arith.constant 0 : index
    %2 = vector.load %arg3[%c0_2, %c0_3] : memref<1568x128xbf16, #tpu.memory_space<vmem>>, vector<1568x128xbf16>
    %cst = arith.constant dense<0.000000e+00> : vector<16x128xf32>
    %3 = tpu.matmul %1, %2, %cst {dimension_numbers = #tpu.dot_dimension_numbers<[1], [0], [0], [1], [0, 0, 1, 1], [], []>} : vector<16x1568xbf16>, vector<1568x128xbf16>, vector<16x128xf32> -> vector<16x128xf32>
    %c0_4 = arith.constant 0 : index
    %c0_5 = arith.constant 0 : index
    %4 = vector.load %arg4[%c0_4, %c0_5] : memref<1x128xf32, #tpu.memory_space<vmem>>, vector<1x128xf32>
    %5 = vector.broadcast %4 : vector<1x128xf32> to vector<16x128xf32>
    %6 = arith.addf %3, %5 : vector<16x128xf32>
    %c0_6 = arith.constant 0 : index
    %c0_7 = arith.constant 0 : index
    %7 = vector.load %arg5[%c0_6, %c0_7] : memref<16x128xf32, #tpu.memory_space<vmem>>, vector<16x128xf32>
    tpu.vector_store %arg5[%c0_6, %c0_7], %6 {strides = array<i32>} : memref<16x128xf32, #tpu.memory_space<vmem>>, vector<16x128xf32>,
    return
  }
  func.func @transform_0(%arg0: i32, %arg1: i32) -> (i32, i32, i32) {
    %c0_i32 = arith.constant 0 : i32
    %c0_i32_0 = arith.constant 0 : i32
    %c0_i32_1 = arith.constant 0 : i32
    return %c0_i32, %arg0, %c0_i32_0 : i32, i32, i32
  }
  func.func @transform_1(%arg0: i32, %arg1: i32) -> (i32, i32) {
    %c0_i32 = arith.constant 0 : i32
    %c0_i32_0 = arith.constant 0 : i32
    return %c0_i32, %arg1 : i32, i32
  }
  func.func @transform_2(%arg0: i32, %arg1: i32) -> (i32, i32) {
    %c0_i32 = arith.constant 0 : i32
    %c0_i32_0 = arith.constant 0 : i32
    return %c0_i32, %arg1 : i32, i32
  }
  func.func @transform_3(%arg0: i32, %arg1: i32) -> (i32, i32) {
    %c0_i32 = arith.constant 0 : i32
    return %arg0, %arg1 : i32, i32
  }
}

</mosaic_0001>

<llo_original>
// kernel: cnn_forward.3
$region0: #{cnn_forward.3}
  #allocation0 [shape = 'u32[]', space=smem, size = 0x4, offset = 0x4, fixed_abs, tag = 'smem constant byte address 0x4 - core index']
  #allocation1 [shape = 'u32[144,128]{1,0:T(1,128)}', space=vmem, size = 0x12000, scoped, tag = 'internal scratch']
  %s0 = inlined_call_operand.vmem [shape: bf16[4,416,25], index: 0, kind: input, shape index: {}]
  %s1 = inlined_call_operand.vmem [shape: bf16[25,128], index: 1, kind: input, shape index: {}]
  %s2 = inlined_call_operand.vmem [shape: f32[1,128], index: 2, kind: input, shape index: {}]
  %s3 = inlined_call_operand.vmem [shape: bf16[416,128], index: 3, kind: output, shape index: {}]
  %s4 = sld [smem:[#allocation0]]
  $region86: #{cnn_forward.3} parent=0
    _
  %s6 = ssub.s32 1, %s4
  %s7 = scalar_select 0, %s6, %s4
  $region1: #{cnn_forward.3} parent=0
    #allocation2 [shape = 'u8[425984]{0}', space=vmem, size = 0x68000, scoped, tag = 'input window, operand 0']
    loop: start=0, step=1, limit=4
    $region2: #{cnn_forward.3} parent=1 // loop_pre_header
      _
    $region3: #{cnn_forward.3} parent=1 // loop_header
      %s9 = sphi 0, %s13
      %p10 = scmp.ge.s32.totalorder %s9, 4
      %s16 = sphi 0, %s28
      %s17 = sphi 0, %s24
      %s18 = sphi 0, %s16
      %s19 = sphi 0, %s17
      %s20 = sphi 0, %s18
      %s21 = sphi 0, %s19
      %s31 = sphi 0, %s33
      %s34 = sphi 0, %s31
      %s35 = sphi 0, %s34
      %s51 = sphi 0, %s35
      %s57 = sphi 0, %s59
      %s60 = sphi 0, %s57
      %s61 = sphi 0, %s60
      %s77 = sphi 0, %s61
      %s83 = sphi 0, %s85
      %s86 = sphi 0, %s83
      %s87 = sphi 0, %s86
      %s103 = sphi 0, %s87
      %s111 = sphi 0, %s113
      %s114 = sphi 0, %s111
      %s115 = sphi 0, %s114
      %s131 = sphi 0, %s115
    $region4: #{cnn_forward.3} parent=1 // loop_header_branch
      %12 = sbr.rel (%p10) target = $region8
    $region5: #{cnn_forward.3} parent=1 // loop_body
      %s14 = ssub.s32 %s9, 1
      %s15 = ssub.s32 %s9, 2
      %s22 = sadd.s32 1, %s17
      %p23 = scmp.ge.s32.totalorder %s22, 1
      %s24 = scalar_select %p23, 0, %s22
      %s25 = sadd.s32 1, %s16
      %s26 = scalar_select %p23, %s25, %s16
      %p27 = scmp.ge.s32.totalorder %s26, 2
      %s28 = scalar_select %p27, 0, %s26
      %s29 = ssub.s32 %s16, %s28
      %p30 = scmp.eq.s32.totalorder %s29, 0
      %s32 = sadd.s32 %s31, 1
      %s33 = scalar_select %p30, %s31, %s32
      %p36 = pneg %p30
      %p37 = scmp.eq.s32.totalorder %s9, 1
      %p38 = por %p36, %p37
      %p39 = scmp.ne.s32.totalorder %s31, %s34
      %p40 = scmp.eq.s32.totalorder %s9, 0
      %p41 = por %p39, %p40
      %p42 = scmp.ne.s32.totalorder %s31, %s34
      %p43 = scmp.eq.s32.totalorder %s14, 1
      %p44 = por %p42, %p43
      %p45 = scmp.ne.s32.totalorder %s34, %s35
      %p46 = scmp.eq.s32.totalorder %s14, 0
      %p47 = por %p45, %p46
      %p48 = scmp.ne.s32.totalorder %s34, %s35
      %p49 = scmp.eq.s32.totalorder %s15, 1
      %p50 = por %p48, %p49
      %p52 = scmp.ne.s32.totalorder %s35, %s51
      %p53 = scmp.eq.s32.totalorder %s15, 0
      %p54 = por %p52, %p53
      %s55 = ssub.s32 %s17, %s24
      %p56 = scmp.eq.s32.totalorder %s55, 0
      %s58 = sadd.s32 %s57, 1
      %s59 = scalar_select %p56, %s57, %s58
      %p62 = pneg %p56
      %p63 = scmp.eq.s32.totalorder %s9, 1
      %p64 = por %p62, %p63
      %p65 = scmp.ne.s32.totalorder %s57, %s60
      %p66 = scmp.eq.s32.totalorder %s9, 0
      %p67 = por %p65, %p66
      %p68 = scmp.ne.s32.totalorder %s57, %s60
      %p69 = scmp.eq.s32.totalorder %s14, 1
      %p70 = por %p68, %p69
      %p71 = scmp.ne.s32.totalorder %s60, %s61
      %p72 = scmp.eq.s32.totalorder %s14, 0
      %p73 = por %p71, %p72
      %p74 = scmp.ne.s32.totalorder %s60, %s61
      %p75 = scmp.eq.s32.totalorder %s15, 1
      %p76 = por %p74, %p75
      %p78 = scmp.ne.s32.totalorder %s61, %s77
      %p79 = scmp.eq.s32.totalorder %s15, 0
      %p80 = por %p78, %p79
      %s81 = ssub.s32 %s17, %s24
      %p82 = scmp.eq.s32.totalorder %s81, 0
      %s84 = sadd.s32 %s83, 1
      %s85 = scalar_select %p82, %s83, %s84
      %p88 = pneg %p82
      %p89 = scmp.eq.s32.totalorder %s9, 1
      %p90 = por %p88, %p89
      %p91 = scmp.ne.s32.totalorder %s83, %s86
      %p92 = scmp.eq.s32.totalorder %s9, 0
      %p93 = por %p91, %p92
      %p94 = scmp.ne.s32.totalorder %s83, %s86
      %p95 = scmp.eq.s32.totalorder %s14, 1
      %p96 = por %p94, %p95
      %p97 = scmp.ne.s32.totalorder %s86, %s87
      %p98 = scmp.eq.s32.totalorder %s14, 0
      %p99 = por %p97, %p98
      %p100 = scmp.ne.s32.totalorder %s86, %s87
      %p101 = scmp.eq.s32.totalorder %s15, 1
      %p102 = por %p100, %p101
      %p104 = scmp.ne.s32.totalorder %s87, %s103
      %p105 = scmp.eq.s32.totalorder %s15, 0
      %p106 = por %p104, %p105
      %s107 = ssub.s32 %s16, %s28
      %s108 = ssub.s32 %s17, %s24
      %s109 = sor.u32 %s107, %s108
      %p110 = scmp.eq.s32.totalorder %s109, 0
      %s112 = sadd.s32 %s111, 1
      %s113 = scalar_select %p110, %s111, %s112
      %p116 = pneg %p110
      %p117 = scmp.eq.s32.totalorder %s9, 1
      %p118 = por %p116, %p117
      %p119 = scmp.ne.s32.totalorder %s111, %s114
      %p120 = scmp.eq.s32.totalorder %s9, 0
      %p121 = por %p119, %p120
      %p122 = scmp.ne.s32.totalorder %s111, %s114
      %p123 = scmp.eq.s32.totalorder %s14, 1
      %p124 = por %p122, %p123
      %p125 = scmp.ne.s32.totalorder %s114, %s115
      %p126 = scmp.eq.s32.totalorder %s14, 0
      %p127 = por %p125, %p126
      %p128 = scmp.ne.s32.totalorder %s114, %s115
      %p129 = scmp.eq.s32.totalorder %s15, 1
      %p130 = por %p128, %p129
      %p132 = scmp.ne.s32.totalorder %s115, %s131
      %p133 = scmp.eq.s32.totalorder %s15, 0
      %p134 = por %p132, %p133
      %p135 = scmp.le.s32.totalorder 1, %s9
      %p136 = scmp.lt.s32.totalorder %s9, 3
      %p137 = pnand %p135, %p136
      %p138 = pneg %p137
      // Predicated region
      $region9: #{cnn_forward.3} parent=5 // pred_check
        _
      $region10: #{cnn_forward.3} parent=5 // pred_check_branch
        %140 = sbr.rel (%p137) target = $region12
      $region11: #{cnn_forward.3} parent=5 // pred_region
        %s141 = ssub.s32 %s9, 1
        // Predicated region
        $region13: #{cnn_forward.3} parent=11 // pred_check
          %p142 = pneg %p73
        $region14: #{cnn_forward.3} parent=11 // pred_check_branch
          %144 = sbr.rel (%p142) target = $region16
        $region15: #{cnn_forward.3} parent=11 // pred_region
          %p145 = scmp.lt.s32.totalorder %s19, 0
          %s146 = scalar_select %p145, %s19, 0
          %s147 = smul.addr %s146, 4
          %s148 = scalar_lea.vmem %s1, %s147
        $region16: #{cnn_forward.3} parent=11 // pred_fallthru
          _
        // Predicated region
        $region17: #{cnn_forward.3} parent=11 // pred_check
          %p149 = pneg %p99
        $region18: #{cnn_forward.3} parent=11 // pred_check_branch
          %151 = sbr.rel (%p149) target = $region20
        $region19: #{cnn_forward.3} parent=11 // pred_region
          %p152 = scmp.lt.s32.totalorder %s19, 0
          %s153 = scalar_select %p152, %s19, 0
          %s154 = scalar_lea.vmem %s2, %s153
        $region20: #{cnn_forward.3} parent=11 // pred_fallthru
          _
      $region12: #{cnn_forward.3} parent=5 // pred_fallthru
        _
      %p155 = scmp.lt.s32.totalorder %s9, 2
      // Predicated region
      $region21: #{cnn_forward.3} parent=5 // pred_check
        %p156 = pneg %p155
      $region22: #{cnn_forward.3} parent=5 // pred_check_branch
        %158 = sbr.rel (%p156) target = $region24
      $region23: #{cnn_forward.3} parent=5 // pred_region
        // Predicated region
        $region25: #{cnn_forward.3} parent=23 // pred_check
          %p159 = pneg %p41
        $region26: #{cnn_forward.3} parent=23 // pred_check_branch
          %161 = sbr.rel (%p159) target = $region28
        $region27: #{cnn_forward.3} parent=23 // pred_region
          %s162 = sand.u32 %s31, 1
          %s163 = sand.u32 %s31, 1
          %s164 = smul.addr %s163, 416
          %s165 = scalar_lea.vmem [#allocation2], %s164
          %s166 = smul.u32 26, %s16
          %s167 = smul.addr %s166, 4
          %s168 = scalar_lea.vmem %s0, %s167
          // Predicated region
          $region29: #{cnn_forward.3} parent=27 // pred_check
            _
          $region30: #{cnn_forward.3} parent=27 // pred_check_branch
            %170 = sbr.rel (0) target = $region32
          $region31: #{cnn_forward.3} parent=27 // pred_region
            // Predicated region
            $region33: #{cnn_forward.3} parent=31 // pred_check
              _
            $region34: #{cnn_forward.3} parent=31 // pred_check_branch
              %172 = sbr.rel target = $region36
            $region35: #{cnn_forward.3} parent=31 // pred_region
              // Predicated region
              $region48: #{cnn_forward.3} parent=35 // pred_check
                _
              $region49: #{cnn_forward.3} parent=35 // pred_check_branch
                %393 = sbr.rel (0) target = $region51
              $region50: #{cnn_forward.3} parent=35 // pred_region
                loop: start=0, step=1, limit=1
                $region52: #{cnn_forward.3} parent=50 // loop_pre_header
                  _
                $region53: #{cnn_forward.3} parent=50 // loop_header
                  %s395 = sphi 0, %s399
                  %p396 = scmp.ge.s32.totalorder %s395, 1
                  %s400 = sphi %s168, %s168
                  %s401 = sphi %s165, %s165
                $region54: #{cnn_forward.3} parent=50 // loop_header_branch
                  %398 = sbr.rel (%p396) target = $region58
                $region55: #{cnn_forward.3} parent=50 // loop_body
                  _
                $region56: #{cnn_forward.3} parent=50 // loop_footer
                  %s399 = sadd.s32 1, %s395
                $region57: #{cnn_forward.3} parent=50 // loop_footer_branch
                  %394 = sbr.rel target = $region53
                $region58: #{cnn_forward.3} parent=50 // loop_exit
                  _
                loop: start=0, step=1, limit=1
                $region59: #{cnn_forward.3} parent=50 // loop_pre_header
                  _
                $region60: #{cnn_forward.3} parent=50 // loop_header
                  %s404 = sphi 0, %s408
                  %p405 = scmp.ge.s32.totalorder %s404, 1
                  %s409 = sphi %s168, %s168
                  %s410 = sphi %s165, %s165
                $region61: #{cnn_forward.3} parent=50 // loop_header_branch
                  %407 = sbr.rel (%p405) target = $region65
                $region62: #{cnn_forward.3} parent=50 // loop_body
                  %v411 = vld [vmem:[%s409] sm:$0xf]
                  %412 = vst [vmem:[%s410] sm:$0xf] %v411
                  %v413 = vld [vmem:[%s409 + $0x4] sm:$0xf]
                  %414 = vst [vmem:[%s410 + $0x4] sm:$0xf] %v413
                  %v415 = vld [vmem:[%s409 + $0x8] sm:$0xf]
                  %416 = vst [vmem:[%s410 + $0x8] sm:$0xf] %v415
                  %v417 = vld [vmem:[%s409 + $0xc] sm:$0xf]
                  %418 = vst [vmem:[%s410 + $0xc] sm:$0xf] %v417
                  %v419 = vld [vmem:[%s409 + $0x10] sm:$0xf]
                  %420 = vst [vmem:[%s410 + $0x10] sm:$0xf] %v419
                  %v421 = vld [vmem:[%s409 + $0x14] sm:$0xf]
                  %422 = vst [vmem:[%s410 + $0x14] sm:$0xf] %v421
                  %v423 = vld [vmem:[%s409 + $0x18] sm:$0xf]
                  %424 = vst [vmem:[%s410 + $0x18] sm:$0xf] %v423
                  %v425 = vld [vmem:[%s409 + $0x1c] sm:$0xf]
                  %426 = vst [vmem:[%s410 + $0x1c] sm:$0xf] %v425
                  %v427 = vld [vmem:[%s409 + $0x20] sm:$0xf]
                  %428 = vst [vmem:[%s410 + $0x20] sm:$0xf] %v427
                  %v429 = vld [vmem:[%s409 + $0x24] sm:$0xf]
                  %430 = vst [vmem:[%s410 + $0x24] sm:$0xf] %v429
                  %v431 = vld [vmem:[%s409 + $0x28] sm:$0xf]
                  %432 = vst [vmem:[%s410 + $0x28] sm:$0xf] %v431
                  %v433 = vld [vmem:[%s409 + $0x2c] sm:$0xf]
                  %434 = vst [vmem:[%s410 + $0x2c] sm:$0xf] %v433
                  %v435 = vld [vmem:[%s409 + $0x30] sm:$0xf]
                  %436 = vst [vmem:[%s410 + $0x30] sm:$0xf] %v435
                  %v437 = vld [vmem:[%s409 + $0x34] sm:$0xf]
                  %438 = vst [vmem:[%s410 + $0x34] sm:$0xf] %v437
                  %v439 = vld [vmem:[%s409 + $0x38] sm:$0xf]
                  %440 = vst [vmem:[%s410 + $0x38] sm:$0xf] %v439
                  %v441 = vld [vmem:[%s409 + $0x3c] sm:$0xf]
                  %442 = vst [vmem:[%s410 + $0x3c] sm:$0xf] %v441
                  %v443 = vld [vmem:[%s409 + $0x40] sm:$0xf]
                  %444 = vst [vmem:[%s410 + $0x40] sm:$0xf] %v443
                  %v445 = vld [vmem:[%s409 + $0x44] sm:$0xf]
                  %446 = vst [vmem:[%s410 + $0x44] sm:$0xf] %v445
                  %v447 = vld [vmem:[%s409 + $0x48] sm:$0xf]
                  %448 = vst [vmem:[%s410 + $0x48] sm:$0xf] %v447
                  %v449 = vld [vmem:[%s409 + $0x4c] sm:$0xf]
                  %450 = vst [vmem:[%s410 + $0x4c] sm:$0xf] %v449
                  %v451 = vld [vmem:[%s409 + $0x50] sm:$0xf]
                  %452 = vst [vmem:[%s410 + $0x50] sm:$0xf] %v451
                  %v453 = vld [vmem:[%s409 + $0x54] sm:$0xf]
                  %454 = vst [vmem:[%s410 + $0x54] sm:$0xf] %v453
                  %v455 = vld [vmem:[%s409 + $0x58] sm:$0xf]
                  %456 = vst [vmem:[%s410 + $0x58] sm:$0xf] %v455
                  %v457 = vld [vmem:[%s409 + $0x5c] sm:$0xf]
                  %458 = vst [vmem:[%s410 + $0x5c] sm:$0xf] %v457
                  %v459 = vld [vmem:[%s409 + $0x60] sm:$0xf]
                  %460 = vst [vmem:[%s410 + $0x60] sm:$0xf] %v459
                  %v461 = vld [vmem:[%s409 + $0x64] sm:$0xf]
                  %462 = vst [vmem:[%s410 + $0x64] sm:$0xf] %v461
                  %v463 = vld [vmem:[%s409 + $0xd0] sm:$0xf]
                  %464 = vst [vmem:[%s410 + $0x68] sm:$0xf] %v463
                  %v465 = vld [vmem:[%s409 + $0xd4] sm:$0xf]
                  %466 = vst [vmem:[%s410 + $0x6c] sm:$0xf] %v465
                  %v467 = vld [vmem:[%s409 + $0xd8] sm:$0xf]
                  %468 = vst [vmem:[%s410 + $0x70] sm:$0xf] %v467
                  %v469 = vld [vmem:[%s409 + $0xdc] sm:$0xf]
                  %470 = vst [vmem:[%s410 + $0x74] sm:$0xf] %v469
                  %v471 = vld [vmem:[%s409 + $0xe0] sm:$0xf]
                  %472 = vst [vmem:[%s410 + $0x78] sm:$0xf] %v471
                  %v473 = vld [vmem:[%s409 + $0xe4] sm:$0xf]
                  %474 = vst [vmem:[%s410 + $0x7c] sm:$0xf] %v473
                  %v475 = vld [vmem:[%s409 + $0xe8] sm:$0xf]
                  %476 = vst [vmem:[%s410 + $0x80] sm:$0xf] %v475
                  %v477 = vld [vmem:[%s409 + $0xec] sm:$0xf]
                  %478 = vst [vmem:[%s410 + $0x84] sm:$0xf] %v477
                  %v479 = vld [vmem:[%s409 + $0xf0] sm:$0xf]
                  %480 = vst [vmem:[%s410 + $0x88] sm:$0xf] %v479
                  %v481 = vld [vmem:[%s409 + $0xf4] sm:$0xf]
                  %482 = vst [vmem:[%s410 + $0x8c] sm:$0xf] %v481
                  %v483 = vld [vmem:[%s409 + $0xf8] sm:$0xf]
                  %484 = vst [vmem:[%s410 + $0x90] sm:$0xf] %v483
                  %v485 = vld [vmem:[%s409 + $0xfc] sm:$0xf]
                  %486 = vst [vmem:[%s410 + $0x94] sm:$0xf] %v485
                  %v487 = vld [vmem:[%s409 + $0x100] sm:$0xf]
                  %488 = vst [vmem:[%s410 + $0x98] sm:$0xf] %v487
                  %v489 = vld [vmem:[%s409 + $0x104] sm:$0xf]
                  %490 = vst [vmem:[%s410 + $0x9c] sm:$0xf] %v489
                  %v491 = vld [vmem:[%s409 + $0x108] sm:$0xf]
                  %492 = vst [vmem:[%s410 + $0xa0] sm:$0xf] %v491
                  %v493 = vld [vmem:[%s409 + $0x10c] sm:$0xf]
                  %494 = vst [vmem:[%s410 + $0xa4] sm:$0xf] %v493
                  %v495 = vld [vmem:[%s409 + $0x110] sm:$0xf]
                  %496 = vst [vmem:[%s410 + $0xa8] sm:$0xf] %v495
                  %v497 = vld [vmem:[%s409 + $0x114] sm:$0xf]
                  %498 = vst [vmem:[%s410 + $0xac] sm:$0xf] %v497
                  %v499 = vld [vmem:[%s409 + $0x118] sm:$0xf]
                  %500 = vst [vmem:[%s410 + $0xb0] sm:$0xf] %v499
                  %v501 = vld [vmem:[%s409 + $0x11c] sm:$0xf]
                  %502 = vst [vmem:[%s410 + $0xb4] sm:$0xf] %v501
                  %v503 = vld [vmem:[%s409 + $0x120] sm:$0xf]
                  %504 = vst [vmem:[%s410 + $0xb8] sm:$0xf] %v503
                  %v505 = vld [vmem:[%s409 + $0x124] sm:$0xf]
                  %506 = vst [vmem:[%s410 + $0xbc] sm:$0xf] %v505
                  %v507 = vld [vmem:[%s409 + $0x128] sm:$0xf]
                  %508 = vst [vmem:[%s410 + $0xc0] sm:$0xf] %v507
                  %v509 = vld [vmem:[%s409 + $0x12c] sm:$0xf]
                  %510 = vst [vmem:[%s410 + $0xc4] sm:$0xf] %v509
                  %v511 = vld [vmem:[%s409 + $0x130] sm:$0xf]
                  %512 = vst [vmem:[%s410 + $0xc8] sm:$0xf] %v511
                  %v513 = vld [vmem:[%s409 + $0x134] sm:$0xf]
                  %514 = vst [vmem:[%s410 + $0xcc] sm:$0xf] %v513
                  %v515 = vld [vmem:[%s409 + $0x1a0] sm:$0xf]
                  %516 = vst [vmem:[%s410 + $0xd0] sm:$0xf] %v515
                  %v517 = vld [vmem:[%s409 + $0x1a4] sm:$0xf]
                  %518 = vst [vmem:[%s410 + $0xd4] sm:$0xf] %v517
                  %v519 = vld [vmem:[%s409 + $0x1a8] sm:$0xf]
                  %520 = vst [vmem:[%s410 + $0xd8] sm:$0xf] %v519
                  %v521 = vld [vmem:[%s409 + $0x1ac] sm:$0xf]
                  %522 = vst [vmem:[%s410 + $0xdc] sm:$0xf] %v521
                  %v523 = vld [vmem:[%s409 + $0x1b0] sm:$0xf]
                  %524 = vst [vmem:[%s410 + $0xe0] sm:$0xf] %v523
                  %v525 = vld [vmem:[%s409 + $0x1b4] sm:$0xf]
                  %526 = vst [vmem:[%s410 + $0xe4] sm:$0xf] %v525
                  %v527 = vld [vmem:[%s409 + $0x1b8] sm:$0xf]
                  %528 = vst [vmem:[%s410 + $0xe8] sm:$0xf] %v527
                  %v529 = vld [vmem:[%s409 + $0x1bc] sm:$0xf]
                  %530 = vst [vmem:[%s410 + $0xec] sm:$0xf] %v529
                  %v531 = vld [vmem:[%s409 + $0x1c0] sm:$0xf]
                  %532 = vst [vmem:[%s410 + $0xf0] sm:$0xf] %v531
                  %v533 = vld [vmem:[%s409 + $0x1c4] sm:$0xf]
                  %534 = vst [vmem:[%s410 + $0xf4] sm:$0xf] %v533
                  %v535 = vld [vmem:[%s409 + $0x1c8] sm:$0xf]
                  %536 = vst [vmem:[%s410 + $0xf8] sm:$0xf] %v535
                  %v537 = vld [vmem:[%s409 + $0x1cc] sm:$0xf]
                  %538 = vst [vmem:[%s410 + $0xfc] sm:$0xf] %v537
                  %v539 = vld [vmem:[%s409 + $0x1d0] sm:$0xf]
                  %540 = vst [vmem:[%s410 + $0x100] sm:$0xf] %v539
                  %v541 = vld [vmem:[%s409 + $0x1d4] sm:$0xf]
                  %542 = vst [vmem:[%s410 + $0x104] sm:$0xf] %v541
                  %v543 = vld [vmem:[%s409 + $0x1d8] sm:$0xf]
                  %544 = vst [vmem:[%s410 + $0x108] sm:$0xf] %v543
                  %v545 = vld [vmem:[%s409 + $0x1dc] sm:$0xf]
                  %546 = vst [vmem:[%s410 + $0x10c] sm:$0xf] %v545
                  %v547 = vld [vmem:[%s409 + $0x1e0] sm:$0xf]
                  %548 = vst [vmem:[%s410 + $0x110] sm:$0xf] %v547
                  %v549 = vld [vmem:[%s409 + $0x1e4] sm:$0xf]
                  %550 = vst [vmem:[%s410 + $0x114] sm:$0xf] %v549
                  %v551 = vld [vmem:[%s409 + $0x1e8] sm:$0xf]
                  %552 = vst [vmem:[%s410 + $0x118] sm:$0xf] %v551
                  %v553 = vld [vmem:[%s409 + $0x1ec] sm:$0xf]
                  %554 = vst [vmem:[%s410 + $0x11c] sm:$0xf] %v553
                  %v555 = vld [vmem:[%s409 + $0x1f0] sm:$0xf]
                  %556 = vst [vmem:[%s410 + $0x120] sm:$0xf] %v555
                  %v557 = vld [vmem:[%s409 + $0x1f4] sm:$0xf]
                  %558 = vst [vmem:[%s410 + $0x124] sm:$0xf] %v557
                  %v559 = vld [vmem:[%s409 + $0x1f8] sm:$0xf]
                  %560 = vst [vmem:[%s410 + $0x128] sm:$0xf] %v559
                  %v561 = vld [vmem:[%s409 + $0x1fc] sm:$0xf]
                  %562 = vst [vmem:[%s410 + $0x12c] sm:$0xf] %v561
                  %v563 = vld [vmem:[%s409 + $0x200] sm:$0xf]
                  %564 = vst [vmem:[%s410 + $0x130] sm:$0xf] %v563
                  %v565 = vld [vmem:[%s409 + $0x204] sm:$0xf]
                  %566 = vst [vmem:[%s410 + $0x134] sm:$0xf] %v565
                  %v567 = vld [vmem:[%s409 + $0x270] sm:$0xf]
                  %568 = vst [vmem:[%s410 + $0x138] sm:$0xf] %v567
                  %v569 = vld [vmem:[%s409 + $0x274] sm:$0xf]
                  %570 = vst [vmem:[%s410 + $0x13c] sm:$0xf] %v569
                  %v571 = vld [vmem:[%s409 + $0x278] sm:$0xf]
                  %572 = vst [vmem:[%s410 + $0x140] sm:$0xf] %v571
                  %v573 = vld [vmem:[%s409 + $0x27c] sm:$0xf]
                  %574 = vst [vmem:[%s410 + $0x144] sm:$0xf] %v573
                  %v575 = vld [vmem:[%s409 + $0x280] sm:$0xf]
                  %576 = vst [vmem:[%s410 + $0x148] sm:$0xf] %v575
                  %v577 = vld [vmem:[%s409 + $0x284] sm:$0xf]
                  %578 = vst [vmem:[%s410 + $0x14c] sm:$0xf] %v577
                  %v579 = vld [vmem:[%s409 + $0x288] sm:$0xf]
                  %580 = vst [vmem:[%s410 + $0x150] sm:$0xf] %v579
                  %v581 = vld [vmem:[%s409 + $0x28c] sm:$0xf]
                  %582 = vst [vmem:[%s410 + $0x154] sm:$0xf] %v581
                  %v583 = vld [vmem:[%s409 + $0x290] sm:$0xf]
                  %584 = vst [vmem:[%s410 + $0x158] sm:$0xf] %v583
                  %v585 = vld [vmem:[%s409 + $0x294] sm:$0xf]
                  %586 = vst [vmem:[%s410 + $0x15c] sm:$0xf] %v585
                  %v587 = vld [vmem:[%s409 + $0x298] sm:$0xf]
                  %588 = vst [vmem:[%s410 + $0x160] sm:$0xf] %v587
                  %v589 = vld [vmem:[%s409 + $0x29c] sm:$0xf]
                  %590 = vst [vmem:[%s410 + $0x164] sm:$0xf] %v589
                  %v591 = vld [vmem:[%s409 + $0x2a0] sm:$0xf]
                  %592 = vst [vmem:[%s410 + $0x168] sm:$0xf] %v591
                  %v593 = vld [vmem:[%s409 + $0x2a4] sm:$0xf]
                  %594 = vst [vmem:[%s410 + $0x16c] sm:$0xf] %v593
                  %v595 = vld [vmem:[%s409 + $0x2a8] sm:$0xf]
                  %596 = vst [vmem:[%s410 + $0x170] sm:$0xf] %v595
                  %v597 = vld [vmem:[%s409 + $0x2ac] sm:$0xf]
                  %598 = vst [vmem:[%s410 + $0x174] sm:$0xf] %v597
                  %v599 = vld [vmem:[%s409 + $0x2b0] sm:$0xf]
                  %600 = vst [vmem:[%s410 + $0x178] sm:$0xf] %v599
                  %v601 = vld [vmem:[%s409 + $0x2b4] sm:$0xf]
                  %602 = vst [vmem:[%s410 + $0x17c] sm:$0xf] %v601
                  %v603 = vld [vmem:[%s409 + $0x2b8] sm:$0xf]
                  %604 = vst [vmem:[%s410 + $0x180] sm:$0xf] %v603
                  %v605 = vld [vmem:[%s409 + $0x2bc] sm:$0xf]
                  %606 = vst [vmem:[%s410 + $0x184] sm:$0xf] %v605
                  %v607 = vld [vmem:[%s409 + $0x2c0] sm:$0xf]
                  %608 = vst [vmem:[%s410 + $0x188] sm:$0xf] %v607
                  %v609 = vld [vmem:[%s409 + $0x2c4] sm:$0xf]
                  %610 = vst [vmem:[%s410 + $0x18c] sm:$0xf] %v609
                  %v611 = vld [vmem:[%s409 + $0x2c8] sm:$0xf]
                  %612 = vst [vmem:[%s410 + $0x190] sm:$0xf] %v611
                  %v613 = vld [vmem:[%s409 + $0x2cc] sm:$0xf]
                  %614 = vst [vmem:[%s410 + $0x194] sm:$0xf] %v613
                  %v615 = vld [vmem:[%s409 + $0x2d0] sm:$0xf]
                  %616 = vst [vmem:[%s410 + $0x198] sm:$0xf] %v615
                  %v617 = vld [vmem:[%s409 + $0x2d4] sm:$0xf]
                  %618 = vst [vmem:[%s410 + $0x19c] sm:$0xf] %v617
                $region63: #{cnn_forward.3} parent=50 // loop_footer
                  %s408 = sadd.s32 1, %s404
                $region64: #{cnn_forward.3} parent=50 // loop_footer_branch
                  %403 = sbr.rel target = $region60
                $region65: #{cnn_forward.3} parent=50 // loop_exit
                  _
              $region51: #{cnn_forward.3} parent=35 // pred_fallthru
                _
            $region36: #{cnn_forward.3} parent=31 // pred_fallthru
              _
            // Predicated region
            $region37: #{cnn_forward.3} parent=31 // pred_check
              _
            $region38: #{cnn_forward.3} parent=31 // pred_check_branch
              %174 = sbr.rel (0) target = $region40
            $region39: #{cnn_forward.3} parent=31 // pred_region
              loop: start=0, step=1, limit=1
              $region41: #{cnn_forward.3} parent=39 // loop_pre_header
                _
              $region42: #{cnn_forward.3} parent=39 // loop_header
                %s177 = sphi 0, %s181
                %p178 = scmp.ge.s32.totalorder %s177, 1
                %s182 = sphi %s168, %s168
                %s183 = sphi %s165, %s165
              $region43: #{cnn_forward.3} parent=39 // loop_header_branch
                %180 = sbr.rel (%p178) target = $region47
              $region44: #{cnn_forward.3} parent=39 // loop_body
                %v184 = vld [vmem:[%s182] sm:$0xf]
                %185 = vst [vmem:[%s183] sm:$0xf] %v184
                %v186 = vld [vmem:[%s182 + $0x4] sm:$0xf]
                %187 = vst [vmem:[%s183 + $0x4] sm:$0xf] %v186
                %v188 = vld [vmem:[%s182 + $0x8] sm:$0xf]
                %189 = vst [vmem:[%s183 + $0x8] sm:$0xf] %v188
                %v190 = vld [vmem:[%s182 + $0xc] sm:$0xf]
                %191 = vst [vmem:[%s183 + $0xc] sm:$0xf] %v190
                %v192 = vld [vmem:[%s182 + $0x10] sm:$0xf]
                %193 = vst [vmem:[%s183 + $0x10] sm:$0xf] %v192
                %v194 = vld [vmem:[%s182 + $0x14] sm:$0xf]
                %195 = vst [vmem:[%s183 + $0x14] sm:$0xf] %v194
                %v196 = vld [vmem:[%s182 + $0x18] sm:$0xf]
                %197 = vst [vmem:[%s183 + $0x18] sm:$0xf] %v196
                %v198 = vld [vmem:[%s182 + $0x1c] sm:$0xf]
                %199 = vst [vmem:[%s183 + $0x1c] sm:$0xf] %v198
                %v200 = vld [vmem:[%s182 + $0x20] sm:$0xf]
                %201 = vst [vmem:[%s183 + $0x20] sm:$0xf] %v200
                %v202 = vld [vmem:[%s182 + $0x24] sm:$0xf]
                %203 = vst [vmem:[%s183 + $0x24] sm:$0xf] %v202
                %v204 = vld [vmem:[%s182 + $0x28] sm:$0xf]
                %205 = vst [vmem:[%s183 + $0x28] sm:$0xf] %v204
                %v206 = vld [vmem:[%s182 + $0x2c] sm:$0xf]
                %207 = vst [vmem:[%s183 + $0x2c] sm:$0xf] %v206
                %v208 = vld [vmem:[%s182 + $0x30] sm:$0xf]
                %209 = vst [vmem:[%s183 + $0x30] sm:$0xf] %v208
                %v210 = vld [vmem:[%s182 + $0x34] sm:$0xf]
                %211 = vst [vmem:[%s183 + $0x34] sm:$0xf] %v210
                %v212 = vld [vmem:[%s182 + $0x38] sm:$0xf]
                %213 = vst [vmem:[%s183 + $0x38] sm:$0xf] %v212
                %v214 = vld [vmem:[%s182 + $0x3c] sm:$0xf]
                %215 = vst [vmem:[%s183 + $0x3c] sm:$0xf] %v214
                %v216 = vld [vmem:[%s182 + $0x40] sm:$0xf]
                %217 = vst [vmem:[%s183 + $0x40] sm:$0xf] %v216
                %v218 = vld [vmem:[%s182 + $0x44] sm:$0xf]
                %219 = vst [vmem:[%s183 + $0x44] sm:$0xf] %v218
                %v220 = vld [vmem:[%s182 + $0x48] sm:$0xf]
                %221 = vst [vmem:[%s183 + $0x48] sm:$0xf] %v220
                %v222 = vld [vmem:[%s182 + $0x4c] sm:$0xf]
                %223 = vst [vmem:[%s183 + $0x4c] sm:$0xf] %v222
                %v224 = vld [vmem:[%s182 + $0x50] sm:$0xf]
                %225 = vst [vmem:[%s183 + $0x50] sm:$0xf] %v224
                %v226 = vld [vmem:[%s182 + $0x54] sm:$0xf]
                %227 = vst [vmem:[%s183 + $0x54] sm:$0xf] %v226
                %v228 = vld [vmem:[%s182 + $0x58] sm:$0xf]
                %229 = vst [vmem:[%s183 + $0x58] sm:$0xf] %v228
                %v230 = vld [vmem:[%s182 + $0x5c] sm:$0xf]
                %231 = vst [vmem:[%s183 + $0x5c] sm:$0xf] %v230
                %v232 = vld [vmem:[%s182 + $0x60] sm:$0xf]
                %233 = vst [vmem:[%s183 + $0x60] sm:$0xf] %v232
                %v234 = vld [vmem:[%s182 + $0x64] sm:$0xf]
                %235 = vst [vmem:[%s183 + $0x64] sm:$0xf] %v234
                %v236 = vld [vmem:[%s182 + $0xd0] sm:$0xf]
                %237 = vst [vmem:[%s183 + $0x68] sm:$0xf] %v236
                %v238 = vld [vmem:[%s182 + $0xd4] sm:$0xf]
                %239 = vst [vmem:[%s183 + $0x6c] sm:$0xf] %v238
                %v240 = vld [vmem:[%s182 + $0xd8] sm:$0xf]
                %241 = vst [vmem:[%s183 + $0x70] sm:$0xf] %v240
                %v242 = vld [vmem:[%s182 + $0xdc] sm:$0xf]
                %243 = vst [vmem:[%s183 + $0x74] sm:$0xf] %v242
                %v244 = vld [vmem:[%s182 + $0xe0] sm:$0xf]
                %245 = vst [vmem:[%s183 + $0x78] sm:$0xf] %v244
                %v246 = vld [vmem:[%s182 + $0xe4] sm:$0xf]
                %247 = vst [vmem:[%s183 + $0x7c] sm:$0xf] %v246
                %v248 = vld [vmem:[%s182 + $0xe8] sm:$0xf]
                %249 = vst [vmem:[%s183 + $0x80] sm:$0xf] %v248
                %v250 = vld [vmem:[%s182 + $0xec] sm:$0xf]
                %251 = vst [vmem:[%s183 + $0x84] sm:$0xf] %v250
                %v252 = vld [vmem:[%s182 + $0xf0] sm:$0xf]
                %253 = vst [vmem:[%s183 + $0x88] sm:$0xf] %v252
                %v254 = vld [vmem:[%s182 + $0xf4] sm:$0xf]
                %255 = vst [vmem:[%s183 + $0x8c] sm:$0xf] %v254
                %v256 = vld [vmem:[%s182 + $0xf8] sm:$0xf]
                %257 = vst [vmem:[%s183 + $0x90] sm:$0xf] %v256
                %v258 = vld [vmem:[%s182 + $0xfc] sm:$0xf]
                %259 = vst [vmem:[%s183 + $0x94] sm:$0xf] %v258
                %v260 = vld [vmem:[%s182 + $0x100] sm:$0xf]
                %261 = vst [vmem:[%s183 + $0x98] sm:$0xf] %v260
                %v262 = vld [vmem:[%s182 + $0x104] sm:$0xf]
                %263 = vst [vmem:[%s183 + $0x9c] sm:$0xf] %v262
                %v264 = vld [vmem:[%s182 + $0x108] sm:$0xf]
                %265 = vst [vmem:[%s183 + $0xa0] sm:$0xf] %v264
                %v266 = vld [vmem:[%s182 + $0x10c] sm:$0xf]
                %267 = vst [vmem:[%s183 + $0xa4] sm:$0xf] %v266
                %v268 = vld [vmem:[%s182 + $0x110] sm:$0xf]
                %269 = vst [vmem:[%s183 + $0xa8] sm:$0xf] %v268
                %v270 = vld [vmem:[%s182 + $0x114] sm:$0xf]
                %271 = vst [vmem:[%s183 + $0xac] sm:$0xf] %v270
                %v272 = vld [vmem:[%s182 + $0x118] sm:$0xf]
                %273 = vst [vmem:[%s183 + $0xb0] sm:$0xf] %v272
                %v274 = vld [vmem:[%s182 + $0x11c] sm:$0xf]
                %275 = vst [vmem:[%s183 + $0xb4] sm:$0xf] %v274
                %v276 = vld [vmem:[%s182 + $0x120] sm:$0xf]
                %277 = vst [vmem:[%s183 + $0xb8] sm:$0xf] %v276
                %v278 = vld [vmem:[%s182 + $0x124] sm:$0xf]
                %279 = vst [vmem:[%s183 + $0xbc] sm:$0xf] %v278
                %v280 = vld [vmem:[%s182 + $0x128] sm:$0xf]
                %281 = vst [vmem:[%s183 + $0xc0] sm:$0xf] %v280
                %v282 = vld [vmem:[%s182 + $0x12c] sm:$0xf]
                %283 = vst [vmem:[%s183 + $0xc4] sm:$0xf] %v282
                %v284 = vld [vmem:[%s182 + $0x130] sm:$0xf]
                %285 = vst [vmem:[%s183 + $0xc8] sm:$0xf] %v284
                %v286 = vld [vmem:[%s182 + $0x134] sm:$0xf]
                %287 = vst [vmem:[%s183 + $0xcc] sm:$0xf] %v286
                %v288 = vld [vmem:[%s182 + $0x1a0] sm:$0xf]
                %289 = vst [vmem:[%s183 + $0xd0] sm:$0xf] %v288
                %v290 = vld [vmem:[%s182 + $0x1a4] sm:$0xf]
                %291 = vst [vmem:[%s183 + $0xd4] sm:$0xf] %v290
                %v292 = vld [vmem:[%s182 + $0x1a8] sm:$0xf]
                %293 = vst [vmem:[%s183 + $0xd8] sm:$0xf] %v292
                %v294 = vld [vmem:[%s182 + $0x1ac] sm:$0xf]
                %295 = vst [vmem:[%s183 + $0xdc] sm:$0xf] %v294
                %v296 = vld [vmem:[%s182 + $0x1b0] sm:$0xf]
                %297 = vst [vmem:[%s183 + $0xe0] sm:$0xf] %v296
                %v298 = vld [vmem:[%s182 + $0x1b4] sm:$0xf]
                %299 = vst [vmem:[%s183 + $0xe4] sm:$0xf] %v298
                %v300 = vld [vmem:[%s182 + $0x1b8] sm:$0xf]
                %301 = vst [vmem:[%s183 + $0xe8] sm:$0xf] %v300
                %v302 = vld [vmem:[%s182 + $0x1bc] sm:$0xf]
                %303 = vst [vmem:[%s183 + $0xec] sm:$0xf] %v302
                %v304 = vld [vmem:[%s182 + $0x1c0] sm:$0xf]
                %305 = vst [vmem:[%s183 + $0xf0] sm:$0xf] %v304
                %v306 = vld [vmem:[%s182 + $0x1c4] sm:$0xf]
                %307 = vst [vmem:[%s183 + $0xf4] sm:$0xf] %v306
                %v308 = vld [vmem:[%s182 + $0x1c8] sm:$0xf]
                %309 = vst [vmem:[%s183 + $0xf8] sm:$0xf] %v308
                %v310 = vld [vmem:[%s182 + $0x1cc] sm:$0xf]
                %311 = vst [vmem:[%s183 + $0xfc] sm:$0xf] %v310
                %v312 = vld [vmem:[%s182 + $0x1d0] sm:$0xf]
                %313 = vst [vmem:[%s183 + $0x100] sm:$0xf] %v312
                %v314 = vld [vmem:[%s182 + $0x1d4] sm:$0xf]
                %315 = vst [vmem:[%s183 + $0x104] sm:$0xf] %v314
                %v316 = vld [vmem:[%s182 + $0x1d8] sm:$0xf]
                %317 = vst [vmem:[%s183 + $0x108] sm:$0xf] %v316
                %v318 = vld [vmem:[%s182 + $0x1dc] sm:$0xf]
                %319 = vst [vmem:[%s183 + $0x10c] sm:$0xf] %v318
                %v320 = vld [vmem:[%s182 + $0x1e0] sm:$0xf]
                %321 = vst [vmem:[%s183 + $0x110] sm:$0xf] %v320
                %v322 = vld [vmem:[%s182 + $0x1e4] sm:$0xf]
                %323 = vst [vmem:[%s183 + $0x114] sm:$0xf] %v322
                %v324 = vld [vmem:[%s182 + $0x1e8] sm:$0xf]
                %325 = vst [vmem:[%s183 + $0x118] sm:$0xf] %v324
                %v326 = vld [vmem:[%s182 + $0x1ec] sm:$0xf]
                %327 = vst [vmem:[%s183 + $0x11c] sm:$0xf] %v326
                %v328 = vld [vmem:[%s182 + $0x1f0] sm:$0xf]
                %329 = vst [vmem:[%s183 + $0x120] sm:$0xf] %v328
                %v330 = vld [vmem:[%s182 + $0x1f4] sm:$0xf]
                %331 = vst [vmem:[%s183 + $0x124] sm:$0xf] %v330
                %v332 = vld [vmem:[%s182 + $0x1f8] sm:$0xf]
                %333 = vst [vmem:[%s183 + $0x128] sm:$0xf] %v332
                %v334 = vld [vmem:[%s182 + $0x1fc] sm:$0xf]
                %335 = vst [vmem:[%s183 + $0x12c] sm:$0xf] %v334
                %v336 = vld [vmem:[%s182 + $0x200] sm:$0xf]
                %337 = vst [vmem:[%s183 + $0x130] sm:$0xf] %v336
                %v338 = vld [vmem:[%s182 + $0x204] sm:$0xf]
                %339 = vst [vmem:[%s183 + $0x134] sm:$0xf] %v338
                %v340 = vld [vmem:[%s182 + $0x270] sm:$0xf]
                %341 = vst [vmem:[%s183 + $0x138] sm:$0xf] %v340
                %v342 = vld [vmem:[%s182 + $0x274] sm:$0xf]
                %343 = vst [vmem:[%s183 + $0x13c] sm:$0xf] %v342
                %v344 = vld [vmem:[%s182 + $0x278] sm:$0xf]
                %345 = vst [vmem:[%s183 + $0x140] sm:$0xf] %v344
                %v346 = vld [vmem:[%s182 + $0x27c] sm:$0xf]
                %347 = vst [vmem:[%s183 + $0x144] sm:$0xf] %v346
                %v348 = vld [vmem:[%s182 + $0x280] sm:$0xf]
                %349 = vst [vmem:[%s183 + $0x148] sm:$0xf] %v348
                %v350 = vld [vmem:[%s182 + $0x284] sm:$0xf]
                %351 = vst [vmem:[%s183 + $0x14c] sm:$0xf] %v350
                %v352 = vld [vmem:[%s182 + $0x288] sm:$0xf]
                %353 = vst [vmem:[%s183 + $0x150] sm:$0xf] %v352
                %v354 = vld [vmem:[%s182 + $0x28c] sm:$0xf]
                %355 = vst [vmem:[%s183 + $0x154] sm:$0xf] %v354
                %v356 = vld [vmem:[%s182 + $0x290] sm:$0xf]
                %357 = vst [vmem:[%s183 + $0x158] sm:$0xf] %v356
                %v358 = vld [vmem:[%s182 + $0x294] sm:$0xf]
                %359 = vst [vmem:[%s183 + $0x15c] sm:$0xf] %v358
                %v360 = vld [vmem:[%s182 + $0x298] sm:$0xf]
                %361 = vst [vmem:[%s183 + $0x160] sm:$0xf] %v360
                %v362 = vld [vmem:[%s182 + $0x29c] sm:$0xf]
                %363 = vst [vmem:[%s183 + $0x164] sm:$0xf] %v362
                %v364 = vld [vmem:[%s182 + $0x2a0] sm:$0xf]
                %365 = vst [vmem:[%s183 + $0x168] sm:$0xf] %v364
                %v366 = vld [vmem:[%s182 + $0x2a4] sm:$0xf]
                %367 = vst [vmem:[%s183 + $0x16c] sm:$0xf] %v366
                %v368 = vld [vmem:[%s182 + $0x2a8] sm:$0xf]
                %369 = vst [vmem:[%s183 + $0x170] sm:$0xf] %v368
                %v370 = vld [vmem:[%s182 + $0x2ac] sm:$0xf]
                %371 = vst [vmem:[%s183 + $0x174] sm:$0xf] %v370
                %v372 = vld [vmem:[%s182 + $0x2b0] sm:$0xf]
                %373 = vst [vmem:[%s183 + $0x178] sm:$0xf] %v372
                %v374 = vld [vmem:[%s182 + $0x2b4] sm:$0xf]
                %375 = vst [vmem:[%s183 + $0x17c] sm:$0xf] %v374
                %v376 = vld [vmem:[%s182 + $0x2b8] sm:$0xf]
                %377 = vst [vmem:[%s183 + $0x180] sm:$0xf] %v376
                %v378 = vld [vmem:[%s182 + $0x2bc] sm:$0xf]
                %379 = vst [vmem:[%s183 + $0x184] sm:$0xf] %v378
                %v380 = vld [vmem:[%s182 + $0x2c0] sm:$0xf]
                %381 = vst [vmem:[%s183 + $0x188] sm:$0xf] %v380
                %v382 = vld [vmem:[%s182 + $0x2c4] sm:$0xf]
                %383 = vst [vmem:[%s183 + $0x18c] sm:$0xf] %v382
                %v384 = vld [vmem:[%s182 + $0x2c8] sm:$0xf]
                %385 = vst [vmem:[%s183 + $0x190] sm:$0xf] %v384
                %v386 = vld [vmem:[%s182 + $0x2cc] sm:$0xf]
                %387 = vst [vmem:[%s183 + $0x194] sm:$0xf] %v386
                %v388 = vld [vmem:[%s182 + $0x2d0] sm:$0xf]
                %389 = vst [vmem:[%s183 + $0x198] sm:$0xf] %v388
                %v390 = vld [vmem:[%s182 + $0x2d4] sm:$0xf]
                %391 = vst [vmem:[%s183 + $0x19c] sm:$0xf] %v390
              $region45: #{cnn_forward.3} parent=39 // loop_footer
                %s181 = sadd.s32 1, %s177
              $region46: #{cnn_forward.3} parent=39 // loop_footer_branch
                %176 = sbr.rel target = $region42
              $region47: #{cnn_forward.3} parent=39 // loop_exit
                _
            $region40: #{cnn_forward.3} parent=31 // pred_fallthru
              _
          $region32: #{cnn_forward.3} parent=27 // pred_fallthru
            _
          %619 = vnop
        $region28: #{cnn_forward.3} parent=23 // pred_fallthru
          _
      $region24: #{cnn_forward.3} parent=5 // pred_fallthru
        _
      %p620 = scmp.le.s32.totalorder 1, %s9
      %p621 = scmp.lt.s32.totalorder %s9, 3
      %p622 = pnand %p620, %p621
      %p623 = pneg %p622
      // Predicated region
      $region66: #{cnn_forward.3} parent=5 // pred_check
        _
      $region67: #{cnn_forward.3} parent=5 // pred_check_branch
        %625 = sbr.rel (%p622) target = $region69
      $region68: #{cnn_forward.3} parent=5 // pred_region
        %s626 = ssub.s32 %s9, 1
        %s627 = sand.u32 %s34, 1
        %s628 = sand.u32 %s34, 1
        %s629 = smul.addr %s628, 416
        %s630 = scalar_lea.vmem [#allocation2], %s629
        // Predicated region
        $region70: #{cnn_forward.3} parent=68 // pred_check
          %p631 = pneg %p47
        $region71: #{cnn_forward.3} parent=68 // pred_check_branch
          %633 = sbr.rel (%p631) target = $region73
        $region72: #{cnn_forward.3} parent=68 // pred_region
          _
        $region73: #{cnn_forward.3} parent=68 // pred_fallthru
          _
        %s634 = sand.u32 %s34, 1
        %s635 = sand.u32 %s34, 1
        %s636 = smul.addr %s635, 416
        %s637 = scalar_lea.vmem [#allocation2], %s636
        %p638 = pneg %p47
        %p639 = pneg %p44
        %p640 = scmp.lt.s32.totalorder %s19, 0
        %s641 = scalar_select %p640, %s19, 0
        %s642 = smul.addr %s641, 4
        %s643 = scalar_lea.vmem %s1, %s642
        %p644 = pneg %p73
        %p645 = pneg %p70
        %p646 = scmp.lt.s32.totalorder %s19, 0
        %s647 = scalar_select %p646, %s19, 0
        %s648 = scalar_lea.vmem %s2, %s647
        %p649 = pneg %p99
        %p650 = pneg %p96
        %p651 = pneg %p127
        %p652 = pneg %p124
        %s653 = smul.u32 26, %s18
        %p654 = scmp.lt.s32.totalorder %s653, 51
        %s655 = scalar_select %p654, %s653, 51
        %p656 = scmp.lt.s32.totalorder %s19, 0
        %s657 = scalar_select %p656, %s19, 0
        %s658 = sadd.s32 %s657, %s655
        %s659 = smul.addr %s658, 4
        %s660 = scalar_lea.vmem %s3, %s659
        %s661 = smul.u32 26, %s18
        %p662 = scmp.lt.s32.totalorder %s19, 0
        %s663 = scalar_select %p662, %s19, 0
        %s664 = smul.addr %s663, 4
        %s665 = scalar_lea.vmem %s1, %s664
        %p666 = scmp.lt.s32.totalorder %s19, 0
        %s667 = scalar_select %p666, %s19, 0
        %s668 = scalar_lea.vmem %s2, %s667
        %s669 = smul.u32 26, %s18
        %p670 = scmp.lt.s32.totalorder %s669, 51
        %s671 = scalar_select %p670, %s669, 51
        %p672 = scmp.lt.s32.totalorder %s19, 0
        %s673 = scalar_select %p672, %s19, 0
        %s674 = sadd.s32 %s673, %s671
        %s675 = smul.addr %s674, 4
        %s676 = scalar_lea.vmem %s3, %s675
        %s677 = smul.u32 26, %s18
        %v679 = vld [vmem:[%s630] sm:$0xf]
        %v680 = vld [vmem:[%s630 + $0x4] sm:$0xf]
        %v681 = vld [vmem:[%s630 + $0x8] sm:$0xf]
        %v682 = vld [vmem:[%s630 + $0xc] sm:$0xf]
        %v683 = vld [vmem:[%s630 + $0x10] sm:$0xf]
        %v684 = vld [vmem:[%s630 + $0x14] sm:$0xf]
        %v685 = vld [vmem:[%s630 + $0x18] sm:$0xf]
        %v686 = vld [vmem:[%s630 + $0x1c] sm:$0xf]
        %v687 = vld [vmem:[%s630 + $0x20] sm:$0xf]
        %v688 = vld [vmem:[%s630 + $0x24] sm:$0xf]
        %v689 = vld [vmem:[%s630 + $0x28] sm:$0xf]
        %v690 = vld [vmem:[%s630 + $0x2c] sm:$0xf]
        %v691 = vld [vmem:[%s630 + $0x30] sm:$0xf]
        %v692 = vld [vmem:[%s630 + $0x34] sm:$0xf]
        %v693 = vld [vmem:[%s630 + $0x38] sm:$0xf]
        %v694 = vld [vmem:[%s630 + $0x3c] sm:$0xf]
        %v695 = vld [vmem:[%s630 + $0x40] sm:$0xf]
        %v696 = vld [vmem:[%s630 + $0x44] sm:$0xf]
        %v697 = vld [vmem:[%s630 + $0x48] sm:$0xf]
        %v698 = vld [vmem:[%s630 + $0x4c] sm:$0xf]
        %v699 = vld [vmem:[%s630 + $0x50] sm:$0xf]
        %v700 = vld [vmem:[%s630 + $0x54] sm:$0xf]
        %v701 = vld [vmem:[%s630 + $0x58] sm:$0xf]
        %v702 = vld [vmem:[%s630 + $0x5c] sm:$0xf]
        %v703 = vld [vmem:[%s630 + $0x60] sm:$0xf]
        %v704 = vld [vmem:[%s630 + $0x64] sm:$0xf]
        %v705 = vld [vmem:[%s630 + $0x68] sm:$0xf]
        %v706 = vld [vmem:[%s630 + $0x6c] sm:$0xf]
        %v707 = vld [vmem:[%s630 + $0x70] sm:$0xf]
        %v708 = vld [vmem:[%s630 + $0x74] sm:$0xf]
        %v709 = vld [vmem:[%s630 + $0x78] sm:$0xf]
        %v710 = vld [vmem:[%s630 + $0x7c] sm:$0xf]
        %v711 = vld [vmem:[%s630 + $0x80] sm:$0xf]
        %v712 = vld [vmem:[%s630 + $0x84] sm:$0xf]
        %v713 = vld [vmem:[%s630 + $0x88] sm:$0xf]
        %v714 = vld [vmem:[%s630 + $0x8c] sm:$0xf]
        %v715 = vld [vmem:[%s630 + $0x90] sm:$0xf]
        %v716 = vld [vmem:[%s630 + $0x94] sm:$0xf]
        %v717 = vld [vmem:[%s630 + $0x98] sm:$0xf]
        %v718 = vld [vmem:[%s630 + $0x9c] sm:$0xf]
        %v719 = vld [vmem:[%s630 + $0xa0] sm:$0xf]
        %v720 = vld [vmem:[%s630 + $0xa4] sm:$0xf]
        %v721 = vld [vmem:[%s630 + $0xa8] sm:$0xf]
        %v722 = vld [vmem:[%s630 + $0xac] sm:$0xf]
        %v723 = vld [vmem:[%s630 + $0xb0] sm:$0xf]
        %v724 = vld [vmem:[%s630 + $0xb4] sm:$0xf]
        %v725 = vld [vmem:[%s630 + $0xb8] sm:$0xf]
        %v726 = vld [vmem:[%s630 + $0xbc] sm:$0xf]
        %v727 = vld [vmem:[%s630 + $0xc0] sm:$0xf]
        %v728 = vld [vmem:[%s630 + $0xc4] sm:$0xf]
        %v729 = vld [vmem:[%s630 + $0xc8] sm:$0xf]
        %v730 = vld [vmem:[%s630 + $0xcc] sm:$0xf]
        %v731 = vld [vmem:[%s630 + $0xd0] sm:$0xf]
        %v732 = vld [vmem:[%s630 + $0xd4] sm:$0xf]
        %v733 = vld [vmem:[%s630 + $0xd8] sm:$0xf]
        %v734 = vld [vmem:[%s630 + $0xdc] sm:$0xf]
        %v735 = vld [vmem:[%s630 + $0xe0] sm:$0xf]
        %v736 = vld [vmem:[%s630 + $0xe4] sm:$0xf]
        %v737 = vld [vmem:[%s630 + $0xe8] sm:$0xf]
        %v738 = vld [vmem:[%s630 + $0xec] sm:$0xf]
        %v739 = vld [vmem:[%s630 + $0xf0] sm:$0xf]
        %v740 = vld [vmem:[%s630 + $0xf4] sm:$0xf]
        %v741 = vld [vmem:[%s630 + $0xf8] sm:$0xf]
        %v742 = vld [vmem:[%s630 + $0xfc] sm:$0xf]
        %v743 = vld [vmem:[%s630 + $0x100] sm:$0xf]
        %v744 = vld [vmem:[%s630 + $0x104] sm:$0xf]
        %v745 = vld [vmem:[%s630 + $0x108] sm:$0xf]
        %v746 = vld [vmem:[%s630 + $0x10c] sm:$0xf]
        %v747 = vld [vmem:[%s630 + $0x110] sm:$0xf]
        %v748 = vld [vmem:[%s630 + $0x114] sm:$0xf]
        %v749 = vld [vmem:[%s630 + $0x118] sm:$0xf]
        %v750 = vld [vmem:[%s630 + $0x11c] sm:$0xf]
        %v751 = vld [vmem:[%s630 + $0x120] sm:$0xf]
        %v752 = vld [vmem:[%s630 + $0x124] sm:$0xf]
        %v753 = vld [vmem:[%s630 + $0x128] sm:$0xf]
        %v754 = vld [vmem:[%s630 + $0x12c] sm:$0xf]
        %v755 = vld [vmem:[%s630 + $0x130] sm:$0xf]
        %v756 = vld [vmem:[%s630 + $0x134] sm:$0xf]
        %v757 = vld [vmem:[%s630 + $0x138] sm:$0xf]
        %v758 = vld [vmem:[%s630 + $0x13c] sm:$0xf]
        %v759 = vld [vmem:[%s630 + $0x140] sm:$0xf]
        %v760 = vld [vmem:[%s630 + $0x144] sm:$0xf]
        %v761 = vld [vmem:[%s630 + $0x148] sm:$0xf]
        %v762 = vld [vmem:[%s630 + $0x14c] sm:$0xf]
        %v763 = vld [vmem:[%s630 + $0x150] sm:$0xf]
        %v764 = vld [vmem:[%s630 + $0x154] sm:$0xf]
        %v765 = vld [vmem:[%s630 + $0x158] sm:$0xf]
        %v766 = vld [vmem:[%s630 + $0x15c] sm:$0xf]
        %v767 = vld [vmem:[%s630 + $0x160] sm:$0xf]
        %v768 = vld [vmem:[%s630 + $0x164] sm:$0xf]
        %v769 = vld [vmem:[%s630 + $0x168] sm:$0xf]
        %v770 = vld [vmem:[%s630 + $0x16c] sm:$0xf]
        %v771 = vld [vmem:[%s630 + $0x170] sm:$0xf]
        %v772 = vld [vmem:[%s630 + $0x174] sm:$0xf]
        %v773 = vld [vmem:[%s630 + $0x178] sm:$0xf]
        %v774 = vld [vmem:[%s630 + $0x17c] sm:$0xf]
        %v775 = vld [vmem:[%s630 + $0x180] sm:$0xf]
        %v776 = vld [vmem:[%s630 + $0x184] sm:$0xf]
        %v777 = vld [vmem:[%s630 + $0x188] sm:$0xf]
        %v778 = vld [vmem:[%s630 + $0x18c] sm:$0xf]
        %v779 = vld [vmem:[%s630 + $0x190] sm:$0xf]
        %v780 = vld [vmem:[%s630 + $0x194] sm:$0xf]
        %v781 = vld [vmem:[%s630 + $0x198] sm:$0xf]
        %v782 = vld [vmem:[%s630 + $0x19c] sm:$0xf]
        %v783 = vld [vmem:[%s665] sm:$0xf]
        %v784 = vld [vmem:[%s665 + $0x4] sm:$0xf]
        %v785 = vld [vmem:[%s665 + $0x8] sm:$0xf]
        %v786 = vld [vmem:[%s665 + $0xc] sm:$0x1]
        %v891 = vunpack.c.l.b16 %v679
        %v892 = vunpack.c.l.b16 %v680
        %v893 = vunpack.c.l.b16 %v681
        %v894 = vunpack.c.l.b16 %v682
        %v895 = vunpack.c.l.b16 %v683
        %v896 = vunpack.c.l.b16 %v684
        %v897 = vunpack.c.l.b16 %v685
        %v898 = vunpack.c.l.b16 %v686
        %v899 = vunpack.c.l.b16 %v687
        %v900 = vunpack.c.l.b16 %v688
        %v901 = vunpack.c.l.b16 %v689
        %v902 = vunpack.c.l.b16 %v690
        %v903 = vunpack.c.l.b16 %v691
        %v904 = vunpack.c.l.b16 %v692
        %v905 = vunpack.c.l.b16 %v693
        %v906 = vunpack.c.l.b16 %v694
        %v907 = vunpack.c.l.b16 %v695
        %v908 = vunpack.c.l.b16 %v696
        %v909 = vunpack.c.l.b16 %v697
        %v910 = vunpack.c.l.b16 %v698
        %v911 = vunpack.c.l.b16 %v699
        %v912 = vunpack.c.l.b16 %v700
        %v913 = vunpack.c.l.b16 %v701
        %v914 = vunpack.c.l.b16 %v702
        %v915 = vunpack.c.l.b16 %v703
        %v916 = vunpack.c.l.b16 %v704
        %v917 = vunpack.c.l.b16 %v705
        %v918 = vunpack.c.l.b16 %v706
        %v919 = vunpack.c.l.b16 %v707
        %v920 = vunpack.c.l.b16 %v708
        %v921 = vunpack.c.l.b16 %v709
        %v922 = vunpack.c.l.b16 %v710
        %v923 = vunpack.c.l.b16 %v711
        %v924 = vunpack.c.l.b16 %v712
        %v925 = vunpack.c.l.b16 %v713
        %v926 = vunpack.c.l.b16 %v714
        %v927 = vunpack.c.l.b16 %v715
        %v928 = vunpack.c.l.b16 %v716
        %v929 = vunpack.c.l.b16 %v717
        %v930 = vunpack.c.l.b16 %v718
        %v931 = vunpack.c.l.b16 %v719
        %v932 = vunpack.c.l.b16 %v720
        %v933 = vunpack.c.l.b16 %v721
        %v934 = vunpack.c.l.b16 %v722
        %v935 = vunpack.c.l.b16 %v723
        %v936 = vunpack.c.l.b16 %v724
        %v937 = vunpack.c.l.b16 %v725
        %v938 = vunpack.c.l.b16 %v726
        %v939 = vunpack.c.l.b16 %v727
        %v940 = vunpack.c.l.b16 %v728
        %v941 = vunpack.c.l.b16 %v729
        %v942 = vunpack.c.l.b16 %v730
        %v943 = vunpack.c.l.b16 %v731
        %v944 = vunpack.c.l.b16 %v732
        %v945 = vunpack.c.l.b16 %v733
        %v946 = vunpack.c.l.b16 %v734
        %v947 = vunpack.c.l.b16 %v735
        %v948 = vunpack.c.l.b16 %v736
        %v949 = vunpack.c.l.b16 %v737
        %v950 = vunpack.c.l.b16 %v738
        %v951 = vunpack.c.l.b16 %v739
        %v952 = vunpack.c.l.b16 %v740
        %v953 = vunpack.c.l.b16 %v741
        %v954 = vunpack.c.l.b16 %v742
        %v955 = vunpack.c.l.b16 %v743
        %v956 = vunpack.c.l.b16 %v744
        %v957 = vunpack.c.l.b16 %v745
        %v958 = vunpack.c.l.b16 %v746
        %v959 = vunpack.c.l.b16 %v747
        %v960 = vunpack.c.l.b16 %v748
        %v961 = vunpack.c.l.b16 %v749
        %v962 = vunpack.c.l.b16 %v750
        %v963 = vunpack.c.l.b16 %v751
        %v964 = vunpack.c.l.b16 %v752
        %v965 = vunpack.c.l.b16 %v753
        %v966 = vunpack.c.l.b16 %v754
        %v967 = vunpack.c.l.b16 %v755
        %v968 = vunpack.c.l.b16 %v756
        %v969 = vunpack.c.l.b16 %v757
        %v970 = vunpack.c.l.b16 %v758
        %v971 = vunpack.c.l.b16 %v759
        %v972 = vunpack.c.l.b16 %v760
        %v973 = vunpack.c.l.b16 %v761
        %v974 = vunpack.c.l.b16 %v762
        %v975 = vunpack.c.l.b16 %v763
        %v976 = vunpack.c.l.b16 %v764
        %v977 = vunpack.c.l.b16 %v765
        %v978 = vunpack.c.l.b16 %v766
        %v979 = vunpack.c.l.b16 %v767
        %v980 = vunpack.c.l.b16 %v768
        %v981 = vunpack.c.l.b16 %v769
        %v982 = vunpack.c.l.b16 %v770
        %v983 = vunpack.c.l.b16 %v771
        %v984 = vunpack.c.l.b16 %v772
        %v985 = vunpack.c.l.b16 %v773
        %v986 = vunpack.c.l.b16 %v774
        %v987 = vunpack.c.l.b16 %v775
        %v988 = vunpack.c.l.b16 %v776
        %v989 = vunpack.c.l.b16 %v777
        %v990 = vunpack.c.l.b16 %v778
        %v991 = vunpack.c.l.b16 %v779
        %v992 = vunpack.c.l.b16 %v780
        %v993 = vunpack.c.l.b16 %v781
        %v994 = vunpack.c.l.b16 %v782
        %v995 = vpack.c.b16 %v892, %v891
        %v996 = vpack.c.b16 %v894, %v893
        %v997 = vpack.c.b16 %v896, %v895
        %v998 = vpack.c.b16 %v898, %v897
        %v999 = vpack.c.b16 %v900, %v899
        %v1000 = vpack.c.b16 %v902, %v901
        %v1001 = vpack.c.b16 %v904, %v903
        %v1002 = vpack.c.b16 %v906, %v905
        %v1003 = vpack.c.b16 %v908, %v907
        %v1004 = vpack.c.b16 %v910, %v909
        %v1005 = vpack.c.b16 %v912, %v911
        %v1006 = vpack.c.b16 %v914, %v913
        %v1007 = vpack.c.b16 %v916, %v915
        %v1008 = vpack.c.b16 %v918, %v917
        %v1009 = vpack.c.b16 %v920, %v919
        %v1010 = vpack.c.b16 %v922, %v921
        %v1011 = vpack.c.b16 %v924, %v923
        %v1012 = vpack.c.b16 %v926, %v925
        %v1013 = vpack.c.b16 %v928, %v927
        %v1014 = vpack.c.b16 %v930, %v929
        %v1015 = vpack.c.b16 %v932, %v931
        %v1016 = vpack.c.b16 %v934, %v933
        %v1017 = vpack.c.b16 %v936, %v935
        %v1018 = vpack.c.b16 %v938, %v937
        %v1019 = vpack.c.b16 %v940, %v939
        %v1020 = vpack.c.b16 %v942, %v941
        %v1021 = vpack.c.b16 %v944, %v943
        %v1022 = vpack.c.b16 %v946, %v945
        %v1023 = vpack.c.b16 %v948, %v947
        %v1024 = vpack.c.b16 %v950, %v949
        %v1025 = vpack.c.b16 %v952, %v951
        %v1026 = vpack.c.b16 %v954, %v953
        %v1027 = vpack.c.b16 %v956, %v955
        %v1028 = vpack.c.b16 %v958, %v957
        %v1029 = vpack.c.b16 %v960, %v959
        %v1030 = vpack.c.b16 %v962, %v961
        %v1031 = vpack.c.b16 %v964, %v963
        %v1032 = vpack.c.b16 %v966, %v965
        %v1033 = vpack.c.b16 %v968, %v967
        %v1034 = vpack.c.b16 %v970, %v969
        %v1035 = vpack.c.b16 %v972, %v971
        %v1036 = vpack.c.b16 %v974, %v973
        %v1037 = vpack.c.b16 %v976, %v975
        %v1038 = vpack.c.b16 %v978, %v977
        %v1039 = vpack.c.b16 %v980, %v979
        %v1040 = vpack.c.b16 %v982, %v981
        %v1041 = vpack.c.b16 %v984, %v983
        %v1042 = vpack.c.b16 %v986, %v985
        %v1043 = vpack.c.b16 %v988, %v987
        %v1044 = vpack.c.b16 %v990, %v989
        %v1045 = vpack.c.b16 %v992, %v991
        %v1046 = vpack.c.b16 %v994, %v993
        %v1051 = vunpack.c.l.b16 %v783
        %v1052 = vunpack.c.l.b16 %v784
        %v1053 = vunpack.c.l.b16 %v785
        %v1054 = vunpack.c.l.b16 %v786
        %v1055 = vpack.c.b16 %v1052, %v1051
        %v1056 = vpack.c.b16 %v1054, %v1053
        %vm1058 = vcmask 203776
        %v1060 = vsel %vm1058, %v995, 0
        %v1063 = vsel %vm1058, %v996, 0
        %v1066 = vsel %vm1058, %v997, 0
        %v1069 = vsel %vm1058, %v998, 0
        %v1072 = vsel %vm1058, %v999, 0
        %v1075 = vsel %vm1058, %v1000, 0
        %v1078 = vsel %vm1058, %v1001, 0
        %v1081 = vsel %vm1058, %v1002, 0
        %v1084 = vsel %vm1058, %v1003, 0
        %v1087 = vsel %vm1058, %v1004, 0
        %v1090 = vsel %vm1058, %v1005, 0
        %v1093 = vsel %vm1058, %v1006, 0
        %v1096 = vsel %vm1058, %v1007, 0
        %v1099 = vsel %vm1058, %v1008, 0
        %v1102 = vsel %vm1058, %v1009, 0
        %v1105 = vsel %vm1058, %v1010, 0
        %v1108 = vsel %vm1058, %v1011, 0
        %v1111 = vsel %vm1058, %v1012, 0
        %v1114 = vsel %vm1058, %v1013, 0
        %v1117 = vsel %vm1058, %v1014, 0
        %v1120 = vsel %vm1058, %v1015, 0
        %v1123 = vsel %vm1058, %v1016, 0
        %v1126 = vsel %vm1058, %v1017, 0
        %v1129 = vsel %vm1058, %v1018, 0
        %v1132 = vsel %vm1058, %v1019, 0
        %v1135 = vsel %vm1058, %v1020, 0
        %v1138 = vsel %vm1058, %v1021, 0
        %v1141 = vsel %vm1058, %v1022, 0
        %v1144 = vsel %vm1058, %v1023, 0
        %v1147 = vsel %vm1058, %v1024, 0
        %v1150 = vsel %vm1058, %v1025, 0
        %v1153 = vsel %vm1058, %v1026, 0
        %v1156 = vsel %vm1058, %v1027, 0
        %v1159 = vsel %vm1058, %v1028, 0
        %v1162 = vsel %vm1058, %v1029, 0
        %v1165 = vsel %vm1058, %v1030, 0
        %v1168 = vsel %vm1058, %v1031, 0
        %v1171 = vsel %vm1058, %v1032, 0
        %v1174 = vsel %vm1058, %v1033, 0
        %v1177 = vsel %vm1058, %v1034, 0
        %v1180 = vsel %vm1058, %v1035, 0
        %v1183 = vsel %vm1058, %v1036, 0
        %v1186 = vsel %vm1058, %v1037, 0
        %v1189 = vsel %vm1058, %v1038, 0
        %v1192 = vsel %vm1058, %v1039, 0
        %v1195 = vsel %vm1058, %v1040, 0
        %v1198 = vsel %vm1058, %v1041, 0
        %v1201 = vsel %vm1058, %v1042, 0
        %v1204 = vsel %vm1058, %v1043, 0
        %v1207 = vsel %vm1058, %v1044, 0
        %v1210 = vsel %vm1058, %v1045, 0
        %v1213 = vsel %vm1058, %v1046, 0
        %vm1215 = vcmask 1043456
        %vm1216 = vcmask 1044480
        %v1217 = vsel %vm1215, 4294967295, 65535
        %v1218 = vsel %vm1216, %v1217, 0
        %v1220 = vand.u32 %v1056, %v1218
        %1222 = vmatprep.subr.bf16.mxu0 0
        %1223 = vmatpush1.bf16.msra.mxu0 %v1055
        %1224 = vmatprep.subr.bf16.mxu0 0
        %1225 = vmatpush1.bf16.msra.mxu0 %v1220
        %1226 = vmatprep.subr.bf16.mxu0 0
        %1227 = vmatpush1.bf16.msra.mxu0 0
        %1228 = vmatprep.subr.bf16.mxu0 0
        %1229 = vmatpush1.bf16.msra.mxu0 0
        %1230 = vmatprep.subr.bf16.mxu0 0
        %1231 = vmatpush1.bf16.msra.mxu0 0
        %1232 = vmatprep.subr.bf16.mxu0 0
        %1233 = vmatpush1.bf16.msra.mxu0 0
        %1234 = vmatprep.subr.bf16.mxu0 0
        %1235 = vmatpush1.bf16.msra.mxu0 0
        %1236 = vmatprep.subr.bf16.mxu0 0
        %1237 = vmatpush1.bf16.msra.mxu0 0
        %1238 = vmatprep.subr.bf16.mxu0 0
        %1239 = vmatpush1.bf16.msra.mxu0 0
        %1240 = vmatprep.subr.bf16.mxu0 0
        %1241 = vmatpush1.bf16.msra.mxu0 0
        %1242 = vmatprep.subr.bf16.mxu0 0
        %1243 = vmatpush1.bf16.msra.mxu0 0
        %1244 = vmatprep.subr.bf16.mxu0 0
        %1245 = vmatpush1.bf16.msra.mxu0 0
        %1246 = vmatprep.subr.bf16.mxu0 0
        %1247 = vmatpush1.bf16.msra.mxu0 0
        %1248 = vmatprep.subr.bf16.mxu0 0
        %1249 = vmatpush1.bf16.msra.mxu0 0
        %1250 = vmatprep.subr.bf16.mxu0 0
        %1251 = vmatpush1.bf16.msra.mxu0 0
        %1252 = vmatprep.subr.bf16.mxu0 0
        %1253 = vmatpush1.bf16.msra.mxu0 0
        %1254 = vmatprep.mubr.bf16.mxu0 0
        %1255 = vmatmul.mubr.bf16.gmra.mrb[0].mxu0 %v1060
        %v1256 = vpop.f32.mrb[0].mxu0
        %v1257 = vadd.f32 0.0, %v1256
        %v1258 = vpop.f32.mrb[0].mxu0
        %v1259 = vpop.f32.mrb[0].mxu0
        %v1260 = vadd.f32 0.0, %v1259
        %v1261 = vpop.f32.mrb[0].mxu0
        %1262 = vmatprep.mubr.bf16.mxu0 0
        %1263 = vmatmul.mubr.bf16.gmra.mrb[0].mxu0 %v1063
        %v1264 = vpop.f32.mrb[0].mxu0
        %v1265 = vadd.f32 0.0, %v1264
        %v1266 = vpop.f32.mrb[0].mxu0
        %v1267 = vpop.f32.mrb[0].mxu0
        %v1268 = vadd.f32 0.0, %v1267
        %v1269 = vpop.f32.mrb[0].mxu0
        %1270 = vmatprep.mubr.bf16.mxu0 0
        %1271 = vmatmul.mubr.bf16.gmra.mrb[0].mxu0 %v1066
        %v1272 = vpop.f32.mrb[0].mxu0
        %v1273 = vadd.f32 0.0, %v1272
        %v1274 = vpop.f32.mrb[0].mxu0
        %v1275 = vpop.f32.mrb[0].mxu0
        %v1276 = vadd.f32 0.0, %v1275
        %v1277 = vpop.f32.mrb[0].mxu0
        %1278 = vmatprep.mubr.bf16.mxu0 0
        %1279 = vmatmul.mubr.bf16.gmra.mrb[0].mxu0 %v1069
        %v1280 = vpop.f32.mrb[0].mxu0
        %v1281 = vadd.f32 0.0, %v1280
        %v1282 = vpop.f32.mrb[0].mxu0
        %v1283 = vpop.f32.mrb[0].mxu0
        %v1284 = vadd.f32 0.0, %v1283
        %v1285 = vpop.f32.mrb[0].mxu0
        %1286 = vmatprep.mubr.bf16.mxu0 0
        %1287 = vmatmul.mubr.bf16.gmra.mrb[0].mxu0 %v1072
        %v1288 = vpop.f32.mrb[0].mxu0
        %v1289 = vadd.f32 0.0, %v1288
        %v1290 = vpop.f32.mrb[0].mxu0
        %v1291 = vpop.f32.mrb[0].mxu0
        %v1292 = vadd.f32 0.0, %v1291
        %v1293 = vpop.f32.mrb[0].mxu0
        %1294 = vmatprep.mubr.bf16.mxu0 0
        %1295 = vmatmul.mubr.bf16.gmra.mrb[0].mxu0 %v1075
        %v1296 = vpop.f32.mrb[0].mxu0
        %v1297 = vadd.f32 0.0, %v1296
        %v1298 = vpop.f32.mrb[0].mxu0
        %v1299 = vpop.f32.mrb[0].mxu0
        %v1300 = vadd.f32 0.0, %v1299
        %v1301 = vpop.f32.mrb[0].mxu0
        %1302 = vmatprep.mubr.bf16.mxu0 0
        %1303 = vmatmul.mubr.bf16.gmra.mrb[0].mxu0 %v1078
        %v1304 = vpop.f32.mrb[0].mxu0
        %v1305 = vadd.f32 0.0, %v1304
        %v1306 = vpop.f32.mrb[0].mxu0
        %v1307 = vpop.f32.mrb[0].mxu0
        %v1308 = vadd.f32 0.0, %v1307
        %v1309 = vpop.f32.mrb[0].mxu0
        %1310 = vmatprep.mubr.bf16.mxu0 0
        %1311 = vmatmul.mubr.bf16.gmra.mrb[0].mxu0 %v1081
        %v1312 = vpop.f32.mrb[0].mxu0
        %v1313 = vadd.f32 0.0, %v1312
        %v1314 = vpop.f32.mrb[0].mxu0
        %v1315 = vpop.f32.mrb[0].mxu0
        %v1316 = vadd.f32 0.0, %v1315
        %v1317 = vpop.f32.mrb[0].mxu0
        %1318 = vmatprep.mubr.bf16.mxu0 0
        %1319 = vmatmul.mubr.bf16.gmra.mrb[0].mxu0 %v1084
        %v1320 = vpop.f32.mrb[0].mxu0
        %v1321 = vadd.f32 0.0, %v1320
        %v1322 = vpop.f32.mrb[0].mxu0
        %v1323 = vpop.f32.mrb[0].mxu0
        %v1324 = vadd.f32 0.0, %v1323
        %v1325 = vpop.f32.mrb[0].mxu0
        %1326 = vmatprep.mubr.bf16.mxu0 0
        %1327 = vmatmul.mubr.bf16.gmra.mrb[0].mxu0 %v1087
        %v1328 = vpop.f32.mrb[0].mxu0
        %v1329 = vadd.f32 0.0, %v1328
        %v1330 = vpop.f32.mrb[0].mxu0
        %v1331 = vpop.f32.mrb[0].mxu0
        %v1332 = vadd.f32 0.0, %v1331
        %v1333 = vpop.f32.mrb[0].mxu0
        %1334 = vmatprep.mubr.bf16.mxu0 0
        %1335 = vmatmul.mubr.bf16.gmra.mrb[0].mxu0 %v1090
        %v1336 = vpop.f32.mrb[0].mxu0
        %v1337 = vadd.f32 0.0, %v1336
        %v1338 = vpop.f32.mrb[0].mxu0
        %v1339 = vpop.f32.mrb[0].mxu0
        %v1340 = vadd.f32 0.0, %v1339
        %v1341 = vpop.f32.mrb[0].mxu0
        %1342 = vmatprep.mubr.bf16.mxu0 0
        %1343 = vmatmul.mubr.bf16.gmra.mrb[0].mxu0 %v1093
        %v1344 = vpop.f32.mrb[0].mxu0
        %v1345 = vadd.f32 0.0, %v1344
        %v1346 = vpop.f32.mrb[0].mxu0
        %v1347 = vpop.f32.mrb[0].mxu0
        %v1348 = vadd.f32 0.0, %v1347
        %v1349 = vpop.f32.mrb[0].mxu0
        %1350 = vmatprep.mubr.bf16.mxu0 0
        %1351 = vmatmul.mubr.bf16.gmra.mrb[0].mxu0 %v1096
        %v1352 = vpop.f32.mrb[0].mxu0
        %v1353 = vadd.f32 0.0, %v1352
        %v1354 = vpop.f32.mrb[0].mxu0
        %v1355 = vpop.f32.mrb[0].mxu0
        %v1356 = vadd.f32 0.0, %v1355
        %v1357 = vpop.f32.mrb[0].mxu0
        %1358 = vmatprep.mubr.bf16.mxu0 0
        %1359 = vmatmul.mubr.bf16.gmra.mrb[0].mxu0 %v1099
        %v1360 = vpop.f32.mrb[0].mxu0
        %v1361 = vadd.f32 0.0, %v1360
        %v1362 = vpop.f32.mrb[0].mxu0
        %v1363 = vpop.f32.mrb[0].mxu0
        %v1364 = vadd.f32 0.0, %v1363
        %v1365 = vpop.f32.mrb[0].mxu0
        %1366 = vmatprep.mubr.bf16.mxu0 0
        %1367 = vmatmul.mubr.bf16.gmra.mrb[0].mxu0 %v1102
        %v1368 = vpop.f32.mrb[0].mxu0
        %v1369 = vadd.f32 0.0, %v1368
        %v1370 = vpop.f32.mrb[0].mxu0
        %v1371 = vpop.f32.mrb[0].mxu0
        %v1372 = vadd.f32 0.0, %v1371
        %v1373 = vpop.f32.mrb[0].mxu0
        %1374 = vmatprep.mubr.bf16.mxu0 0
        %1375 = vmatmul.mubr.bf16.gmra.mrb[0].mxu0 %v1105
        %v1376 = vpop.f32.mrb[0].mxu0
        %v1377 = vadd.f32 0.0, %v1376
        %v1378 = vpop.f32.mrb[0].mxu0
        %v1379 = vpop.f32.mrb[0].mxu0
        %v1380 = vadd.f32 0.0, %v1379
        %v1381 = vpop.f32.mrb[0].mxu0
        %1382 = vmatprep.mubr.bf16.mxu0 0
        %1383 = vmatmul.mubr.bf16.gmra.mrb[0].mxu0 %v1108
        %v1384 = vpop.f32.mrb[0].mxu0
        %v1385 = vadd.f32 0.0, %v1384
        %v1386 = vpop.f32.mrb[0].mxu0
        %v1387 = vpop.f32.mrb[0].mxu0
        %v1388 = vadd.f32 0.0, %v1387
        %v1389 = vpop.f32.mrb[0].mxu0
        %1390 = vmatprep.mubr.bf16.mxu0 0
        %1391 = vmatmul.mubr.bf16.gmra.mrb[0].mxu0 %v1111
        %v1392 = vpop.f32.mrb[0].mxu0
        %v1393 = vadd.f32 0.0, %v1392
        %v1394 = vpop.f32.mrb[0].mxu0
        %v1395 = vpop.f32.mrb[0].mxu0
        %v1396 = vadd.f32 0.0, %v1395
        %v1397 = vpop.f32.mrb[0].mxu0
        %1398 = vmatprep.mubr.bf16.mxu0 0
        %1399 = vmatmul.mubr.bf16.gmra.mrb[0].mxu0 %v1114
        %v1400 = vpop.f32.mrb[0].mxu0
        %v1401 = vadd.f32 0.0, %v1400
        %v1402 = vpop.f32.mrb[0].mxu0
        %v1403 = vpop.f32.mrb[0].mxu0
        %v1404 = vadd.f32 0.0, %v1403
        %v1405 = vpop.f32.mrb[0].mxu0
        %1406 = vmatprep.mubr.bf16.mxu0 0
        %1407 = vmatmul.mubr.bf16.gmra.mrb[0].mxu0 %v1117
        %v1408 = vpop.f32.mrb[0].mxu0
        %v1409 = vadd.f32 0.0, %v1408
        %v1410 = vpop.f32.mrb[0].mxu0
        %v1411 = vpop.f32.mrb[0].mxu0
        %v1412 = vadd.f32 0.0, %v1411
        %v1413 = vpop.f32.mrb[0].mxu0
        %1414 = vmatprep.mubr.bf16.mxu0 0
        %1415 = vmatmul.mubr.bf16.gmra.mrb[0].mxu0 %v1120
        %v1416 = vpop.f32.mrb[0].mxu0
        %v1417 = vadd.f32 0.0, %v1416
        %v1418 = vpop.f32.mrb[0].mxu0
        %v1419 = vpop.f32.mrb[0].mxu0
        %v1420 = vadd.f32 0.0, %v1419
        %v1421 = vpop.f32.mrb[0].mxu0
        %1422 = vmatprep.mubr.bf16.mxu0 0
        %1423 = vmatmul.mubr.bf16.gmra.mrb[0].mxu0 %v1123
        %v1424 = vpop.f32.mrb[0].mxu0
        %v1425 = vadd.f32 0.0, %v1424
        %v1426 = vpop.f32.mrb[0].mxu0
        %v1427 = vpop.f32.mrb[0].mxu0
        %v1428 = vadd.f32 0.0, %v1427
        %v1429 = vpop.f32.mrb[0].mxu0
        %1430 = vmatprep.mubr.bf16.mxu0 0
        %1431 = vmatmul.mubr.bf16.gmra.mrb[0].mxu0 %v1126
        %v1432 = vpop.f32.mrb[0].mxu0
        %v1433 = vadd.f32 0.0, %v1432
        %v1434 = vpop.f32.mrb[0].mxu0
        %v1435 = vpop.f32.mrb[0].mxu0
        %v1436 = vadd.f32 0.0, %v1435
        %v1437 = vpop.f32.mrb[0].mxu0
        %1438 = vmatprep.mubr.bf16.mxu0 0
        %1439 = vmatmul.mubr.bf16.gmra.mrb[0].mxu0 %v1129
        %v1440 = vpop.f32.mrb[0].mxu0
        %v1441 = vadd.f32 0.0, %v1440
        %v1442 = vpop.f32.mrb[0].mxu0
        %v1443 = vpop.f32.mrb[0].mxu0
        %v1444 = vadd.f32 0.0, %v1443
        %v1445 = vpop.f32.mrb[0].mxu0
        %1446 = vmatprep.mubr.bf16.mxu0 0
        %1447 = vmatmul.mubr.bf16.gmra.mrb[0].mxu0 %v1132
        %v1448 = vpop.f32.mrb[0].mxu0
        %v1449 = vadd.f32 0.0, %v1448
        %v1450 = vpop.f32.mrb[0].mxu0
        %v1451 = vpop.f32.mrb[0].mxu0
        %v1452 = vadd.f32 0.0, %v1451
        %v1453 = vpop.f32.mrb[0].mxu0
        %1454 = vmatprep.mubr.bf16.mxu0 0
        %1455 = vmatmul.mubr.bf16.gmra.mrb[0].mxu0 %v1135
        %v1456 = vpop.f32.mrb[0].mxu0
        %v1457 = vadd.f32 0.0, %v1456
        %v1458 = vpop.f32.mrb[0].mxu0
        %v1459 = vpop.f32.mrb[0].mxu0
        %v1460 = vadd.f32 0.0, %v1459
        %v1461 = vpop.f32.mrb[0].mxu0
        %1462 = vmatprep.mubr.bf16.mxu0 0
        %1463 = vmatmul.mubr.bf16.gmra.mrb[0].mxu0 %v1138
        %v1464 = vpop.f32.mrb[0].mxu0
        %v1465 = vadd.f32 0.0, %v1464
        %v1466 = vpop.f32.mrb[0].mxu0
        %v1467 = vpop.f32.mrb[0].mxu0
        %v1468 = vadd.f32 0.0, %v1467
        %v1469 = vpop.f32.mrb[0].mxu0
        %1470 = vmatprep.mubr.bf16.mxu0 0
        %1471 = vmatmul.mubr.bf16.gmra.mrb[0].mxu0 %v1141
        %v1472 = vpop.f32.mrb[0].mxu0
        %v1473 = vadd.f32 0.0, %v1472
        %v1474 = vpop.f32.mrb[0].mxu0
        %v1475 = vpop.f32.mrb[0].mxu0
        %v1476 = vadd.f32 0.0, %v1475
        %v1477 = vpop.f32.mrb[0].mxu0
        %1478 = vmatprep.mubr.bf16.mxu0 0
        %1479 = vmatmul.mubr.bf16.gmra.mrb[0].mxu0 %v1144
        %v1480 = vpop.f32.mrb[0].mxu0
        %v1481 = vadd.f32 0.0, %v1480
        %v1482 = vpop.f32.mrb[0].mxu0
        %v1483 = vpop.f32.mrb[0].mxu0
        %v1484 = vadd.f32 0.0, %v1483
        %v1485 = vpop.f32.mrb[0].mxu0
        %1486 = vmatprep.mubr.bf16.mxu0 0
        %1487 = vmatmul.mubr.bf16.gmra.mrb[0].mxu0 %v1147
        %v1488 = vpop.f32.mrb[0].mxu0
        %v1489 = vadd.f32 0.0, %v1488
        %v1490 = vpop.f32.mrb[0].mxu0
        %v1491 = vpop.f32.mrb[0].mxu0
        %v1492 = vadd.f32 0.0, %v1491
        %v1493 = vpop.f32.mrb[0].mxu0
        %1494 = vmatprep.mubr.bf16.mxu0 0
        %1495 = vmatmul.mubr.bf16.gmra.mrb[0].mxu0 %v1150
        %v1496 = vpop.f32.mrb[0].mxu0
        %v1497 = vadd.f32 0.0, %v1496
        %v1498 = vpop.f32.mrb[0].mxu0
        %v1499 = vpop.f32.mrb[0].mxu0
        %v1500 = vadd.f32 0.0, %v1499
        %v1501 = vpop.f32.mrb[0].mxu0
        %1502 = vmatprep.mubr.bf16.mxu0 0
        %1503 = vmatmul.mubr.bf16.gmra.mrb[0].mxu0 %v1153
        %v1504 = vpop.f32.mrb[0].mxu0
        %v1505 = vadd.f32 0.0, %v1504
        %v1506 = vpop.f32.mrb[0].mxu0
        %v1507 = vpop.f32.mrb[0].mxu0
        %v1508 = vadd.f32 0.0, %v1507
        %v1509 = vpop.f32.mrb[0].mxu0
        %1510 = vmatprep.mubr.bf16.mxu0 0
        %1511 = vmatmul.mubr.bf16.gmra.mrb[0].mxu0 %v1156
        %v1512 = vpop.f32.mrb[0].mxu0
        %v1513 = vadd.f32 0.0, %v1512
        %v1514 = vpop.f32.mrb[0].mxu0
        %v1515 = vpop.f32.mrb[0].mxu0
        %v1516 = vadd.f32 0.0, %v1515
        %v1517 = vpop.f32.mrb[0].mxu0
        %1518 = vmatprep.mubr.bf16.mxu0 0
        %1519 = vmatmul.mubr.bf16.gmra.mrb[0].mxu0 %v1159
        %v1520 = vpop.f32.mrb[0].mxu0
        %v1521 = vadd.f32 0.0, %v1520
        %v1522 = vpop.f32.mrb[0].mxu0
        %v1523 = vpop.f32.mrb[0].mxu0
        %v1524 = vadd.f32 0.0, %v1523
        %v1525 = vpop.f32.mrb[0].mxu0
        %1526 = vmatprep.mubr.bf16.mxu0 0
        %1527 = vmatmul.mubr.bf16.gmra.mrb[0].mxu0 %v1162
        %v1528 = vpop.f32.mrb[0].mxu0
        %v1529 = vadd.f32 0.0, %v1528
        %v1530 = vpop.f32.mrb[0].mxu0
        %v1531 = vpop.f32.mrb[0].mxu0
        %v1532 = vadd.f32 0.0, %v1531
        %v1533 = vpop.f32.mrb[0].mxu0
        %1534 = vmatprep.mubr.bf16.mxu0 0
        %1535 = vmatmul.mubr.bf16.gmra.mrb[0].mxu0 %v1165
        %v1536 = vpop.f32.mrb[0].mxu0
        %v1537 = vadd.f32 0.0, %v1536
        %v1538 = vpop.f32.mrb[0].mxu0
        %v1539 = vpop.f32.mrb[0].mxu0
        %v1540 = vadd.f32 0.0, %v1539
        %v1541 = vpop.f32.mrb[0].mxu0
        %1542 = vmatprep.mubr.bf16.mxu0 0
        %1543 = vmatmul.mubr.bf16.gmra.mrb[0].mxu0 %v1168
        %v1544 = vpop.f32.mrb[0].mxu0
        %v1545 = vadd.f32 0.0, %v1544
        %v1546 = vpop.f32.mrb[0].mxu0
        %v1547 = vpop.f32.mrb[0].mxu0
        %v1548 = vadd.f32 0.0, %v1547
        %v1549 = vpop.f32.mrb[0].mxu0
        %1550 = vmatprep.mubr.bf16.mxu0 0
        %1551 = vmatmul.mubr.bf16.gmra.mrb[0].mxu0 %v1171
        %v1552 = vpop.f32.mrb[0].mxu0
        %v1553 = vadd.f32 0.0, %v1552
        %v1554 = vpop.f32.mrb[0].mxu0
        %v1555 = vpop.f32.mrb[0].mxu0
        %v1556 = vadd.f32 0.0, %v1555
        %v1557 = vpop.f32.mrb[0].mxu0
        %1558 = vmatprep.mubr.bf16.mxu0 0
        %1559 = vmatmul.mubr.bf16.gmra.mrb[0].mxu0 %v1174
        %v1560 = vpop.f32.mrb[0].mxu0
        %v1561 = vadd.f32 0.0, %v1560
        %v1562 = vpop.f32.mrb[0].mxu0
        %v1563 = vpop.f32.mrb[0].mxu0
        %v1564 = vadd.f32 0.0, %v1563
        %v1565 = vpop.f32.mrb[0].mxu0
        %1566 = vmatprep.mubr.bf16.mxu0 0
        %1567 = vmatmul.mubr.bf16.gmra.mrb[0].mxu0 %v1177
        %v1568 = vpop.f32.mrb[0].mxu0
        %v1569 = vadd.f32 0.0, %v1568
        %v1570 = vpop.f32.mrb[0].mxu0
        %v1571 = vpop.f32.mrb[0].mxu0
        %v1572 = vadd.f32 0.0, %v1571
        %v1573 = vpop.f32.mrb[0].mxu0
        %1574 = vmatprep.mubr.bf16.mxu0 0
        %1575 = vmatmul.mubr.bf16.gmra.mrb[0].mxu0 %v1180
        %v1576 = vpop.f32.mrb[0].mxu0
        %v1577 = vadd.f32 0.0, %v1576
        %v1578 = vpop.f32.mrb[0].mxu0
        %v1579 = vpop.f32.mrb[0].mxu0
        %v1580 = vadd.f32 0.0, %v1579
        %v1581 = vpop.f32.mrb[0].mxu0
        %1582 = vmatprep.mubr.bf16.mxu0 0
        %1583 = vmatmul.mubr.bf16.gmra.mrb[0].mxu0 %v1183
        %v1584 = vpop.f32.mrb[0].mxu0
        %v1585 = vadd.f32 0.0, %v1584
        %v1586 = vpop.f32.mrb[0].mxu0
        %v1587 = vpop.f32.mrb[0].mxu0
        %v1588 = vadd.f32 0.0, %v1587
        %v1589 = vpop.f32.mrb[0].mxu0
        %1590 = vmatprep.mubr.bf16.mxu0 0
        %1591 = vmatmul.mubr.bf16.gmra.mrb[0].mxu0 %v1186
        %v1592 = vpop.f32.mrb[0].mxu0
        %v1593 = vadd.f32 0.0, %v1592
        %v1594 = vpop.f32.mrb[0].mxu0
        %v1595 = vpop.f32.mrb[0].mxu0
        %v1596 = vadd.f32 0.0, %v1595
        %v1597 = vpop.f32.mrb[0].mxu0
        %1598 = vmatprep.mubr.bf16.mxu0 0
        %1599 = vmatmul.mubr.bf16.gmra.mrb[0].mxu0 %v1189
        %v1600 = vpop.f32.mrb[0].mxu0
        %v1601 = vadd.f32 0.0, %v1600
        %v1602 = vpop.f32.mrb[0].mxu0
        %v1603 = vpop.f32.mrb[0].mxu0
        %v1604 = vadd.f32 0.0, %v1603
        %v1605 = vpop.f32.mrb[0].mxu0
        %1606 = vmatprep.mubr.bf16.mxu0 0
        %1607 = vmatmul.mubr.bf16.gmra.mrb[0].mxu0 %v1192
        %v1608 = vpop.f32.mrb[0].mxu0
        %v1609 = vadd.f32 0.0, %v1608
        %v1610 = vpop.f32.mrb[0].mxu0
        %v1611 = vpop.f32.mrb[0].mxu0
        %v1612 = vadd.f32 0.0, %v1611
        %v1613 = vpop.f32.mrb[0].mxu0
        %1614 = vmatprep.mubr.bf16.mxu0 0
        %1615 = vmatmul.mubr.bf16.gmra.mrb[0].mxu0 %v1195
        %v1616 = vpop.f32.mrb[0].mxu0
        %v1617 = vadd.f32 0.0, %v1616
        %v1618 = vpop.f32.mrb[0].mxu0
        %v1619 = vpop.f32.mrb[0].mxu0
        %v1620 = vadd.f32 0.0, %v1619
        %v1621 = vpop.f32.mrb[0].mxu0
        %1622 = vmatprep.mubr.bf16.mxu0 0
        %1623 = vmatmul.mubr.bf16.gmra.mrb[0].mxu0 %v1198
        %v1624 = vpop.f32.mrb[0].mxu0
        %v1625 = vadd.f32 0.0, %v1624
        %v1626 = vpop.f32.mrb[0].mxu0
        %v1627 = vpop.f32.mrb[0].mxu0
        %v1628 = vadd.f32 0.0, %v1627
        %v1629 = vpop.f32.mrb[0].mxu0
        %1630 = vmatprep.mubr.bf16.mxu0 0
        %1631 = vmatmul.mubr.bf16.gmra.mrb[0].mxu0 %v1201
        %v1632 = vpop.f32.mrb[0].mxu0
        %v1633 = vadd.f32 0.0, %v1632
        %v1634 = vpop.f32.mrb[0].mxu0
        %v1635 = vpop.f32.mrb[0].mxu0
        %v1636 = vadd.f32 0.0, %v1635
        %v1637 = vpop.f32.mrb[0].mxu0
        %1638 = vmatprep.mubr.bf16.mxu0 0
        %1639 = vmatmul.mubr.bf16.gmra.mrb[0].mxu0 %v1204
        %v1640 = vpop.f32.mrb[0].mxu0
        %v1641 = vadd.f32 0.0, %v1640
        %v1642 = vpop.f32.mrb[0].mxu0
        %v1643 = vpop.f32.mrb[0].mxu0
        %v1644 = vadd.f32 0.0, %v1643
        %v1645 = vpop.f32.mrb[0].mxu0
        %1646 = vmatprep.mubr.bf16.mxu0 0
        %1647 = vmatmul.mubr.bf16.gmra.mrb[0].mxu0 %v1207
        %v1648 = vpop.f32.mrb[0].mxu0
        %v1649 = vadd.f32 0.0, %v1648
        %v1650 = vpop.f32.mrb[0].mxu0
        %v1651 = vpop.f32.mrb[0].mxu0
        %v1652 = vadd.f32 0.0, %v1651
        %v1653 = vpop.f32.mrb[0].mxu0
        %1654 = vmatprep.mubr.bf16.mxu0 0
        %1655 = vmatmul.mubr.bf16.gmra.mrb[0].mxu0 %v1210
        %v1656 = vpop.f32.mrb[0].mxu0
        %v1657 = vadd.f32 0.0, %v1656
        %v1658 = vpop.f32.mrb[0].mxu0
        %v1659 = vpop.f32.mrb[0].mxu0
        %v1660 = vadd.f32 0.0, %v1659
        %v1661 = vpop.f32.mrb[0].mxu0
        %1662 = vmatprep.mubr.bf16.mxu0 0
        %1663 = vmatmul.mubr.bf16.gmra.mrb[0].mxu0 %v1213
        %v1664 = vpop.f32.mrb[0].mxu0
        %v1665 = vadd.f32 0.0, %v1664
        %v1666 = vpop.f32.mrb[0].mxu0
        %v1667 = vpop.f32.mrb[0].mxu0
        %v1668 = vadd.f32 0.0, %v1667
        %v1669 = vpop.f32.mrb[0].mxu0
        %1670 = vdwg.mxu0
        %v1671 = vmax.f32 %v1257, %v1361
        %v1672 = vmax.f32 %v1260, %v1364
        %v1673 = vmax.f32 %v1265, %v1369
        %v1674 = vmax.f32 %v1268, %v1372
        %v1675 = vmax.f32 %v1273, %v1377
        %v1676 = vmax.f32 %v1276, %v1380
        %v1677 = vmax.f32 %v1281, %v1385
        %v1678 = vmax.f32 %v1284, %v1388
        %v1679 = vmax.f32 %v1289, %v1393
        %v1680 = vmax.f32 %v1292, %v1396
        %v1681 = vmax.f32 %v1297, %v1401
        %v1682 = vmax.f32 %v1300, %v1404
        %v1683 = vmax.f32 %v1305, %v1409
        %v1684 = vmax.f32 %v1308, %v1412
        %v1685 = vmax.f32 %v1313, %v1417
        %v1686 = vmax.f32 %v1316, %v1420
        %v1687 = vmax.f32 %v1321, %v1425
        %v1688 = vmax.f32 %v1324, %v1428
        %v1689 = vmax.f32 %v1329, %v1433
        %v1690 = vmax.f32 %v1332, %v1436
        %v1691 = vmax.f32 %v1337, %v1441
        %v1692 = vmax.f32 %v1340, %v1444
        %v1693 = vmax.f32 %v1345, %v1449
        %v1694 = vmax.f32 %v1348, %v1452
        %v1695 = vmax.f32 %v1353, %v1457
        %v1696 = vmax.f32 %v1356, %v1460
        %v1697 = vmax.f32 %v1671, %v1465
        %v1698 = vmax.f32 %v1672, %v1468
        %v1699 = vmax.f32 %v1673, %v1473
        %v1700 = vmax.f32 %v1674, %v1476
        %v1701 = vmax.f32 %v1675, %v1481
        %v1702 = vmax.f32 %v1676, %v1484
        %v1703 = vmax.f32 %v1677, %v1489
        %v1704 = vmax.f32 %v1678, %v1492
        %v1705 = vmax.f32 %v1679, %v1497
        %v1706 = vmax.f32 %v1680, %v1500
        %v1707 = vmax.f32 %v1681, %v1505
        %v1708 = vmax.f32 %v1682, %v1508
        %v1709 = vmax.f32 %v1683, %v1513
        %v1710 = vmax.f32 %v1684, %v1516
        %v1711 = vmax.f32 %v1685, %v1521
        %v1712 = vmax.f32 %v1686, %v1524
        %v1713 = vmax.f32 %v1687, %v1529
        %v1714 = vmax.f32 %v1688, %v1532
        %v1715 = vmax.f32 %v1689, %v1537
        %v1716 = vmax.f32 %v1690, %v1540
        %v1717 = vmax.f32 %v1691, %v1545
        %v1718 = vmax.f32 %v1692, %v1548
        %v1719 = vmax.f32 %v1693, %v1553
        %v1720 = vmax.f32 %v1694, %v1556
        %v1721 = vmax.f32 %v1695, %v1561
        %v1722 = vmax.f32 %v1696, %v1564
        %v1723 = vmax.f32 %v1697, %v1569
        %v1724 = vmax.f32 %v1698, %v1572
        %v1725 = vmax.f32 %v1699, %v1577
        %v1726 = vmax.f32 %v1700, %v1580
        %v1727 = vmax.f32 %v1701, %v1585
        %v1728 = vmax.f32 %v1702, %v1588
        %v1729 = vmax.f32 %v1703, %v1593
        %v1730 = vmax.f32 %v1704, %v1596
        %v1731 = vmax.f32 %v1705, %v1601
        %v1732 = vmax.f32 %v1706, %v1604
        %v1733 = vmax.f32 %v1707, %v1609
        %v1734 = vmax.f32 %v1708, %v1612
        %v1735 = vmax.f32 %v1709, %v1617
        %v1736 = vmax.f32 %v1710, %v1620
        %v1737 = vmax.f32 %v1711, %v1625
        %v1738 = vmax.f32 %v1712, %v1628
        %v1739 = vmax.f32 %v1713, %v1633
        %v1740 = vmax.f32 %v1714, %v1636
        %v1741 = vmax.f32 %v1715, %v1641
        %v1742 = vmax.f32 %v1716, %v1644
        %v1743 = vmax.f32 %v1717, %v1649
        %v1744 = vmax.f32 %v1718, %v1652
        %v1745 = vmax.f32 %v1719, %v1657
        %v1746 = vmax.f32 %v1720, %v1660
        %v1747 = vmax.f32 %v1721, %v1665
        %v1748 = vmax.f32 %v1722, %v1668
        %v1749 = vld [vmem:[%s668] sm:$0x1]
        %v1751 = vlaneseq
        %v1752 = vshrl.u32 %v1751, 7
        %v1753 = vsub.s32 0, %v1752
        %v1754 = vrot.slane %v1749, %v1753
        %v1756 = vadd.f32 %v1723, %v1754
        %v1757 = vadd.f32 %v1724, %v1754
        %v1758 = vadd.f32 %v1725, %v1754
        %v1759 = vadd.f32 %v1726, %v1754
        %v1760 = vadd.f32 %v1727, %v1754
        %v1761 = vadd.f32 %v1728, %v1754
        %v1762 = vadd.f32 %v1729, %v1754
        %v1763 = vadd.f32 %v1730, %v1754
        %v1764 = vadd.f32 %v1731, %v1754
        %v1765 = vadd.f32 %v1732, %v1754
        %v1766 = vadd.f32 %v1733, %v1754
        %v1767 = vadd.f32 %v1734, %v1754
        %v1768 = vadd.f32 %v1735, %v1754
        %v1769 = vadd.f32 %v1736, %v1754
        %v1770 = vadd.f32 %v1737, %v1754
        %v1771 = vadd.f32 %v1738, %v1754
        %v1772 = vadd.f32 %v1739, %v1754
        %v1773 = vadd.f32 %v1740, %v1754
        %v1774 = vadd.f32 %v1741, %v1754
        %v1775 = vadd.f32 %v1742, %v1754
        %v1776 = vadd.f32 %v1743, %v1754
        %v1777 = vadd.f32 %v1744, %v1754
        %v1778 = vadd.f32 %v1745, %v1754
        %v1779 = vadd.f32 %v1746, %v1754
        %v1780 = vadd.f32 %v1747, %v1754
        %v1781 = vadd.f32 %v1748, %v1754
        %v1782 = vmax.f32 %v1756, 0.0
        %v1783 = vmax.f32 %v1757, 0.0
        %v1784 = vmax.f32 %v1758, 0.0
        %v1785 = vmax.f32 %v1759, 0.0
        %v1786 = vmax.f32 %v1760, 0.0
        %v1787 = vmax.f32 %v1761, 0.0
        %v1788 = vmax.f32 %v1762, 0.0
        %v1789 = vmax.f32 %v1763, 0.0
        %v1790 = vmax.f32 %v1764, 0.0
        %v1791 = vmax.f32 %v1765, 0.0
        %v1792 = vmax.f32 %v1766, 0.0
        %v1793 = vmax.f32 %v1767, 0.0
        %v1794 = vmax.f32 %v1768, 0.0
        %v1795 = vmax.f32 %v1769, 0.0
        %v1796 = vmax.f32 %v1770, 0.0
        %v1797 = vmax.f32 %v1771, 0.0
        %v1798 = vmax.f32 %v1772, 0.0
        %v1799 = vmax.f32 %v1773, 0.0
        %v1800 = vmax.f32 %v1774, 0.0
        %v1801 = vmax.f32 %v1775, 0.0
        %v1802 = vmax.f32 %v1776, 0.0
        %v1803 = vmax.f32 %v1777, 0.0
        %v1804 = vmax.f32 %v1778, 0.0
        %v1805 = vmax.f32 %v1779, 0.0
        %v1806 = vmax.f32 %v1780, 0.0
        %v1807 = vmax.f32 %v1781, 0.0
        %v1808 = vpack.c.bf16 %v1783, %v1782
        %v1809 = vpack.c.bf16 %v1785, %v1784
        %v1810 = vpack.c.bf16 %v1787, %v1786
        %v1811 = vpack.c.bf16 %v1789, %v1788
        %v1812 = vpack.c.bf16 %v1791, %v1790
        %v1813 = vpack.c.bf16 %v1793, %v1792
        %v1814 = vpack.c.bf16 %v1795, %v1794
        %v1815 = vpack.c.bf16 %v1797, %v1796
        %v1816 = vpack.c.bf16 %v1799, %v1798
        %v1817 = vpack.c.bf16 %v1801, %v1800
        %v1818 = vpack.c.bf16 %v1803, %v1802
        %v1819 = vpack.c.bf16 %v1805, %v1804
        %v1820 = vpack.c.bf16 %v1807, %v1806
        %v1834 = vunpack.c.l.b16 %v1808
        %v1835 = vunpack.c.h.b16 %v1808
        %v1836 = vunpack.c.l.b16 %v1809
        %v1837 = vunpack.c.h.b16 %v1809
        %v1838 = vunpack.c.l.b16 %v1810
        %v1839 = vunpack.c.h.b16 %v1810
        %v1840 = vunpack.c.l.b16 %v1811
        %v1841 = vunpack.c.h.b16 %v1811
        %v1842 = vunpack.c.l.b16 %v1812
        %v1843 = vunpack.c.h.b16 %v1812
        %v1844 = vunpack.c.l.b16 %v1813
        %v1845 = vunpack.c.h.b16 %v1813
        %v1846 = vunpack.c.l.b16 %v1814
        %v1847 = vunpack.c.h.b16 %v1814
        %v1848 = vunpack.c.l.b16 %v1815
        %v1849 = vunpack.c.h.b16 %v1815
        %v1850 = vunpack.c.l.b16 %v1816
        %v1851 = vunpack.c.h.b16 %v1816
        %v1852 = vunpack.c.l.b16 %v1817
        %v1853 = vunpack.c.h.b16 %v1817
        %v1854 = vunpack.c.l.b16 %v1818
        %v1855 = vunpack.c.h.b16 %v1818
        %v1856 = vunpack.c.l.b16 %v1819
        %v1857 = vunpack.c.h.b16 %v1819
        %v1858 = vunpack.c.l.b16 %v1820
        %v1859 = vunpack.c.h.b16 %v1820
        %v1860 = vpack.c.b16 %v1834, %v1834
        %v1861 = vpack.c.b16 %v1835, %v1835
        %v1862 = vpack.c.b16 %v1836, %v1836
        %v1863 = vpack.c.b16 %v1837, %v1837
        %v1864 = vpack.c.b16 %v1838, %v1838
        %v1865 = vpack.c.b16 %v1839, %v1839
        %v1866 = vpack.c.b16 %v1840, %v1840
        %v1867 = vpack.c.b16 %v1841, %v1841
        %v1868 = vpack.c.b16 %v1842, %v1842
        %v1869 = vpack.c.b16 %v1843, %v1843
        %v1870 = vpack.c.b16 %v1844, %v1844
        %v1871 = vpack.c.b16 %v1845, %v1845
        %v1872 = vpack.c.b16 %v1846, %v1846
        %v1873 = vpack.c.b16 %v1847, %v1847
        %v1874 = vpack.c.b16 %v1848, %v1848
        %v1875 = vpack.c.b16 %v1849, %v1849
        %v1876 = vpack.c.b16 %v1850, %v1850
        %v1877 = vpack.c.b16 %v1851, %v1851
        %v1878 = vpack.c.b16 %v1852, %v1852
        %v1879 = vpack.c.b16 %v1853, %v1853
        %v1880 = vpack.c.b16 %v1854, %v1854
        %v1881 = vpack.c.b16 %v1855, %v1855
        %v1882 = vpack.c.b16 %v1856, %v1856
        %v1883 = vpack.c.b16 %v1857, %v1857
        %v1884 = vpack.c.b16 %v1858, %v1858
        %v1885 = vpack.c.b16 %v1859, %v1859
        %1912 = vst [vmem:[%s676] sm:$0xf] %v1860
        %1913 = vst [vmem:[%s676 + $0x4] sm:$0xf] %v1861
        %1914 = vst [vmem:[%s676 + $0x8] sm:$0xf] %v1862
        %1915 = vst [vmem:[%s676 + $0xc] sm:$0xf] %v1863
        %1916 = vst [vmem:[%s676 + $0x10] sm:$0xf] %v1864
        %1917 = vst [vmem:[%s676 + $0x14] sm:$0xf] %v1865
        %1918 = vst [vmem:[%s676 + $0x18] sm:$0xf] %v1866
        %1919 = vst [vmem:[%s676 + $0x1c] sm:$0xf] %v1867
        %1920 = vst [vmem:[%s676 + $0x20] sm:$0xf] %v1868
        %1921 = vst [vmem:[%s676 + $0x24] sm:$0xf] %v1869
        %1922 = vst [vmem:[%s676 + $0x28] sm:$0xf] %v1870
        %1923 = vst [vmem:[%s676 + $0x2c] sm:$0xf] %v1871
        %1924 = vst [vmem:[%s676 + $0x30] sm:$0xf] %v1872
        %1925 = vst [vmem:[%s676 + $0x34] sm:$0xf] %v1873
        %1926 = vst [vmem:[%s676 + $0x38] sm:$0xf] %v1874
        %1927 = vst [vmem:[%s676 + $0x3c] sm:$0xf] %v1875
        %1928 = vst [vmem:[%s676 + $0x40] sm:$0xf] %v1876
        %1929 = vst [vmem:[%s676 + $0x44] sm:$0xf] %v1877
        %1930 = vst [vmem:[%s676 + $0x48] sm:$0xf] %v1878
        %1931 = vst [vmem:[%s676 + $0x4c] sm:$0xf] %v1879
        %1932 = vst [vmem:[%s676 + $0x50] sm:$0xf] %v1880
        %1933 = vst [vmem:[%s676 + $0x54] sm:$0xf] %v1881
        %1934 = vst [vmem:[%s676 + $0x58] sm:$0xf] %v1882
        %1935 = vst [vmem:[%s676 + $0x5c] sm:$0xf] %v1883
        %1936 = vst [vmem:[%s676 + $0x60] sm:$0xf] %v1884
        %1937 = vst [vmem:[%s676 + $0x64] sm:$0xf] %v1885
        %s1938 = smul.u32 26, %s18
        %p1939 = scmp.lt.s32.totalorder %s1938, 51
        %s1940 = scalar_select %p1939, %s1938, 51
        %p1941 = scmp.lt.s32.totalorder %s19, 0
        %s1942 = scalar_select %p1941, %s19, 0
        %s1943 = sadd.s32 %s1942, %s1940
        %s1944 = smul.addr %s1943, 4
        %s1945 = scalar_lea.vmem %s3, %s1944
        // Predicated region
        $region74: #{cnn_forward.3} parent=68 // pred_check
          %p1946 = pneg %p124
        $region75: #{cnn_forward.3} parent=68 // pred_check_branch
          %1948 = sbr.rel (%p1946) target = $region77
        $region76: #{cnn_forward.3} parent=68 // pred_region
          %s1949 = smul.u32 26, %s18
        $region77: #{cnn_forward.3} parent=68 // pred_fallthru
          _
      $region69: #{cnn_forward.3} parent=5 // pred_fallthru
        _
      %p1950 = scmp.le.s32.totalorder 2, %s9
      // Predicated region
      $region78: #{cnn_forward.3} parent=5 // pred_check
        %p1951 = pneg %p1950
      $region79: #{cnn_forward.3} parent=5 // pred_check_branch
        %1953 = sbr.rel (%p1951) target = $region81
      $region80: #{cnn_forward.3} parent=5 // pred_region
        %s1954 = ssub.s32 %s9, 2
        // Predicated region
        $region82: #{cnn_forward.3} parent=80 // pred_check
          %p1955 = pneg %p130
        $region83: #{cnn_forward.3} parent=80 // pred_check_branch
          %1957 = sbr.rel (%p1955) target = $region85
        $region84: #{cnn_forward.3} parent=80 // pred_region
          %s1958 = smul.u32 26, %s20
          %p1959 = scmp.lt.s32.totalorder %s1958, 51
          %s1960 = scalar_select %p1959, %s1958, 51
          %p1961 = scmp.lt.s32.totalorder %s21, 0
          %s1962 = scalar_select %p1961, %s21, 0
          %s1963 = sadd.s32 %s1962, %s1960
          %s1964 = smul.addr %s1963, 4
          %s1965 = scalar_lea.vmem %s3, %s1964
        $region85: #{cnn_forward.3} parent=80 // pred_fallthru
          _
      $region81: #{cnn_forward.3} parent=5 // pred_fallthru
        _
    $region6: #{cnn_forward.3} parent=1 // loop_footer
      %s13 = sadd.s32 1, %s9
    $region7: #{cnn_forward.3} parent=1 // loop_footer_branch
      %8 = sbr.rel target = $region3
    $region8: #{cnn_forward.3} parent=1 // loop_exit
      _

// kernel: cnn_forward.4
$region0: #{cnn_forward.4}
  #allocation0 [shape = 'u32[]', space=smem, size = 0x4, offset = 0x4, fixed_abs, tag = 'smem constant byte address 0x4 - core index']
  #allocation1 [shape = 'u32[144,128]{1,0:T(1,128)}', space=vmem, size = 0x12000, scoped, tag = 'internal scratch']
  %s0 = inlined_call_operand.vmem [shape: bf16[4,128,400], index: 0, kind: input, shape index: {}]
  %s1 = inlined_call_operand.vmem [shape: bf16[400,128], index: 1, kind: input, shape index: {}]
  %s2 = inlined_call_operand.vmem [shape: f32[1,128], index: 2, kind: input, shape index: {}]
  %s3 = inlined_call_operand.vmem [shape: f32[128,128], index: 3, kind: output, shape index: {}]
  %s4 = sld [smem:[#allocation0]]
  $region68: #{cnn_forward.4} parent=0
    _
  %s6 = ssub.s32 1, %s4
  %s7 = scalar_select 0, %s6, %s4
  $region1: #{cnn_forward.4} parent=0
    #allocation2 [shape = 'u8[524288]{0}', space=vmem, size = 0x80000, scoped, tag = 'input window, operand 0']
    loop: start=0, step=1, limit=4
    $region2: #{cnn_forward.4} parent=1 // loop_pre_header
      _
    $region3: #{cnn_forward.4} parent=1 // loop_header
      %s9 = sphi 0, %s13
      %p10 = scmp.ge.s32.totalorder %s9, 4
      %s16 = sphi 0, %s28
      %s17 = sphi 0, %s24
      %s18 = sphi 0, %s16
      %s19 = sphi 0, %s17
      %s20 = sphi 0, %s18
      %s21 = sphi 0, %s19
      %s31 = sphi 0, %s33
      %s34 = sphi 0, %s31
      %s35 = sphi 0, %s34
      %s51 = sphi 0, %s35
      %s57 = sphi 0, %s59
      %s60 = sphi 0, %s57
      %s61 = sphi 0, %s60
      %s77 = sphi 0, %s61
      %s83 = sphi 0, %s85
      %s86 = sphi 0, %s83
      %s87 = sphi 0, %s86
      %s103 = sphi 0, %s87
      %s111 = sphi 0, %s113
      %s114 = sphi 0, %s111
      %s115 = sphi 0, %s114
      %s131 = sphi 0, %s115
    $region4: #{cnn_forward.4} parent=1 // loop_header_branch
      %12 = sbr.rel (%p10) target = $region8
    $region5: #{cnn_forward.4} parent=1 // loop_body
      %s14 = ssub.s32 %s9, 1
      %s15 = ssub.s32 %s9, 2
      %s22 = sadd.s32 1, %s17
      %p23 = scmp.ge.s32.totalorder %s22, 1
      %s24 = scalar_select %p23, 0, %s22
      %s25 = sadd.s32 1, %s16
      %s26 = scalar_select %p23, %s25, %s16
      %p27 = scmp.ge.s32.totalorder %s26, 2
      %s28 = scalar_select %p27, 0, %s26
      %s29 = ssub.s32 %s16, %s28
      %p30 = scmp.eq.s32.totalorder %s29, 0
      %s32 = sadd.s32 %s31, 1
      %s33 = scalar_select %p30, %s31, %s32
      %p36 = pneg %p30
      %p37 = scmp.eq.s32.totalorder %s9, 1
      %p38 = por %p36, %p37
      %p39 = scmp.ne.s32.totalorder %s31, %s34
      %p40 = scmp.eq.s32.totalorder %s9, 0
      %p41 = por %p39, %p40
      %p42 = scmp.ne.s32.totalorder %s31, %s34
      %p43 = scmp.eq.s32.totalorder %s14, 1
      %p44 = por %p42, %p43
      %p45 = scmp.ne.s32.totalorder %s34, %s35
      %p46 = scmp.eq.s32.totalorder %s14, 0
      %p47 = por %p45, %p46
      %p48 = scmp.ne.s32.totalorder %s34, %s35
      %p49 = scmp.eq.s32.totalorder %s15, 1
      %p50 = por %p48, %p49
      %p52 = scmp.ne.s32.totalorder %s35, %s51
      %p53 = scmp.eq.s32.totalorder %s15, 0
      %p54 = por %p52, %p53
      %s55 = ssub.s32 %s17, %s24
      %p56 = scmp.eq.s32.totalorder %s55, 0
      %s58 = sadd.s32 %s57, 1
      %s59 = scalar_select %p56, %s57, %s58
      %p62 = pneg %p56
      %p63 = scmp.eq.s32.totalorder %s9, 1
      %p64 = por %p62, %p63
      %p65 = scmp.ne.s32.totalorder %s57, %s60
      %p66 = scmp.eq.s32.totalorder %s9, 0
      %p67 = por %p65, %p66
      %p68 = scmp.ne.s32.totalorder %s57, %s60
      %p69 = scmp.eq.s32.totalorder %s14, 1
      %p70 = por %p68, %p69
      %p71 = scmp.ne.s32.totalorder %s60, %s61
      %p72 = scmp.eq.s32.totalorder %s14, 0
      %p73 = por %p71, %p72
      %p74 = scmp.ne.s32.totalorder %s60, %s61
      %p75 = scmp.eq.s32.totalorder %s15, 1
      %p76 = por %p74, %p75
      %p78 = scmp.ne.s32.totalorder %s61, %s77
      %p79 = scmp.eq.s32.totalorder %s15, 0
      %p80 = por %p78, %p79
      %s81 = ssub.s32 %s17, %s24
      %p82 = scmp.eq.s32.totalorder %s81, 0
      %s84 = sadd.s32 %s83, 1
      %s85 = scalar_select %p82, %s83, %s84
      %p88 = pneg %p82
      %p89 = scmp.eq.s32.totalorder %s9, 1
      %p90 = por %p88, %p89
      %p91 = scmp.ne.s32.totalorder %s83, %s86
      %p92 = scmp.eq.s32.totalorder %s9, 0
      %p93 = por %p91, %p92
      %p94 = scmp.ne.s32.totalorder %s83, %s86
      %p95 = scmp.eq.s32.totalorder %s14, 1
      %p96 = por %p94, %p95
      %p97 = scmp.ne.s32.totalorder %s86, %s87
      %p98 = scmp.eq.s32.totalorder %s14, 0
      %p99 = por %p97, %p98
      %p100 = scmp.ne.s32.totalorder %s86, %s87
      %p101 = scmp.eq.s32.totalorder %s15, 1
      %p102 = por %p100, %p101
      %p104 = scmp.ne.s32.totalorder %s87, %s103
      %p105 = scmp.eq.s32.totalorder %s15, 0
      %p106 = por %p104, %p105
      %s107 = ssub.s32 %s16, %s28
      %s108 = ssub.s32 %s17, %s24
      %s109 = sor.u32 %s107, %s108
      %p110 = scmp.eq.s32.totalorder %s109, 0
      %s112 = sadd.s32 %s111, 1
      %s113 = scalar_select %p110, %s111, %s112
      %p116 = pneg %p110
      %p117 = scmp.eq.s32.totalorder %s9, 1
      %p118 = por %p116, %p117
      %p119 = scmp.ne.s32.totalorder %s111, %s114
      %p120 = scmp.eq.s32.totalorder %s9, 0
      %p121 = por %p119, %p120
      %p122 = scmp.ne.s32.totalorder %s111, %s114
      %p123 = scmp.eq.s32.totalorder %s14, 1
      %p124 = por %p122, %p123
      %p125 = scmp.ne.s32.totalorder %s114, %s115
      %p126 = scmp.eq.s32.totalorder %s14, 0
      %p127 = por %p125, %p126
      %p128 = scmp.ne.s32.totalorder %s114, %s115
      %p129 = scmp.eq.s32.totalorder %s15, 1
      %p130 = por %p128, %p129
      %p132 = scmp.ne.s32.totalorder %s115, %s131
      %p133 = scmp.eq.s32.totalorder %s15, 0
      %p134 = por %p132, %p133
      %p135 = scmp.le.s32.totalorder 1, %s9
      %p136 = scmp.lt.s32.totalorder %s9, 3
      %p137 = pnand %p135, %p136
      %p138 = pneg %p137
      // Predicated region
      $region9: #{cnn_forward.4} parent=5 // pred_check
        _
      $region10: #{cnn_forward.4} parent=5 // pred_check_branch
        %140 = sbr.rel (%p137) target = $region12
      $region11: #{cnn_forward.4} parent=5 // pred_region
        %s141 = ssub.s32 %s9, 1
        // Predicated region
        $region13: #{cnn_forward.4} parent=11 // pred_check
          %p142 = pneg %p73
        $region14: #{cnn_forward.4} parent=11 // pred_check_branch
          %144 = sbr.rel (%p142) target = $region16
        $region15: #{cnn_forward.4} parent=11 // pred_region
          %p145 = scmp.lt.s32.totalorder %s19, 0
          %s146 = scalar_select %p145, %s19, 0
          %s147 = smul.addr %s146, 4
          %s148 = scalar_lea.vmem %s1, %s147
        $region16: #{cnn_forward.4} parent=11 // pred_fallthru
          _
        // Predicated region
        $region17: #{cnn_forward.4} parent=11 // pred_check
          %p149 = pneg %p99
        $region18: #{cnn_forward.4} parent=11 // pred_check_branch
          %151 = sbr.rel (%p149) target = $region20
        $region19: #{cnn_forward.4} parent=11 // pred_region
          %p152 = scmp.lt.s32.totalorder %s19, 0
          %s153 = scalar_select %p152, %s19, 0
          %s154 = scalar_lea.vmem %s2, %s153
        $region20: #{cnn_forward.4} parent=11 // pred_fallthru
          _
      $region12: #{cnn_forward.4} parent=5 // pred_fallthru
        _
      %p155 = scmp.lt.s32.totalorder %s9, 2
      // Predicated region
      $region21: #{cnn_forward.4} parent=5 // pred_check
        %p156 = pneg %p155
      $region22: #{cnn_forward.4} parent=5 // pred_check_branch
        %158 = sbr.rel (%p156) target = $region24
      $region23: #{cnn_forward.4} parent=5 // pred_region
        // Predicated region
        $region25: #{cnn_forward.4} parent=23 // pred_check
          %p159 = pneg %p41
        $region26: #{cnn_forward.4} parent=23 // pred_check_branch
          %161 = sbr.rel (%p159) target = $region28
        $region27: #{cnn_forward.4} parent=23 // pred_region
          %s162 = sand.u32 %s31, 1
          %s163 = sand.u32 %s31, 1
          %s164 = smul.addr %s163, 512
          %s165 = scalar_lea.vmem [#allocation2], %s164
          %s166 = smul.u32 8, %s16
          %s167 = smul.addr %s166, 4
          %s168 = smul.addr %s167, 4
          %s169 = scalar_lea.vmem %s0, %s168
          // Predicated region
          $region29: #{cnn_forward.4} parent=27 // pred_check
            _
          $region30: #{cnn_forward.4} parent=27 // pred_check_branch
            %171 = sbr.rel (0) target = $region32
          $region31: #{cnn_forward.4} parent=27 // pred_region
            // Predicated region
            $region33: #{cnn_forward.4} parent=31 // pred_check
              _
            $region34: #{cnn_forward.4} parent=31 // pred_check_branch
              %173 = sbr.rel (0) target = $region36
            $region35: #{cnn_forward.4} parent=31 // pred_region
              loop: start=0, step=1, limit=1
              $region37: #{cnn_forward.4} parent=35 // loop_pre_header
                _
              $region38: #{cnn_forward.4} parent=35 // loop_header
                %s175 = sphi 0, %s179
                %p176 = scmp.ge.s32.totalorder %s175, 1
                %s180 = sphi %s169, %s169
                %s181 = sphi %s165, %s165
              $region39: #{cnn_forward.4} parent=35 // loop_header_branch
                %178 = sbr.rel (%p176) target = $region43
              $region40: #{cnn_forward.4} parent=35 // loop_body
                %v182 = vld [vmem:[%s180] sm:$0xff]
                %183 = vst [vmem:[%s181] sm:$0xff] %v182
                %v184 = vld [vmem:[%s180 + $0x8] sm:$0xff]
                %185 = vst [vmem:[%s181 + $0x8] sm:$0xff] %v184
                %v186 = vld [vmem:[%s180 + $0x10] sm:$0xff]
                %187 = vst [vmem:[%s181 + $0x10] sm:$0xff] %v186
                %v188 = vld [vmem:[%s180 + $0x18] sm:$0xff]
                %189 = vst [vmem:[%s181 + $0x18] sm:$0xff] %v188
                %v190 = vld [vmem:[%s180 + $0x20] sm:$0xff]
                %191 = vst [vmem:[%s181 + $0x20] sm:$0xff] %v190
                %v192 = vld [vmem:[%s180 + $0x28] sm:$0xff]
                %193 = vst [vmem:[%s181 + $0x28] sm:$0xff] %v192
                %v194 = vld [vmem:[%s180 + $0x30] sm:$0xff]
                %195 = vst [vmem:[%s181 + $0x30] sm:$0xff] %v194
                %v196 = vld [vmem:[%s180 + $0x38] sm:$0xff]
                %197 = vst [vmem:[%s181 + $0x38] sm:$0xff] %v196
                %v198 = vld [vmem:[%s180 + $0x40] sm:$0xff]
                %199 = vst [vmem:[%s181 + $0x40] sm:$0xff] %v198
                %v200 = vld [vmem:[%s180 + $0x48] sm:$0xff]
                %201 = vst [vmem:[%s181 + $0x48] sm:$0xff] %v200
                %v202 = vld [vmem:[%s180 + $0x50] sm:$0xff]
                %203 = vst [vmem:[%s181 + $0x50] sm:$0xff] %v202
                %v204 = vld [vmem:[%s180 + $0x58] sm:$0xff]
                %205 = vst [vmem:[%s181 + $0x58] sm:$0xff] %v204
                %v206 = vld [vmem:[%s180 + $0x60] sm:$0xff]
                %207 = vst [vmem:[%s181 + $0x60] sm:$0xff] %v206
                %v208 = vld [vmem:[%s180 + $0x68] sm:$0xff]
                %209 = vst [vmem:[%s181 + $0x68] sm:$0xff] %v208
                %v210 = vld [vmem:[%s180 + $0x70] sm:$0xff]
                %211 = vst [vmem:[%s181 + $0x70] sm:$0xff] %v210
                %v212 = vld [vmem:[%s180 + $0x78] sm:$0xff]
                %213 = vst [vmem:[%s181 + $0x78] sm:$0xff] %v212
                %v214 = vld [vmem:[%s180 + $0x100] sm:$0xff]
                %215 = vst [vmem:[%s181 + $0x80] sm:$0xff] %v214
                %v216 = vld [vmem:[%s180 + $0x108] sm:$0xff]
                %217 = vst [vmem:[%s181 + $0x88] sm:$0xff] %v216
                %v218 = vld [vmem:[%s180 + $0x110] sm:$0xff]
                %219 = vst [vmem:[%s181 + $0x90] sm:$0xff] %v218
                %v220 = vld [vmem:[%s180 + $0x118] sm:$0xff]
                %221 = vst [vmem:[%s181 + $0x98] sm:$0xff] %v220
                %v222 = vld [vmem:[%s180 + $0x120] sm:$0xff]
                %223 = vst [vmem:[%s181 + $0xa0] sm:$0xff] %v222
                %v224 = vld [vmem:[%s180 + $0x128] sm:$0xff]
                %225 = vst [vmem:[%s181 + $0xa8] sm:$0xff] %v224
                %v226 = vld [vmem:[%s180 + $0x130] sm:$0xff]
                %227 = vst [vmem:[%s181 + $0xb0] sm:$0xff] %v226
                %v228 = vld [vmem:[%s180 + $0x138] sm:$0xff]
                %229 = vst [vmem:[%s181 + $0xb8] sm:$0xff] %v228
                %v230 = vld [vmem:[%s180 + $0x140] sm:$0xff]
                %231 = vst [vmem:[%s181 + $0xc0] sm:$0xff] %v230
                %v232 = vld [vmem:[%s180 + $0x148] sm:$0xff]
                %233 = vst [vmem:[%s181 + $0xc8] sm:$0xff] %v232
                %v234 = vld [vmem:[%s180 + $0x150] sm:$0xff]
                %235 = vst [vmem:[%s181 + $0xd0] sm:$0xff] %v234
                %v236 = vld [vmem:[%s180 + $0x158] sm:$0xff]
                %237 = vst [vmem:[%s181 + $0xd8] sm:$0xff] %v236
                %v238 = vld [vmem:[%s180 + $0x160] sm:$0xff]
                %239 = vst [vmem:[%s181 + $0xe0] sm:$0xff] %v238
                %v240 = vld [vmem:[%s180 + $0x168] sm:$0xff]
                %241 = vst [vmem:[%s181 + $0xe8] sm:$0xff] %v240
                %v242 = vld [vmem:[%s180 + $0x170] sm:$0xff]
                %243 = vst [vmem:[%s181 + $0xf0] sm:$0xff] %v242
                %v244 = vld [vmem:[%s180 + $0x178] sm:$0xff]
                %245 = vst [vmem:[%s181 + $0xf8] sm:$0xff] %v244
                %v246 = vld [vmem:[%s180 + $0x200] sm:$0xff]
                %247 = vst [vmem:[%s181 + $0x100] sm:$0xff] %v246
                %v248 = vld [vmem:[%s180 + $0x208] sm:$0xff]
                %249 = vst [vmem:[%s181 + $0x108] sm:$0xff] %v248
                %v250 = vld [vmem:[%s180 + $0x210] sm:$0xff]
                %251 = vst [vmem:[%s181 + $0x110] sm:$0xff] %v250
                %v252 = vld [vmem:[%s180 + $0x218] sm:$0xff]
                %253 = vst [vmem:[%s181 + $0x118] sm:$0xff] %v252
                %v254 = vld [vmem:[%s180 + $0x220] sm:$0xff]
                %255 = vst [vmem:[%s181 + $0x120] sm:$0xff] %v254
                %v256 = vld [vmem:[%s180 + $0x228] sm:$0xff]
                %257 = vst [vmem:[%s181 + $0x128] sm:$0xff] %v256
                %v258 = vld [vmem:[%s180 + $0x230] sm:$0xff]
                %259 = vst [vmem:[%s181 + $0x130] sm:$0xff] %v258
                %v260 = vld [vmem:[%s180 + $0x238] sm:$0xff]
                %261 = vst [vmem:[%s181 + $0x138] sm:$0xff] %v260
                %v262 = vld [vmem:[%s180 + $0x240] sm:$0xff]
                %263 = vst [vmem:[%s181 + $0x140] sm:$0xff] %v262
                %v264 = vld [vmem:[%s180 + $0x248] sm:$0xff]
                %265 = vst [vmem:[%s181 + $0x148] sm:$0xff] %v264
                %v266 = vld [vmem:[%s180 + $0x250] sm:$0xff]
                %267 = vst [vmem:[%s181 + $0x150] sm:$0xff] %v266
                %v268 = vld [vmem:[%s180 + $0x258] sm:$0xff]
                %269 = vst [vmem:[%s181 + $0x158] sm:$0xff] %v268
                %v270 = vld [vmem:[%s180 + $0x260] sm:$0xff]
                %271 = vst [vmem:[%s181 + $0x160] sm:$0xff] %v270
                %v272 = vld [vmem:[%s180 + $0x268] sm:$0xff]
                %273 = vst [vmem:[%s181 + $0x168] sm:$0xff] %v272
                %v274 = vld [vmem:[%s180 + $0x270] sm:$0xff]
                %275 = vst [vmem:[%s181 + $0x170] sm:$0xff] %v274
                %v276 = vld [vmem:[%s180 + $0x278] sm:$0xff]
                %277 = vst [vmem:[%s181 + $0x178] sm:$0xff] %v276
                %v278 = vld [vmem:[%s180 + $0x300] sm:$0xff]
                %279 = vst [vmem:[%s181 + $0x180] sm:$0xff] %v278
                %v280 = vld [vmem:[%s180 + $0x308] sm:$0xff]
                %281 = vst [vmem:[%s181 + $0x188] sm:$0xff] %v280
                %v282 = vld [vmem:[%s180 + $0x310] sm:$0xff]
                %283 = vst [vmem:[%s181 + $0x190] sm:$0xff] %v282
                %v284 = vld [vmem:[%s180 + $0x318] sm:$0xff]
                %285 = vst [vmem:[%s181 + $0x198] sm:$0xff] %v284
                %v286 = vld [vmem:[%s180 + $0x320] sm:$0xff]
                %287 = vst [vmem:[%s181 + $0x1a0] sm:$0xff] %v286
                %v288 = vld [vmem:[%s180 + $0x328] sm:$0xff]
                %289 = vst [vmem:[%s181 + $0x1a8] sm:$0xff] %v288
                %v290 = vld [vmem:[%s180 + $0x330] sm:$0xff]
                %291 = vst [vmem:[%s181 + $0x1b0] sm:$0xff] %v290
                %v292 = vld [vmem:[%s180 + $0x338] sm:$0xff]
                %293 = vst [vmem:[%s181 + $0x1b8] sm:$0xff] %v292
                %v294 = vld [vmem:[%s180 + $0x340] sm:$0xff]
                %295 = vst [vmem:[%s181 + $0x1c0] sm:$0xff] %v294
                %v296 = vld [vmem:[%s180 + $0x348] sm:$0xff]
                %297 = vst [vmem:[%s181 + $0x1c8] sm:$0xff] %v296
                %v298 = vld [vmem:[%s180 + $0x350] sm:$0xff]
                %299 = vst [vmem:[%s181 + $0x1d0] sm:$0xff] %v298
                %v300 = vld [vmem:[%s180 + $0x358] sm:$0xff]
                %301 = vst [vmem:[%s181 + $0x1d8] sm:$0xff] %v300
                %v302 = vld [vmem:[%s180 + $0x360] sm:$0xff]
                %303 = vst [vmem:[%s181 + $0x1e0] sm:$0xff] %v302
                %v304 = vld [vmem:[%s180 + $0x368] sm:$0xff]
                %305 = vst [vmem:[%s181 + $0x1e8] sm:$0xff] %v304
                %v306 = vld [vmem:[%s180 + $0x370] sm:$0xff]
                %307 = vst [vmem:[%s181 + $0x1f0] sm:$0xff] %v306
                %v308 = vld [vmem:[%s180 + $0x378] sm:$0xff]
                %309 = vst [vmem:[%s181 + $0x1f8] sm:$0xff] %v308
              $region41: #{cnn_forward.4} parent=35 // loop_footer
                %s179 = sadd.s32 1, %s175
              $region42: #{cnn_forward.4} parent=35 // loop_footer_branch
                %174 = sbr.rel target = $region38
              $region43: #{cnn_forward.4} parent=35 // loop_exit
                _
            $region36: #{cnn_forward.4} parent=31 // pred_fallthru
              _
            // Predicated region
            $region44: #{cnn_forward.4} parent=31 // pred_check
              _
            $region45: #{cnn_forward.4} parent=31 // pred_check_branch
              %311 = sbr.rel target = $region47
            $region46: #{cnn_forward.4} parent=31 // pred_region
              _
            $region47: #{cnn_forward.4} parent=31 // pred_fallthru
              _
          $region32: #{cnn_forward.4} parent=27 // pred_fallthru
            _
          %312 = vnop
        $region28: #{cnn_forward.4} parent=23 // pred_fallthru
          _
      $region24: #{cnn_forward.4} parent=5 // pred_fallthru
        _
      %p313 = scmp.le.s32.totalorder 1, %s9
      %p314 = scmp.lt.s32.totalorder %s9, 3
      %p315 = pnand %p313, %p314
      %p316 = pneg %p315
      // Predicated region
      $region48: #{cnn_forward.4} parent=5 // pred_check
        _
      $region49: #{cnn_forward.4} parent=5 // pred_check_branch
        %318 = sbr.rel (%p315) target = $region51
      $region50: #{cnn_forward.4} parent=5 // pred_region
        %s319 = ssub.s32 %s9, 1
        %s320 = sand.u32 %s34, 1
        %s321 = sand.u32 %s34, 1
        %s322 = smul.addr %s321, 512
        %s323 = scalar_lea.vmem [#allocation2], %s322
        // Predicated region
        $region52: #{cnn_forward.4} parent=50 // pred_check
          %p324 = pneg %p47
        $region53: #{cnn_forward.4} parent=50 // pred_check_branch
          %326 = sbr.rel (%p324) target = $region55
        $region54: #{cnn_forward.4} parent=50 // pred_region
          _
        $region55: #{cnn_forward.4} parent=50 // pred_fallthru
          _
        %s327 = sand.u32 %s34, 1
        %s328 = sand.u32 %s34, 1
        %s329 = smul.addr %s328, 512
        %s330 = scalar_lea.vmem [#allocation2], %s329
        %p331 = pneg %p47
        %p332 = pneg %p44
        %p333 = scmp.lt.s32.totalorder %s19, 0
        %s334 = scalar_select %p333, %s19, 0
        %s335 = smul.addr %s334, 4
        %s336 = scalar_lea.vmem %s1, %s335
        %p337 = pneg %p73
        %p338 = pneg %p70
        %p339 = scmp.lt.s32.totalorder %s19, 0
        %s340 = scalar_select %p339, %s19, 0
        %s341 = scalar_lea.vmem %s2, %s340
        %p342 = pneg %p99
        %p343 = pneg %p96
        %p344 = pneg %p127
        %p345 = pneg %p124
        %s346 = smul.u32 8, %s18
        %p347 = scmp.lt.s32.totalorder %s346, 15
        %s348 = scalar_select %p347, %s346, 15
        %p349 = scmp.lt.s32.totalorder %s19, 0
        %s350 = scalar_select %p349, %s19, 0
        %s351 = sadd.s32 %s350, %s348
        %s352 = smul.addr %s351, 8
        %s353 = scalar_lea.vmem %s3, %s352
        %s354 = smul.u32 8, %s18
        %p355 = scmp.lt.s32.totalorder %s19, 0
        %s356 = scalar_select %p355, %s19, 0
        %s357 = smul.addr %s356, 4
        %s358 = scalar_lea.vmem %s1, %s357
        %p359 = scmp.lt.s32.totalorder %s19, 0
        %s360 = scalar_select %p359, %s19, 0
        %s361 = scalar_lea.vmem %s2, %s360
        %s362 = smul.u32 8, %s18
        %p363 = scmp.lt.s32.totalorder %s362, 15
        %s364 = scalar_select %p363, %s362, 15
        %p365 = scmp.lt.s32.totalorder %s19, 0
        %s366 = scalar_select %p365, %s19, 0
        %s367 = sadd.s32 %s366, %s364
        %s368 = smul.addr %s367, 8
        %s369 = scalar_lea.vmem %s3, %s368
        %s370 = smul.u32 8, %s18
        %v372 = vld [vmem:[%s323] sm:$0xff]
        %v373 = vld [vmem:[%s323 + $0x8] sm:$0xff]
        %v374 = vld [vmem:[%s323 + $0x10] sm:$0xff]
        %v375 = vld [vmem:[%s323 + $0x18] sm:$0xff]
        %v376 = vld [vmem:[%s323 + $0x20] sm:$0xff]
        %v377 = vld [vmem:[%s323 + $0x28] sm:$0xff]
        %v378 = vld [vmem:[%s323 + $0x30] sm:$0xff]
        %v379 = vld [vmem:[%s323 + $0x38] sm:$0xff]
        %v380 = vld [vmem:[%s323 + $0x40] sm:$0xff]
        %v381 = vld [vmem:[%s323 + $0x48] sm:$0xff]
        %v382 = vld [vmem:[%s323 + $0x50] sm:$0xff]
        %v383 = vld [vmem:[%s323 + $0x58] sm:$0xff]
        %v384 = vld [vmem:[%s323 + $0x60] sm:$0xff]
        %v385 = vld [vmem:[%s323 + $0x68] sm:$0xff]
        %v386 = vld [vmem:[%s323 + $0x70] sm:$0xff]
        %v387 = vld [vmem:[%s323 + $0x78] sm:$0xff]
        %v388 = vld [vmem:[%s323 + $0x80] sm:$0xff]
        %v389 = vld [vmem:[%s323 + $0x88] sm:$0xff]
        %v390 = vld [vmem:[%s323 + $0x90] sm:$0xff]
        %v391 = vld [vmem:[%s323 + $0x98] sm:$0xff]
        %v392 = vld [vmem:[%s323 + $0xa0] sm:$0xff]
        %v393 = vld [vmem:[%s323 + $0xa8] sm:$0xff]
        %v394 = vld [vmem:[%s323 + $0xb0] sm:$0xff]
        %v395 = vld [vmem:[%s323 + $0xb8] sm:$0xff]
        %v396 = vld [vmem:[%s323 + $0xc0] sm:$0xff]
        %v397 = vld [vmem:[%s323 + $0xc8] sm:$0xff]
        %v398 = vld [vmem:[%s323 + $0xd0] sm:$0xff]
        %v399 = vld [vmem:[%s323 + $0xd8] sm:$0xff]
        %v400 = vld [vmem:[%s323 + $0xe0] sm:$0xff]
        %v401 = vld [vmem:[%s323 + $0xe8] sm:$0xff]
        %v402 = vld [vmem:[%s323 + $0xf0] sm:$0xff]
        %v403 = vld [vmem:[%s323 + $0xf8] sm:$0xff]
        %v404 = vld [vmem:[%s323 + $0x100] sm:$0xff]
        %v405 = vld [vmem:[%s323 + $0x108] sm:$0xff]
        %v406 = vld [vmem:[%s323 + $0x110] sm:$0xff]
        %v407 = vld [vmem:[%s323 + $0x118] sm:$0xff]
        %v408 = vld [vmem:[%s323 + $0x120] sm:$0xff]
        %v409 = vld [vmem:[%s323 + $0x128] sm:$0xff]
        %v410 = vld [vmem:[%s323 + $0x130] sm:$0xff]
        %v411 = vld [vmem:[%s323 + $0x138] sm:$0xff]
        %v412 = vld [vmem:[%s323 + $0x140] sm:$0xff]
        %v413 = vld [vmem:[%s323 + $0x148] sm:$0xff]
        %v414 = vld [vmem:[%s323 + $0x150] sm:$0xff]
        %v415 = vld [vmem:[%s323 + $0x158] sm:$0xff]
        %v416 = vld [vmem:[%s323 + $0x160] sm:$0xff]
        %v417 = vld [vmem:[%s323 + $0x168] sm:$0xff]
        %v418 = vld [vmem:[%s323 + $0x170] sm:$0xff]
        %v419 = vld [vmem:[%s323 + $0x178] sm:$0xff]
        %v420 = vld [vmem:[%s323 + $0x180] sm:$0xff]
        %v421 = vld [vmem:[%s323 + $0x188] sm:$0xff]
        %v422 = vld [vmem:[%s323 + $0x190] sm:$0xff]
        %v423 = vld [vmem:[%s323 + $0x198] sm:$0xff]
        %v424 = vld [vmem:[%s323 + $0x1a0] sm:$0xff]
        %v425 = vld [vmem:[%s323 + $0x1a8] sm:$0xff]
        %v426 = vld [vmem:[%s323 + $0x1b0] sm:$0xff]
        %v427 = vld [vmem:[%s323 + $0x1b8] sm:$0xff]
        %v428 = vld [vmem:[%s323 + $0x1c0] sm:$0xff]
        %v429 = vld [vmem:[%s323 + $0x1c8] sm:$0xff]
        %v430 = vld [vmem:[%s323 + $0x1d0] sm:$0xff]
        %v431 = vld [vmem:[%s323 + $0x1d8] sm:$0xff]
        %v432 = vld [vmem:[%s323 + $0x1e0] sm:$0xff]
        %v433 = vld [vmem:[%s323 + $0x1e8] sm:$0xff]
        %v434 = vld [vmem:[%s323 + $0x1f0] sm:$0xff]
        %v435 = vld [vmem:[%s323 + $0x1f8] sm:$0xff]
        %v436 = vld [vmem:[%s358] sm:$0xf]
        %v437 = vld [vmem:[%s358 + $0x4] sm:$0xf]
        %v438 = vld [vmem:[%s358 + $0x8] sm:$0xf]
        %v439 = vld [vmem:[%s358 + $0xc] sm:$0xf]
        %v440 = vld [vmem:[%s358 + $0x10] sm:$0xf]
        %v441 = vld [vmem:[%s358 + $0x14] sm:$0xf]
        %v442 = vld [vmem:[%s358 + $0x18] sm:$0xf]
        %v443 = vld [vmem:[%s358 + $0x1c] sm:$0xf]
        %v444 = vld [vmem:[%s358 + $0x20] sm:$0xf]
        %v445 = vld [vmem:[%s358 + $0x24] sm:$0xf]
        %v446 = vld [vmem:[%s358 + $0x28] sm:$0xf]
        %v447 = vld [vmem:[%s358 + $0x2c] sm:$0xf]
        %v448 = vld [vmem:[%s358 + $0x30] sm:$0xf]
        %v449 = vld [vmem:[%s358 + $0x34] sm:$0xf]
        %v450 = vld [vmem:[%s358 + $0x38] sm:$0xf]
        %v451 = vld [vmem:[%s358 + $0x3c] sm:$0xf]
        %v452 = vld [vmem:[%s358 + $0x40] sm:$0xf]
        %v453 = vld [vmem:[%s358 + $0x44] sm:$0xf]
        %v454 = vld [vmem:[%s358 + $0x48] sm:$0xf]
        %v455 = vld [vmem:[%s358 + $0x4c] sm:$0xf]
        %v456 = vld [vmem:[%s358 + $0x50] sm:$0xf]
        %v457 = vld [vmem:[%s358 + $0x54] sm:$0xf]
        %v458 = vld [vmem:[%s358 + $0x58] sm:$0xf]
        %v459 = vld [vmem:[%s358 + $0x5c] sm:$0xf]
        %v460 = vld [vmem:[%s358 + $0x60] sm:$0xf]
        %v461 = vld [vmem:[%s358 + $0x64] sm:$0xf]
        %v462 = vld [vmem:[%s358 + $0x68] sm:$0xf]
        %v463 = vld [vmem:[%s358 + $0x6c] sm:$0xf]
        %v464 = vld [vmem:[%s358 + $0x70] sm:$0xf]
        %v465 = vld [vmem:[%s358 + $0x74] sm:$0xf]
        %v466 = vld [vmem:[%s358 + $0x78] sm:$0xf]
        %v467 = vld [vmem:[%s358 + $0x7c] sm:$0xf]
        %v468 = vld [vmem:[%s358 + $0x80] sm:$0xf]
        %v469 = vld [vmem:[%s358 + $0x84] sm:$0xf]
        %v470 = vld [vmem:[%s358 + $0x88] sm:$0xf]
        %v471 = vld [vmem:[%s358 + $0x8c] sm:$0xf]
        %v472 = vld [vmem:[%s358 + $0x90] sm:$0xf]
        %v473 = vld [vmem:[%s358 + $0x94] sm:$0xf]
        %v474 = vld [vmem:[%s358 + $0x98] sm:$0xf]
        %v475 = vld [vmem:[%s358 + $0x9c] sm:$0xf]
        %v476 = vld [vmem:[%s358 + $0xa0] sm:$0xf]
        %v477 = vld [vmem:[%s358 + $0xa4] sm:$0xf]
        %v478 = vld [vmem:[%s358 + $0xa8] sm:$0xf]
        %v479 = vld [vmem:[%s358 + $0xac] sm:$0xf]
        %v480 = vld [vmem:[%s358 + $0xb0] sm:$0xf]
        %v481 = vld [vmem:[%s358 + $0xb4] sm:$0xf]
        %v482 = vld [vmem:[%s358 + $0xb8] sm:$0xf]
        %v483 = vld [vmem:[%s358 + $0xbc] sm:$0xf]
        %v484 = vld [vmem:[%s358 + $0xc0] sm:$0xf]
        %v485 = vld [vmem:[%s358 + $0xc4] sm:$0xf]
        %v550 = vunpack.c.l.b16 %v372
        %v551 = vunpack.c.h.b16 %v372
        %v552 = vunpack.c.l.b16 %v373
        %v553 = vunpack.c.h.b16 %v373
        %v554 = vunpack.c.l.b16 %v374
        %v555 = vunpack.c.h.b16 %v374
        %v556 = vunpack.c.l.b16 %v375
        %v557 = vunpack.c.h.b16 %v375
        %v558 = vunpack.c.l.b16 %v376
        %v559 = vunpack.c.h.b16 %v376
        %v560 = vunpack.c.l.b16 %v377
        %v561 = vunpack.c.h.b16 %v377
        %v562 = vunpack.c.l.b16 %v378
        %v563 = vunpack.c.h.b16 %v378
        %v564 = vunpack.c.l.b16 %v379
        %v565 = vunpack.c.h.b16 %v379
        %v566 = vunpack.c.l.b16 %v380
        %v567 = vunpack.c.h.b16 %v380
        %v568 = vunpack.c.l.b16 %v381
        %v569 = vunpack.c.h.b16 %v381
        %v570 = vunpack.c.l.b16 %v382
        %v571 = vunpack.c.h.b16 %v382
        %v572 = vunpack.c.l.b16 %v383
        %v573 = vunpack.c.h.b16 %v383
        %v574 = vunpack.c.l.b16 %v384
        %v575 = vunpack.c.h.b16 %v384
        %v576 = vunpack.c.l.b16 %v385
        %v577 = vunpack.c.h.b16 %v385
        %v578 = vunpack.c.l.b16 %v386
        %v579 = vunpack.c.h.b16 %v386
        %v580 = vunpack.c.l.b16 %v387
        %v581 = vunpack.c.h.b16 %v387
        %v582 = vunpack.c.l.b16 %v388
        %v583 = vunpack.c.h.b16 %v388
        %v584 = vunpack.c.l.b16 %v389
        %v585 = vunpack.c.h.b16 %v389
        %v586 = vunpack.c.l.b16 %v390
        %v587 = vunpack.c.h.b16 %v390
        %v588 = vunpack.c.l.b16 %v391
        %v589 = vunpack.c.h.b16 %v391
        %v590 = vunpack.c.l.b16 %v392
        %v591 = vunpack.c.h.b16 %v392
        %v592 = vunpack.c.l.b16 %v393
        %v593 = vunpack.c.h.b16 %v393
        %v594 = vunpack.c.l.b16 %v394
        %v595 = vunpack.c.h.b16 %v394
        %v596 = vunpack.c.l.b16 %v395
        %v597 = vunpack.c.h.b16 %v395
        %v598 = vunpack.c.l.b16 %v396
        %v599 = vunpack.c.h.b16 %v396
        %v600 = vunpack.c.l.b16 %v397
        %v601 = vunpack.c.h.b16 %v397
        %v602 = vunpack.c.l.b16 %v398
        %v603 = vunpack.c.h.b16 %v398
        %v604 = vunpack.c.l.b16 %v399
        %v605 = vunpack.c.h.b16 %v399
        %v606 = vunpack.c.l.b16 %v400
        %v607 = vunpack.c.h.b16 %v400
        %v608 = vunpack.c.l.b16 %v401
        %v609 = vunpack.c.h.b16 %v401
        %v610 = vunpack.c.l.b16 %v402
        %v611 = vunpack.c.h.b16 %v402
        %v612 = vunpack.c.l.b16 %v403
        %v613 = vunpack.c.h.b16 %v403
        %v614 = vunpack.c.l.b16 %v404
        %v615 = vunpack.c.h.b16 %v404
        %v616 = vunpack.c.l.b16 %v405
        %v617 = vunpack.c.h.b16 %v405
        %v618 = vunpack.c.l.b16 %v406
        %v619 = vunpack.c.h.b16 %v406
        %v620 = vunpack.c.l.b16 %v407
        %v621 = vunpack.c.h.b16 %v407
        %v622 = vunpack.c.l.b16 %v408
        %v623 = vunpack.c.h.b16 %v408
        %v624 = vunpack.c.l.b16 %v409
        %v625 = vunpack.c.h.b16 %v409
        %v626 = vunpack.c.l.b16 %v410
        %v627 = vunpack.c.h.b16 %v410
        %v628 = vunpack.c.l.b16 %v411
        %v629 = vunpack.c.h.b16 %v411
        %v630 = vunpack.c.l.b16 %v412
        %v631 = vunpack.c.h.b16 %v412
        %v632 = vunpack.c.l.b16 %v413
        %v633 = vunpack.c.h.b16 %v413
        %v634 = vunpack.c.l.b16 %v414
        %v635 = vunpack.c.h.b16 %v414
        %v636 = vunpack.c.l.b16 %v415
        %v637 = vunpack.c.h.b16 %v415
        %v638 = vunpack.c.l.b16 %v416
        %v639 = vunpack.c.h.b16 %v416
        %v640 = vunpack.c.l.b16 %v417
        %v641 = vunpack.c.h.b16 %v417
        %v642 = vunpack.c.l.b16 %v418
        %v643 = vunpack.c.h.b16 %v418
        %v644 = vunpack.c.l.b16 %v419
        %v645 = vunpack.c.h.b16 %v419
        %v646 = vunpack.c.l.b16 %v420
        %v647 = vunpack.c.h.b16 %v420
        %v648 = vunpack.c.l.b16 %v421
        %v649 = vunpack.c.h.b16 %v421
        %v650 = vunpack.c.l.b16 %v422
        %v651 = vunpack.c.h.b16 %v422
        %v652 = vunpack.c.l.b16 %v423
        %v653 = vunpack.c.h.b16 %v423
        %v654 = vunpack.c.l.b16 %v424
        %v655 = vunpack.c.h.b16 %v424
        %v656 = vunpack.c.l.b16 %v425
        %v657 = vunpack.c.h.b16 %v425
        %v658 = vunpack.c.l.b16 %v426
        %v659 = vunpack.c.h.b16 %v426
        %v660 = vunpack.c.l.b16 %v427
        %v661 = vunpack.c.h.b16 %v427
        %v662 = vunpack.c.l.b16 %v428
        %v663 = vunpack.c.h.b16 %v428
        %v664 = vunpack.c.l.b16 %v429
        %v665 = vunpack.c.h.b16 %v429
        %v666 = vunpack.c.l.b16 %v430
        %v667 = vunpack.c.h.b16 %v430
        %v668 = vunpack.c.l.b16 %v431
        %v669 = vunpack.c.h.b16 %v431
        %v670 = vunpack.c.l.b16 %v432
        %v671 = vunpack.c.h.b16 %v432
        %v672 = vunpack.c.l.b16 %v433
        %v673 = vunpack.c.h.b16 %v433
        %v674 = vunpack.c.l.b16 %v434
        %v675 = vunpack.c.h.b16 %v434
        %v676 = vunpack.c.l.b16 %v435
        %v677 = vunpack.c.h.b16 %v435
        %v678 = vpack.c.b16 %v554, %v550
        %v679 = vpack.c.b16 %v555, %v551
        %v680 = vpack.c.b16 %v556, %v552
        %v681 = vpack.c.b16 %v557, %v553
        %v682 = vpack.c.b16 %v562, %v558
        %v683 = vpack.c.b16 %v563, %v559
        %v684 = vpack.c.b16 %v564, %v560
        %v685 = vpack.c.b16 %v565, %v561
        %v686 = vpack.c.b16 %v570, %v566
        %v687 = vpack.c.b16 %v571, %v567
        %v688 = vpack.c.b16 %v572, %v568
        %v689 = vpack.c.b16 %v573, %v569
        %v690 = vpack.c.b16 %v578, %v574
        %v691 = vpack.c.b16 %v579, %v575
        %v692 = vpack.c.b16 %v580, %v576
        %v693 = vpack.c.b16 %v581, %v577
        %v694 = vpack.c.b16 %v586, %v582
        %v695 = vpack.c.b16 %v587, %v583
        %v696 = vpack.c.b16 %v588, %v584
        %v697 = vpack.c.b16 %v589, %v585
        %v698 = vpack.c.b16 %v594, %v590
        %v699 = vpack.c.b16 %v595, %v591
        %v700 = vpack.c.b16 %v596, %v592
        %v701 = vpack.c.b16 %v597, %v593
        %v702 = vpack.c.b16 %v602, %v598
        %v703 = vpack.c.b16 %v603, %v599
        %v704 = vpack.c.b16 %v604, %v600
        %v705 = vpack.c.b16 %v605, %v601
        %v706 = vpack.c.b16 %v610, %v606
        %v707 = vpack.c.b16 %v611, %v607
        %v708 = vpack.c.b16 %v612, %v608
        %v709 = vpack.c.b16 %v613, %v609
        %v710 = vpack.c.b16 %v618, %v614
        %v711 = vpack.c.b16 %v619, %v615
        %v712 = vpack.c.b16 %v620, %v616
        %v713 = vpack.c.b16 %v621, %v617
        %v714 = vpack.c.b16 %v626, %v622
        %v715 = vpack.c.b16 %v627, %v623
        %v716 = vpack.c.b16 %v628, %v624
        %v717 = vpack.c.b16 %v629, %v625
        %v718 = vpack.c.b16 %v634, %v630
        %v719 = vpack.c.b16 %v635, %v631
        %v720 = vpack.c.b16 %v636, %v632
        %v721 = vpack.c.b16 %v637, %v633
        %v722 = vpack.c.b16 %v642, %v638
        %v723 = vpack.c.b16 %v643, %v639
        %v724 = vpack.c.b16 %v644, %v640
        %v725 = vpack.c.b16 %v645, %v641
        %v726 = vpack.c.b16 %v650, %v646
        %v727 = vpack.c.b16 %v651, %v647
        %v728 = vpack.c.b16 %v652, %v648
        %v729 = vpack.c.b16 %v653, %v649
        %v730 = vpack.c.b16 %v658, %v654
        %v731 = vpack.c.b16 %v659, %v655
        %v732 = vpack.c.b16 %v660, %v656
        %v733 = vpack.c.b16 %v661, %v657
        %v734 = vpack.c.b16 %v666, %v662
        %v735 = vpack.c.b16 %v667, %v663
        %v736 = vpack.c.b16 %v668, %v664
        %v737 = vpack.c.b16 %v669, %v665
        %v738 = vpack.c.b16 %v674, %v670
        %v739 = vpack.c.b16 %v675, %v671
        %v740 = vpack.c.b16 %v676, %v672
        %v741 = vpack.c.b16 %v677, %v673
        %v840 = vunpack.c.l.b16 %v436
        %v841 = vunpack.c.l.b16 %v437
        %v842 = vunpack.c.l.b16 %v438
        %v843 = vunpack.c.l.b16 %v439
        %v844 = vunpack.c.l.b16 %v440
        %v845 = vunpack.c.l.b16 %v441
        %v846 = vunpack.c.l.b16 %v442
        %v847 = vunpack.c.l.b16 %v443
        %v848 = vunpack.c.l.b16 %v444
        %v849 = vunpack.c.l.b16 %v445
        %v850 = vunpack.c.l.b16 %v446
        %v851 = vunpack.c.l.b16 %v447
        %v852 = vunpack.c.l.b16 %v448
        %v853 = vunpack.c.l.b16 %v449
        %v854 = vunpack.c.l.b16 %v450
        %v855 = vunpack.c.l.b16 %v451
        %v856 = vunpack.c.l.b16 %v452
        %v857 = vunpack.c.l.b16 %v453
        %v858 = vunpack.c.l.b16 %v454
        %v859 = vunpack.c.l.b16 %v455
        %v860 = vunpack.c.l.b16 %v456
        %v861 = vunpack.c.l.b16 %v457
        %v862 = vunpack.c.l.b16 %v458
        %v863 = vunpack.c.l.b16 %v459
        %v864 = vunpack.c.l.b16 %v460
        %v865 = vunpack.c.l.b16 %v461
        %v866 = vunpack.c.l.b16 %v462
        %v867 = vunpack.c.l.b16 %v463
        %v868 = vunpack.c.l.b16 %v464
        %v869 = vunpack.c.l.b16 %v465
        %v870 = vunpack.c.l.b16 %v466
        %v871 = vunpack.c.l.b16 %v467
        %v872 = vunpack.c.l.b16 %v468
        %v873 = vunpack.c.l.b16 %v469
        %v874 = vunpack.c.l.b16 %v470
        %v875 = vunpack.c.l.b16 %v471
        %v876 = vunpack.c.l.b16 %v472
        %v877 = vunpack.c.l.b16 %v473
        %v878 = vunpack.c.l.b16 %v474
        %v879 = vunpack.c.l.b16 %v475
        %v880 = vunpack.c.l.b16 %v476
        %v881 = vunpack.c.l.b16 %v477
        %v882 = vunpack.c.l.b16 %v478
        %v883 = vunpack.c.l.b16 %v479
        %v884 = vunpack.c.l.b16 %v480
        %v885 = vunpack.c.l.b16 %v481
        %v886 = vunpack.c.l.b16 %v482
        %v887 = vunpack.c.l.b16 %v483
        %v888 = vunpack.c.l.b16 %v484
        %v889 = vunpack.c.l.b16 %v485
        %v890 = vpack.c.b16 %v841, %v840
        %v891 = vpack.c.b16 %v843, %v842
        %v892 = vpack.c.b16 %v845, %v844
        %v893 = vpack.c.b16 %v847, %v846
        %v894 = vpack.c.b16 %v849, %v848
        %v895 = vpack.c.b16 %v851, %v850
        %v896 = vpack.c.b16 %v853, %v852
        %v897 = vpack.c.b16 %v855, %v854
        %v898 = vpack.c.b16 %v857, %v856
        %v899 = vpack.c.b16 %v859, %v858
        %v900 = vpack.c.b16 %v861, %v860
        %v901 = vpack.c.b16 %v863, %v862
        %v902 = vpack.c.b16 %v865, %v864
        %v903 = vpack.c.b16 %v867, %v866
        %v904 = vpack.c.b16 %v869, %v868
        %v905 = vpack.c.b16 %v871, %v870
        %v906 = vpack.c.b16 %v873, %v872
        %v907 = vpack.c.b16 %v875, %v874
        %v908 = vpack.c.b16 %v877, %v876
        %v909 = vpack.c.b16 %v879, %v878
        %v910 = vpack.c.b16 %v881, %v880
        %v911 = vpack.c.b16 %v883, %v882
        %v912 = vpack.c.b16 %v885, %v884
        %v913 = vpack.c.b16 %v887, %v886
        %v914 = vpack.c.b16 %v889, %v888
        %vm940 = vcmask 130048
        %v942 = vsel %vm940, %v681, 0
        %v945 = vsel %vm940, %v685, 0
        %v948 = vsel %vm940, %v689, 0
        %v951 = vsel %vm940, %v693, 0
        %v954 = vsel %vm940, %v697, 0
        %v957 = vsel %vm940, %v701, 0
        %v960 = vsel %vm940, %v705, 0
        %v963 = vsel %vm940, %v709, 0
        %v966 = vsel %vm940, %v713, 0
        %v969 = vsel %vm940, %v717, 0
        %v972 = vsel %vm940, %v721, 0
        %v975 = vsel %vm940, %v725, 0
        %v978 = vsel %vm940, %v729, 0
        %v981 = vsel %vm940, %v733, 0
        %v984 = vsel %vm940, %v737, 0
        %v987 = vsel %vm940, %v741, 0
        %989 = vmatprep.subr.bf16.mxu0 0
        %990 = vmatpush1.bf16.msra.mxu0 %v890
        %991 = vmatprep.subr.bf16.mxu0 0
        %992 = vmatpush1.bf16.msra.mxu0 %v891
        %993 = vmatprep.subr.bf16.mxu0 0
        %994 = vmatpush1.bf16.msra.mxu0 %v892
        %995 = vmatprep.subr.bf16.mxu0 0
        %996 = vmatpush1.bf16.msra.mxu0 %v893
        %997 = vmatprep.subr.bf16.mxu0 0
        %998 = vmatpush1.bf16.msra.mxu0 %v894
        %999 = vmatprep.subr.bf16.mxu0 0
        %1000 = vmatpush1.bf16.msra.mxu0 %v895
        %1001 = vmatprep.subr.bf16.mxu0 0
        %1002 = vmatpush1.bf16.msra.mxu0 %v896
        %1003 = vmatprep.subr.bf16.mxu0 0
        %1004 = vmatpush1.bf16.msra.mxu0 %v897
        %1005 = vmatprep.subr.bf16.mxu0 0
        %1006 = vmatpush1.bf16.msra.mxu0 %v898
        %1007 = vmatprep.subr.bf16.mxu0 0
        %1008 = vmatpush1.bf16.msra.mxu0 %v899
        %1009 = vmatprep.subr.bf16.mxu0 0
        %1010 = vmatpush1.bf16.msra.mxu0 %v900
        %1011 = vmatprep.subr.bf16.mxu0 0
        %1012 = vmatpush1.bf16.msra.mxu0 %v901
        %1013 = vmatprep.subr.bf16.mxu0 0
        %1014 = vmatpush1.bf16.msra.mxu0 %v902
        %1015 = vmatprep.subr.bf16.mxu0 0
        %1016 = vmatpush1.bf16.msra.mxu0 %v903
        %1017 = vmatprep.subr.bf16.mxu0 0
        %1018 = vmatpush1.bf16.msra.mxu0 %v904
        %1019 = vmatprep.subr.bf16.mxu0 0
        %1020 = vmatpush1.bf16.msra.mxu0 %v905
        %1021 = vmatprep.mubr.bf16.mxu0 %v679
        %1022 = vmatmul.mubr.bf16.gmra.mrb[0].mxu0 %v678
        %v1023 = vpop.f32.mrb[0].mxu0
        %v1024 = vadd.f32 0.0, %v1023
        %v1025 = vpop.f32.mrb[0].mxu0
        %v1026 = vpop.f32.mrb[0].mxu0
        %v1027 = vadd.f32 0.0, %v1026
        %v1028 = vpop.f32.mrb[0].mxu0
        %1029 = vmatprep.mubr.bf16.mxu0 %v683
        %1030 = vmatmul.mubr.bf16.gmra.mrb[0].mxu0 %v682
        %v1031 = vpop.f32.mrb[0].mxu0
        %v1032 = vadd.f32 0.0, %v1031
        %v1033 = vpop.f32.mrb[0].mxu0
        %v1034 = vpop.f32.mrb[0].mxu0
        %v1035 = vadd.f32 0.0, %v1034
        %v1036 = vpop.f32.mrb[0].mxu0
        %1037 = vmatprep.mubr.bf16.mxu0 %v687
        %1038 = vmatmul.mubr.bf16.gmra.mrb[0].mxu0 %v686
        %v1039 = vpop.f32.mrb[0].mxu0
        %v1040 = vadd.f32 0.0, %v1039
        %v1041 = vpop.f32.mrb[0].mxu0
        %v1042 = vpop.f32.mrb[0].mxu0
        %v1043 = vadd.f32 0.0, %v1042
        %v1044 = vpop.f32.mrb[0].mxu0
        %1045 = vmatprep.mubr.bf16.mxu0 %v691
        %1046 = vmatmul.mubr.bf16.gmra.mrb[0].mxu0 %v690
        %v1047 = vpop.f32.mrb[0].mxu0
        %v1048 = vadd.f32 0.0, %v1047
        %v1049 = vpop.f32.mrb[0].mxu0
        %v1050 = vpop.f32.mrb[0].mxu0
        %v1051 = vadd.f32 0.0, %v1050
        %v1052 = vpop.f32.mrb[0].mxu0
        %1053 = vmatprep.mubr.bf16.mxu0 %v695
        %1054 = vmatmul.mubr.bf16.gmra.mrb[0].mxu0 %v694
        %v1055 = vpop.f32.mrb[0].mxu0
        %v1056 = vadd.f32 0.0, %v1055
        %v1057 = vpop.f32.mrb[0].mxu0
        %v1058 = vpop.f32.mrb[0].mxu0
        %v1059 = vadd.f32 0.0, %v1058
        %v1060 = vpop.f32.mrb[0].mxu0
        %1061 = vmatprep.mubr.bf16.mxu0 %v699
        %1062 = vmatmul.mubr.bf16.gmra.mrb[0].mxu0 %v698
        %v1063 = vpop.f32.mrb[0].mxu0
        %v1064 = vadd.f32 0.0, %v1063
        %v1065 = vpop.f32.mrb[0].mxu0
        %v1066 = vpop.f32.mrb[0].mxu0
        %v1067 = vadd.f32 0.0, %v1066
        %v1068 = vpop.f32.mrb[0].mxu0
        %1069 = vmatprep.mubr.bf16.mxu0 %v703
        %1070 = vmatmul.mubr.bf16.gmra.mrb[0].mxu0 %v702
        %v1071 = vpop.f32.mrb[0].mxu0
        %v1072 = vadd.f32 0.0, %v1071
        %v1073 = vpop.f32.mrb[0].mxu0
        %v1074 = vpop.f32.mrb[0].mxu0
        %v1075 = vadd.f32 0.0, %v1074
        %v1076 = vpop.f32.mrb[0].mxu0
        %1077 = vmatprep.mubr.bf16.mxu0 %v707
        %1078 = vmatmul.mubr.bf16.gmra.mrb[0].mxu0 %v706
        %v1079 = vpop.f32.mrb[0].mxu0
        %v1080 = vadd.f32 0.0, %v1079
        %v1081 = vpop.f32.mrb[0].mxu0
        %v1082 = vpop.f32.mrb[0].mxu0
        %v1083 = vadd.f32 0.0, %v1082
        %v1084 = vpop.f32.mrb[0].mxu0
        %1085 = vmatprep.mubr.bf16.mxu0 %v711
        %1086 = vmatmul.mubr.bf16.gmra.mrb[0].mxu0 %v710
        %v1087 = vpop.f32.mrb[0].mxu0
        %v1088 = vadd.f32 0.0, %v1087
        %v1089 = vpop.f32.mrb[0].mxu0
        %v1090 = vpop.f32.mrb[0].mxu0
        %v1091 = vadd.f32 0.0, %v1090
        %v1092 = vpop.f32.mrb[0].mxu0
        %1093 = vmatprep.mubr.bf16.mxu0 %v715
        %1094 = vmatmul.mubr.bf16.gmra.mrb[0].mxu0 %v714
        %v1095 = vpop.f32.mrb[0].mxu0
        %v1096 = vadd.f32 0.0, %v1095
        %v1097 = vpop.f32.mrb[0].mxu0
        %v1098 = vpop.f32.mrb[0].mxu0
        %v1099 = vadd.f32 0.0, %v1098
        %v1100 = vpop.f32.mrb[0].mxu0
        %1101 = vmatprep.mubr.bf16.mxu0 %v719
        %1102 = vmatmul.mubr.bf16.gmra.mrb[0].mxu0 %v718
        %v1103 = vpop.f32.mrb[0].mxu0
        %v1104 = vadd.f32 0.0, %v1103
        %v1105 = vpop.f32.mrb[0].mxu0
        %v1106 = vpop.f32.mrb[0].mxu0
        %v1107 = vadd.f32 0.0, %v1106
        %v1108 = vpop.f32.mrb[0].mxu0
        %1109 = vmatprep.mubr.bf16.mxu0 %v723
        %1110 = vmatmul.mubr.bf16.gmra.mrb[0].mxu0 %v722
        %v1111 = vpop.f32.mrb[0].mxu0
        %v1112 = vadd.f32 0.0, %v1111
        %v1113 = vpop.f32.mrb[0].mxu0
        %v1114 = vpop.f32.mrb[0].mxu0
        %v1115 = vadd.f32 0.0, %v1114
        %v1116 = vpop.f32.mrb[0].mxu0
        %1117 = vmatprep.mubr.bf16.mxu0 %v727
        %1118 = vmatmul.mubr.bf16.gmra.mrb[0].mxu0 %v726
        %v1119 = vpop.f32.mrb[0].mxu0
        %v1120 = vadd.f32 0.0, %v1119
        %v1121 = vpop.f32.mrb[0].mxu0
        %v1122 = vpop.f32.mrb[0].mxu0
        %v1123 = vadd.f32 0.0, %v1122
        %v1124 = vpop.f32.mrb[0].mxu0
        %1125 = vmatprep.mubr.bf16.mxu0 %v731
        %1126 = vmatmul.mubr.bf16.gmra.mrb[0].mxu0 %v730
        %v1127 = vpop.f32.mrb[0].mxu0
        %v1128 = vadd.f32 0.0, %v1127
        %v1129 = vpop.f32.mrb[0].mxu0
        %v1130 = vpop.f32.mrb[0].mxu0
        %v1131 = vadd.f32 0.0, %v1130
        %v1132 = vpop.f32.mrb[0].mxu0
        %1133 = vmatprep.mubr.bf16.mxu0 %v735
        %1134 = vmatmul.mubr.bf16.gmra.mrb[0].mxu0 %v734
        %v1135 = vpop.f32.mrb[0].mxu0
        %v1136 = vadd.f32 0.0, %v1135
        %v1137 = vpop.f32.mrb[0].mxu0
        %v1138 = vpop.f32.mrb[0].mxu0
        %v1139 = vadd.f32 0.0, %v1138
        %v1140 = vpop.f32.mrb[0].mxu0
        %1141 = vmatprep.mubr.bf16.mxu0 %v739
        %1142 = vmatmul.mubr.bf16.gmra.mrb[0].mxu0 %v738
        %v1143 = vpop.f32.mrb[0].mxu0
        %v1144 = vadd.f32 0.0, %v1143
        %v1145 = vpop.f32.mrb[0].mxu0
        %v1146 = vpop.f32.mrb[0].mxu0
        %v1147 = vadd.f32 0.0, %v1146
        %v1148 = vpop.f32.mrb[0].mxu0
        %1149 = vdwg.mxu0
        %1150 = vmatprep.subr.bf16.mxu0 0
        %1151 = vmatpush1.bf16.msra.mxu0 %v906
        %1152 = vmatprep.subr.bf16.mxu0 0
        %1153 = vmatpush1.bf16.msra.mxu0 %v907
        %1154 = vmatprep.subr.bf16.mxu0 0
        %1155 = vmatpush1.bf16.msra.mxu0 %v908
        %1156 = vmatprep.subr.bf16.mxu0 0
        %1157 = vmatpush1.bf16.msra.mxu0 %v909
        %1158 = vmatprep.subr.bf16.mxu0 0
        %1159 = vmatpush1.bf16.msra.mxu0 %v910
        %1160 = vmatprep.subr.bf16.mxu0 0
        %1161 = vmatpush1.bf16.msra.mxu0 %v911
        %1162 = vmatprep.subr.bf16.mxu0 0
        %1163 = vmatpush1.bf16.msra.mxu0 %v912
        %1164 = vmatprep.subr.bf16.mxu0 0
        %1165 = vmatpush1.bf16.msra.mxu0 %v913
        %1166 = vmatprep.subr.bf16.mxu0 0
        %1167 = vmatpush1.bf16.msra.mxu0 %v914
        %1168 = vmatprep.subr.bf16.mxu0 0
        %1169 = vmatpush1.bf16.msra.mxu0 0
        %1170 = vmatprep.subr.bf16.mxu0 0
        %1171 = vmatpush1.bf16.msra.mxu0 0
        %1172 = vmatprep.subr.bf16.mxu0 0
        %1173 = vmatpush1.bf16.msra.mxu0 0
        %1174 = vmatprep.subr.bf16.mxu0 0
        %1175 = vmatpush1.bf16.msra.mxu0 0
        %1176 = vmatprep.subr.bf16.mxu0 0
        %1177 = vmatpush1.bf16.msra.mxu0 0
        %1178 = vmatprep.subr.bf16.mxu0 0
        %1179 = vmatpush1.bf16.msra.mxu0 0
        %1180 = vmatprep.subr.bf16.mxu0 0
        %1181 = vmatpush1.bf16.msra.mxu0 0
        %1182 = vmatprep.mubr.bf16.mxu0 %v942
        %1183 = vmatmul.mubr.bf16.gmra.mrb[0].mxu0 %v680
        %v1184 = vpop.f32.mrb[0].mxu0
        %v1185 = vadd.f32 %v1024, %v1184
        %v1186 = vpop.f32.mrb[0].mxu0
        %v1187 = vpop.f32.mrb[0].mxu0
        %v1188 = vadd.f32 %v1027, %v1187
        %v1189 = vpop.f32.mrb[0].mxu0
        %1190 = vmatprep.mubr.bf16.mxu0 %v945
        %1191 = vmatmul.mubr.bf16.gmra.mrb[0].mxu0 %v684
        %v1192 = vpop.f32.mrb[0].mxu0
        %v1193 = vadd.f32 %v1032, %v1192
        %v1194 = vpop.f32.mrb[0].mxu0
        %v1195 = vpop.f32.mrb[0].mxu0
        %v1196 = vadd.f32 %v1035, %v1195
        %v1197 = vpop.f32.mrb[0].mxu0
        %1198 = vmatprep.mubr.bf16.mxu0 %v948
        %1199 = vmatmul.mubr.bf16.gmra.mrb[0].mxu0 %v688
        %v1200 = vpop.f32.mrb[0].mxu0
        %v1201 = vadd.f32 %v1040, %v1200
        %v1202 = vpop.f32.mrb[0].mxu0
        %v1203 = vpop.f32.mrb[0].mxu0
        %v1204 = vadd.f32 %v1043, %v1203
        %v1205 = vpop.f32.mrb[0].mxu0
        %1206 = vmatprep.mubr.bf16.mxu0 %v951
        %1207 = vmatmul.mubr.bf16.gmra.mrb[0].mxu0 %v692
        %v1208 = vpop.f32.mrb[0].mxu0
        %v1209 = vadd.f32 %v1048, %v1208
        %v1210 = vpop.f32.mrb[0].mxu0
        %v1211 = vpop.f32.mrb[0].mxu0
        %v1212 = vadd.f32 %v1051, %v1211
        %v1213 = vpop.f32.mrb[0].mxu0
        %1214 = vmatprep.mubr.bf16.mxu0 %v954
        %1215 = vmatmul.mubr.bf16.gmra.mrb[0].mxu0 %v696
        %v1216 = vpop.f32.mrb[0].mxu0
        %v1217 = vadd.f32 %v1056, %v1216
        %v1218 = vpop.f32.mrb[0].mxu0
        %v1219 = vpop.f32.mrb[0].mxu0
        %v1220 = vadd.f32 %v1059, %v1219
        %v1221 = vpop.f32.mrb[0].mxu0
        %1222 = vmatprep.mubr.bf16.mxu0 %v957
        %1223 = vmatmul.mubr.bf16.gmra.mrb[0].mxu0 %v700
        %v1224 = vpop.f32.mrb[0].mxu0
        %v1225 = vadd.f32 %v1064, %v1224
        %v1226 = vpop.f32.mrb[0].mxu0
        %v1227 = vpop.f32.mrb[0].mxu0
        %v1228 = vadd.f32 %v1067, %v1227
        %v1229 = vpop.f32.mrb[0].mxu0
        %1230 = vmatprep.mubr.bf16.mxu0 %v960
        %1231 = vmatmul.mubr.bf16.gmra.mrb[0].mxu0 %v704
        %v1232 = vpop.f32.mrb[0].mxu0
        %v1233 = vadd.f32 %v1072, %v1232
        %v1234 = vpop.f32.mrb[0].mxu0
        %v1235 = vpop.f32.mrb[0].mxu0
        %v1236 = vadd.f32 %v1075, %v1235
        %v1237 = vpop.f32.mrb[0].mxu0
        %1238 = vmatprep.mubr.bf16.mxu0 %v963
        %1239 = vmatmul.mubr.bf16.gmra.mrb[0].mxu0 %v708
        %v1240 = vpop.f32.mrb[0].mxu0
        %v1241 = vadd.f32 %v1080, %v1240
        %v1242 = vpop.f32.mrb[0].mxu0
        %v1243 = vpop.f32.mrb[0].mxu0
        %v1244 = vadd.f32 %v1083, %v1243
        %v1245 = vpop.f32.mrb[0].mxu0
        %1246 = vmatprep.mubr.bf16.mxu0 %v966
        %1247 = vmatmul.mubr.bf16.gmra.mrb[0].mxu0 %v712
        %v1248 = vpop.f32.mrb[0].mxu0
        %v1249 = vadd.f32 %v1088, %v1248
        %v1250 = vpop.f32.mrb[0].mxu0
        %v1251 = vpop.f32.mrb[0].mxu0
        %v1252 = vadd.f32 %v1091, %v1251
        %v1253 = vpop.f32.mrb[0].mxu0
        %1254 = vmatprep.mubr.bf16.mxu0 %v969
        %1255 = vmatmul.mubr.bf16.gmra.mrb[0].mxu0 %v716
        %v1256 = vpop.f32.mrb[0].mxu0
        %v1257 = vadd.f32 %v1096, %v1256
        %v1258 = vpop.f32.mrb[0].mxu0
        %v1259 = vpop.f32.mrb[0].mxu0
        %v1260 = vadd.f32 %v1099, %v1259
        %v1261 = vpop.f32.mrb[0].mxu0
        %1262 = vmatprep.mubr.bf16.mxu0 %v972
        %1263 = vmatmul.mubr.bf16.gmra.mrb[0].mxu0 %v720
        %v1264 = vpop.f32.mrb[0].mxu0
        %v1265 = vadd.f32 %v1104, %v1264
        %v1266 = vpop.f32.mrb[0].mxu0
        %v1267 = vpop.f32.mrb[0].mxu0
        %v1268 = vadd.f32 %v1107, %v1267
        %v1269 = vpop.f32.mrb[0].mxu0
        %1270 = vmatprep.mubr.bf16.mxu0 %v975
        %1271 = vmatmul.mubr.bf16.gmra.mrb[0].mxu0 %v724
        %v1272 = vpop.f32.mrb[0].mxu0
        %v1273 = vadd.f32 %v1112, %v1272
        %v1274 = vpop.f32.mrb[0].mxu0
        %v1275 = vpop.f32.mrb[0].mxu0
        %v1276 = vadd.f32 %v1115, %v1275
        %v1277 = vpop.f32.mrb[0].mxu0
        %1278 = vmatprep.mubr.bf16.mxu0 %v978
        %1279 = vmatmul.mubr.bf16.gmra.mrb[0].mxu0 %v728
        %v1280 = vpop.f32.mrb[0].mxu0
        %v1281 = vadd.f32 %v1120, %v1280
        %v1282 = vpop.f32.mrb[0].mxu0
        %v1283 = vpop.f32.mrb[0].mxu0
        %v1284 = vadd.f32 %v1123, %v1283
        %v1285 = vpop.f32.mrb[0].mxu0
        %1286 = vmatprep.mubr.bf16.mxu0 %v981
        %1287 = vmatmul.mubr.bf16.gmra.mrb[0].mxu0 %v732
        %v1288 = vpop.f32.mrb[0].mxu0
        %v1289 = vadd.f32 %v1128, %v1288
        %v1290 = vpop.f32.mrb[0].mxu0
        %v1291 = vpop.f32.mrb[0].mxu0
        %v1292 = vadd.f32 %v1131, %v1291
        %v1293 = vpop.f32.mrb[0].mxu0
        %1294 = vmatprep.mubr.bf16.mxu0 %v984
        %1295 = vmatmul.mubr.bf16.gmra.mrb[0].mxu0 %v736
        %v1296 = vpop.f32.mrb[0].mxu0
        %v1297 = vadd.f32 %v1136, %v1296
        %v1298 = vpop.f32.mrb[0].mxu0
        %v1299 = vpop.f32.mrb[0].mxu0
        %v1300 = vadd.f32 %v1139, %v1299
        %v1301 = vpop.f32.mrb[0].mxu0
        %1302 = vmatprep.mubr.bf16.mxu0 %v987
        %1303 = vmatmul.mubr.bf16.gmra.mrb[0].mxu0 %v740
        %v1304 = vpop.f32.mrb[0].mxu0
        %v1305 = vadd.f32 %v1144, %v1304
        %v1306 = vpop.f32.mrb[0].mxu0
        %v1307 = vpop.f32.mrb[0].mxu0
        %v1308 = vadd.f32 %v1147, %v1307
        %v1309 = vpop.f32.mrb[0].mxu0
        %1310 = vdwg.mxu0
        %v1311 = vmax.f32 %v1185, %v1217
        %v1312 = vmax.f32 %v1188, %v1220
        %v1313 = vmax.f32 %v1193, %v1225
        %v1314 = vmax.f32 %v1196, %v1228
        %v1315 = vmax.f32 %v1201, %v1233
        %v1316 = vmax.f32 %v1204, %v1236
        %v1317 = vmax.f32 %v1209, %v1241
        %v1318 = vmax.f32 %v1212, %v1244
        %v1319 = vmax.f32 %v1311, %v1249
        %v1320 = vmax.f32 %v1312, %v1252
        %v1321 = vmax.f32 %v1313, %v1257
        %v1322 = vmax.f32 %v1314, %v1260
        %v1323 = vmax.f32 %v1315, %v1265
        %v1324 = vmax.f32 %v1316, %v1268
        %v1325 = vmax.f32 %v1317, %v1273
        %v1326 = vmax.f32 %v1318, %v1276
        %v1327 = vmax.f32 %v1319, %v1281
        %v1328 = vmax.f32 %v1320, %v1284
        %v1329 = vmax.f32 %v1321, %v1289
        %v1330 = vmax.f32 %v1322, %v1292
        %v1331 = vmax.f32 %v1323, %v1297
        %v1332 = vmax.f32 %v1324, %v1300
        %v1333 = vmax.f32 %v1325, %v1305
        %v1334 = vmax.f32 %v1326, %v1308
        %v1335 = vld [vmem:[%s361] sm:$0x1]
        %v1337 = vlaneseq
        %v1338 = vshrl.u32 %v1337, 7
        %v1339 = vsub.s32 0, %v1338
        %v1340 = vrot.slane %v1335, %v1339
        %v1342 = vadd.f32 %v1327, %v1340
        %v1343 = vadd.f32 %v1328, %v1340
        %v1344 = vadd.f32 %v1329, %v1340
        %v1345 = vadd.f32 %v1330, %v1340
        %v1346 = vadd.f32 %v1331, %v1340
        %v1347 = vadd.f32 %v1332, %v1340
        %v1348 = vadd.f32 %v1333, %v1340
        %v1349 = vadd.f32 %v1334, %v1340
        %v1350 = vmax.f32 %v1342, 0.0
        %v1351 = vmax.f32 %v1343, 0.0
        %v1352 = vmax.f32 %v1344, 0.0
        %v1353 = vmax.f32 %v1345, 0.0
        %v1354 = vmax.f32 %v1346, 0.0
        %v1355 = vmax.f32 %v1347, 0.0
        %v1356 = vmax.f32 %v1348, 0.0
        %v1357 = vmax.f32 %v1349, 0.0
        %1358 = vst [vmem:[%s369] sm:$0xff] %v1350
        %1359 = vst [vmem:[%s369 + $0x8] sm:$0xff] %v1351
        %1360 = vst [vmem:[%s369 + $0x10] sm:$0xff] %v1352
        %1361 = vst [vmem:[%s369 + $0x18] sm:$0xff] %v1353
        %1362 = vst [vmem:[%s369 + $0x20] sm:$0xff] %v1354
        %1363 = vst [vmem:[%s369 + $0x28] sm:$0xff] %v1355
        %1364 = vst [vmem:[%s369 + $0x30] sm:$0xff] %v1356
        %1365 = vst [vmem:[%s369 + $0x38] sm:$0xff] %v1357
        %s1366 = smul.u32 8, %s18
        %p1367 = scmp.lt.s32.totalorder %s1366, 15
        %s1368 = scalar_select %p1367, %s1366, 15
        %p1369 = scmp.lt.s32.totalorder %s19, 0
        %s1370 = scalar_select %p1369, %s19, 0
        %s1371 = sadd.s32 %s1370, %s1368
        %s1372 = smul.addr %s1371, 8
        %s1373 = scalar_lea.vmem %s3, %s1372
        // Predicated region
        $region56: #{cnn_forward.4} parent=50 // pred_check
          %p1374 = pneg %p124
        $region57: #{cnn_forward.4} parent=50 // pred_check_branch
          %1376 = sbr.rel (%p1374) target = $region59
        $region58: #{cnn_forward.4} parent=50 // pred_region
          %s1377 = smul.u32 8, %s18
        $region59: #{cnn_forward.4} parent=50 // pred_fallthru
          _
      $region51: #{cnn_forward.4} parent=5 // pred_fallthru
        _
      %p1378 = scmp.le.s32.totalorder 2, %s9
      // Predicated region
      $region60: #{cnn_forward.4} parent=5 // pred_check
        %p1379 = pneg %p1378
      $region61: #{cnn_forward.4} parent=5 // pred_check_branch
        %1381 = sbr.rel (%p1379) target = $region63
      $region62: #{cnn_forward.4} parent=5 // pred_region
        %s1382 = ssub.s32 %s9, 2
        // Predicated region
        $region64: #{cnn_forward.4} parent=62 // pred_check
          %p1383 = pneg %p130
        $region65: #{cnn_forward.4} parent=62 // pred_check_branch
          %1385 = sbr.rel (%p1383) target = $region67
        $region66: #{cnn_forward.4} parent=62 // pred_region
          %s1386 = smul.u32 8, %s20
          %p1387 = scmp.lt.s32.totalorder %s1386, 15
          %s1388 = scalar_select %p1387, %s1386, 15
          %p1389 = scmp.lt.s32.totalorder %s21, 0
          %s1390 = scalar_select %p1389, %s21, 0
          %s1391 = sadd.s32 %s1390, %s1388
          %s1392 = smul.addr %s1391, 8
          %s1393 = scalar_lea.vmem %s3, %s1392
        $region67: #{cnn_forward.4} parent=62 // pred_fallthru
          _
      $region63: #{cnn_forward.4} parent=5 // pred_fallthru
        _
    $region6: #{cnn_forward.4} parent=1 // loop_footer
      %s13 = sadd.s32 1, %s9
    $region7: #{cnn_forward.4} parent=1 // loop_footer_branch
      %8 = sbr.rel target = $region3
    $region8: #{cnn_forward.4} parent=1 // loop_exit
      _

// kernel: cnn_forward.5
$region0: #{cnn_forward.5}
  #allocation0 [shape = 'u32[]', space=smem, size = 0x4, offset = 0x4, fixed_abs, tag = 'smem constant byte address 0x4 - core index']
  #allocation1 [shape = 'u32[144,128]{1,0:T(1,128)}', space=vmem, size = 0x12000, scoped, tag = 'internal scratch']
  %s0 = inlined_call_operand.vmem [shape: bf16[1,16,1568], index: 0, kind: input, shape index: {}]
  %s1 = inlined_call_operand.vmem [shape: bf16[1568,128], index: 1, kind: input, shape index: {}]
  %s2 = inlined_call_operand.vmem [shape: f32[1,128], index: 2, kind: input, shape index: {}]
  %s3 = inlined_call_operand.vmem [shape: f32[16,128], index: 3, kind: output, shape index: {}]
  %s4 = sld [smem:[#allocation0]]
  $region22: #{cnn_forward.5} parent=0
    _
  %s6 = ssub.s32 1, %s4
  %s7 = scalar_select 0, %s6, %s4
  // Predicated region
  $region2: #{cnn_forward.5} parent=0 // pred_check
    _
  $region3: #{cnn_forward.5} parent=0 // pred_check_branch
    %9 = sbr.rel (0) target = $region5
  $region4: #{cnn_forward.5} parent=0 // pred_region
    _
  $region5: #{cnn_forward.5} parent=0 // pred_fallthru
    _
  // Predicated region
  $region6: #{cnn_forward.5} parent=0 // pred_check
    _
  $region7: #{cnn_forward.5} parent=0 // pred_check_branch
    %11 = sbr.rel (0) target = $region9
  $region8: #{cnn_forward.5} parent=0 // pred_region
    _
  $region9: #{cnn_forward.5} parent=0 // pred_fallthru
    _
  // Predicated region
  $region10: #{cnn_forward.5} parent=0 // pred_check
    _
  $region11: #{cnn_forward.5} parent=0 // pred_check_branch
    %13 = sbr.rel (0) target = $region13
  $region12: #{cnn_forward.5} parent=0 // pred_region
    _
  $region13: #{cnn_forward.5} parent=0 // pred_fallthru
    _
  %v15 = vld [vmem:[%s0] sm:$0xff]
  %v16 = vld [vmem:[%s0 + $0x8] sm:$0xff]
  %v17 = vld [vmem:[%s0 + $0x10] sm:$0xff]
  %v18 = vld [vmem:[%s0 + $0x18] sm:$0xff]
  %v19 = vld [vmem:[%s0 + $0x20] sm:$0xff]
  %v20 = vld [vmem:[%s0 + $0x28] sm:$0xff]
  %v21 = vld [vmem:[%s0 + $0x30] sm:$0xf]
  %v22 = vld [vmem:[%s0 + $0x34] sm:$0xff]
  %v23 = vld [vmem:[%s0 + $0x3c] sm:$0xff]
  %v24 = vld [vmem:[%s0 + $0x44] sm:$0xff]
  %v25 = vld [vmem:[%s0 + $0x4c] sm:$0xff]
  %v26 = vld [vmem:[%s0 + $0x54] sm:$0xff]
  %v27 = vld [vmem:[%s0 + $0x5c] sm:$0xff]
  %v28 = vld [vmem:[%s0 + $0x64] sm:$0xf]
  %v29 = vld [vmem:[%s1] sm:$0xf]
  %v30 = vld [vmem:[%s1 + $0x4] sm:$0xf]
  %v31 = vld [vmem:[%s1 + $0x8] sm:$0xf]
  %v32 = vld [vmem:[%s1 + $0xc] sm:$0xf]
  %v33 = vld [vmem:[%s1 + $0x10] sm:$0xf]
  %v34 = vld [vmem:[%s1 + $0x14] sm:$0xf]
  %v35 = vld [vmem:[%s1 + $0x18] sm:$0xf]
  %v36 = vld [vmem:[%s1 + $0x1c] sm:$0xf]
  %v37 = vld [vmem:[%s1 + $0x20] sm:$0xf]
  %v38 = vld [vmem:[%s1 + $0x24] sm:$0xf]
  %v39 = vld [vmem:[%s1 + $0x28] sm:$0xf]
  %v40 = vld [vmem:[%s1 + $0x2c] sm:$0xf]
  %v41 = vld [vmem:[%s1 + $0x30] sm:$0xf]
  %v42 = vld [vmem:[%s1 + $0x34] sm:$0xf]
  %v43 = vld [vmem:[%s1 + $0x38] sm:$0xf]
  %v44 = vld [vmem:[%s1 + $0x3c] sm:$0xf]
  %v45 = vld [vmem:[%s1 + $0x40] sm:$0xf]
  %v46 = vld [vmem:[%s1 + $0x44] sm:$0xf]
  %v47 = vld [vmem:[%s1 + $0x48] sm:$0xf]
  %v48 = vld [vmem:[%s1 + $0x4c] sm:$0xf]
  %v49 = vld [vmem:[%s1 + $0x50] sm:$0xf]
  %v50 = vld [vmem:[%s1 + $0x54] sm:$0xf]
  %v51 = vld [vmem:[%s1 + $0x58] sm:$0xf]
  %v52 = vld [vmem:[%s1 + $0x5c] sm:$0xf]
  %v53 = vld [vmem:[%s1 + $0x60] sm:$0xf]
  %v54 = vld [vmem:[%s1 + $0x64] sm:$0xf]
  %v55 = vld [vmem:[%s1 + $0x68] sm:$0xf]
  %v56 = vld [vmem:[%s1 + $0x6c] sm:$0xf]
  %v57 = vld [vmem:[%s1 + $0x70] sm:$0xf]
  %v58 = vld [vmem:[%s1 + $0x74] sm:$0xf]
  %v59 = vld [vmem:[%s1 + $0x78] sm:$0xf]
  %v60 = vld [vmem:[%s1 + $0x7c] sm:$0xf]
  %v61 = vld [vmem:[%s1 + $0x80] sm:$0xf]
  %v62 = vld [vmem:[%s1 + $0x84] sm:$0xf]
  %v63 = vld [vmem:[%s1 + $0x88] sm:$0xf]
  %v64 = vld [vmem:[%s1 + $0x8c] sm:$0xf]
  %v65 = vld [vmem:[%s1 + $0x90] sm:$0xf]
  %v66 = vld [vmem:[%s1 + $0x94] sm:$0xf]
  %v67 = vld [vmem:[%s1 + $0x98] sm:$0xf]
  %v68 = vld [vmem:[%s1 + $0x9c] sm:$0xf]
  %v69 = vld [vmem:[%s1 + $0xa0] sm:$0xf]
  %v70 = vld [vmem:[%s1 + $0xa4] sm:$0xf]
  %v71 = vld [vmem:[%s1 + $0xa8] sm:$0xf]
  %v72 = vld [vmem:[%s1 + $0xac] sm:$0xf]
  %v73 = vld [vmem:[%s1 + $0xb0] sm:$0xf]
  %v74 = vld [vmem:[%s1 + $0xb4] sm:$0xf]
  %v75 = vld [vmem:[%s1 + $0xb8] sm:$0xf]
  %v76 = vld [vmem:[%s1 + $0xbc] sm:$0xf]
  %v77 = vld [vmem:[%s1 + $0xc0] sm:$0xf]
  %v78 = vld [vmem:[%s1 + $0xc4] sm:$0xf]
  %v79 = vld [vmem:[%s1 + $0xc8] sm:$0xf]
  %v80 = vld [vmem:[%s1 + $0xcc] sm:$0xf]
  %v81 = vld [vmem:[%s1 + $0xd0] sm:$0xf]
  %v82 = vld [vmem:[%s1 + $0xd4] sm:$0xf]
  %v83 = vld [vmem:[%s1 + $0xd8] sm:$0xf]
  %v84 = vld [vmem:[%s1 + $0xdc] sm:$0xf]
  %v85 = vld [vmem:[%s1 + $0xe0] sm:$0xf]
  %v86 = vld [vmem:[%s1 + $0xe4] sm:$0xf]
  %v87 = vld [vmem:[%s1 + $0xe8] sm:$0xf]
  %v88 = vld [vmem:[%s1 + $0xec] sm:$0xf]
  %v89 = vld [vmem:[%s1 + $0xf0] sm:$0xf]
  %v90 = vld [vmem:[%s1 + $0xf4] sm:$0xf]
  %v91 = vld [vmem:[%s1 + $0xf8] sm:$0xf]
  %v92 = vld [vmem:[%s1 + $0xfc] sm:$0xf]
  %v93 = vld [vmem:[%s1 + $0x100] sm:$0xf]
  %v94 = vld [vmem:[%s1 + $0x104] sm:$0xf]
  %v95 = vld [vmem:[%s1 + $0x108] sm:$0xf]
  %v96 = vld [vmem:[%s1 + $0x10c] sm:$0xf]
  %v97 = vld [vmem:[%s1 + $0x110] sm:$0xf]
  %v98 = vld [vmem:[%s1 + $0x114] sm:$0xf]
  %v99 = vld [vmem:[%s1 + $0x118] sm:$0xf]
  %v100 = vld [vmem:[%s1 + $0x11c] sm:$0xf]
  %v101 = vld [vmem:[%s1 + $0x120] sm:$0xf]
  %v102 = vld [vmem:[%s1 + $0x124] sm:$0xf]
  %v103 = vld [vmem:[%s1 + $0x128] sm:$0xf]
  %v104 = vld [vmem:[%s1 + $0x12c] sm:$0xf]
  %v105 = vld [vmem:[%s1 + $0x130] sm:$0xf]
  %v106 = vld [vmem:[%s1 + $0x134] sm:$0xf]
  %v107 = vld [vmem:[%s1 + $0x138] sm:$0xf]
  %v108 = vld [vmem:[%s1 + $0x13c] sm:$0xf]
  %v109 = vld [vmem:[%s1 + $0x140] sm:$0xf]
  %v110 = vld [vmem:[%s1 + $0x144] sm:$0xf]
  %v111 = vld [vmem:[%s1 + $0x148] sm:$0xf]
  %v112 = vld [vmem:[%s1 + $0x14c] sm:$0xf]
  %v113 = vld [vmem:[%s1 + $0x150] sm:$0xf]
  %v114 = vld [vmem:[%s1 + $0x154] sm:$0xf]
  %v115 = vld [vmem:[%s1 + $0x158] sm:$0xf]
  %v116 = vld [vmem:[%s1 + $0x15c] sm:$0xf]
  %v117 = vld [vmem:[%s1 + $0x160] sm:$0xf]
  %v118 = vld [vmem:[%s1 + $0x164] sm:$0xf]
  %v119 = vld [vmem:[%s1 + $0x168] sm:$0xf]
  %v120 = vld [vmem:[%s1 + $0x16c] sm:$0xf]
  %v121 = vld [vmem:[%s1 + $0x170] sm:$0xf]
  %v122 = vld [vmem:[%s1 + $0x174] sm:$0xf]
  %v123 = vld [vmem:[%s1 + $0x178] sm:$0xf]
  %v124 = vld [vmem:[%s1 + $0x17c] sm:$0xf]
  %v125 = vld [vmem:[%s1 + $0x180] sm:$0xf]
  %v126 = vld [vmem:[%s1 + $0x184] sm:$0xf]
  %v127 = vld [vmem:[%s1 + $0x188] sm:$0xf]
  %v128 = vld [vmem:[%s1 + $0x18c] sm:$0xf]
  %v129 = vld [vmem:[%s1 + $0x190] sm:$0xf]
  %v130 = vld [vmem:[%s1 + $0x194] sm:$0xf]
  %v131 = vld [vmem:[%s1 + $0x198] sm:$0xf]
  %v132 = vld [vmem:[%s1 + $0x19c] sm:$0xf]
  %v133 = vld [vmem:[%s1 + $0x1a0] sm:$0xf]
  %v134 = vld [vmem:[%s1 + $0x1a4] sm:$0xf]
  %v135 = vld [vmem:[%s1 + $0x1a8] sm:$0xf]
  %v136 = vld [vmem:[%s1 + $0x1ac] sm:$0xf]
  %v137 = vld [vmem:[%s1 + $0x1b0] sm:$0xf]
  %v138 = vld [vmem:[%s1 + $0x1b4] sm:$0xf]
  %v139 = vld [vmem:[%s1 + $0x1b8] sm:$0xf]
  %v140 = vld [vmem:[%s1 + $0x1bc] sm:$0xf]
  %v141 = vld [vmem:[%s1 + $0x1c0] sm:$0xf]
  %v142 = vld [vmem:[%s1 + $0x1c4] sm:$0xf]
  %v143 = vld [vmem:[%s1 + $0x1c8] sm:$0xf]
  %v144 = vld [vmem:[%s1 + $0x1cc] sm:$0xf]
  %v145 = vld [vmem:[%s1 + $0x1d0] sm:$0xf]
  %v146 = vld [vmem:[%s1 + $0x1d4] sm:$0xf]
  %v147 = vld [vmem:[%s1 + $0x1d8] sm:$0xf]
  %v148 = vld [vmem:[%s1 + $0x1dc] sm:$0xf]
  %v149 = vld [vmem:[%s1 + $0x1e0] sm:$0xf]
  %v150 = vld [vmem:[%s1 + $0x1e4] sm:$0xf]
  %v151 = vld [vmem:[%s1 + $0x1e8] sm:$0xf]
  %v152 = vld [vmem:[%s1 + $0x1ec] sm:$0xf]
  %v153 = vld [vmem:[%s1 + $0x1f0] sm:$0xf]
  %v154 = vld [vmem:[%s1 + $0x1f4] sm:$0xf]
  %v155 = vld [vmem:[%s1 + $0x1f8] sm:$0xf]
  %v156 = vld [vmem:[%s1 + $0x1fc] sm:$0xf]
  %v157 = vld [vmem:[%s1 + $0x200] sm:$0xf]
  %v158 = vld [vmem:[%s1 + $0x204] sm:$0xf]
  %v159 = vld [vmem:[%s1 + $0x208] sm:$0xf]
  %v160 = vld [vmem:[%s1 + $0x20c] sm:$0xf]
  %v161 = vld [vmem:[%s1 + $0x210] sm:$0xf]
  %v162 = vld [vmem:[%s1 + $0x214] sm:$0xf]
  %v163 = vld [vmem:[%s1 + $0x218] sm:$0xf]
  %v164 = vld [vmem:[%s1 + $0x21c] sm:$0xf]
  %v165 = vld [vmem:[%s1 + $0x220] sm:$0xf]
  %v166 = vld [vmem:[%s1 + $0x224] sm:$0xf]
  %v167 = vld [vmem:[%s1 + $0x228] sm:$0xf]
  %v168 = vld [vmem:[%s1 + $0x22c] sm:$0xf]
  %v169 = vld [vmem:[%s1 + $0x230] sm:$0xf]
  %v170 = vld [vmem:[%s1 + $0x234] sm:$0xf]
  %v171 = vld [vmem:[%s1 + $0x238] sm:$0xf]
  %v172 = vld [vmem:[%s1 + $0x23c] sm:$0xf]
  %v173 = vld [vmem:[%s1 + $0x240] sm:$0xf]
  %v174 = vld [vmem:[%s1 + $0x244] sm:$0xf]
  %v175 = vld [vmem:[%s1 + $0x248] sm:$0xf]
  %v176 = vld [vmem:[%s1 + $0x24c] sm:$0xf]
  %v177 = vld [vmem:[%s1 + $0x250] sm:$0xf]
  %v178 = vld [vmem:[%s1 + $0x254] sm:$0xf]
  %v179 = vld [vmem:[%s1 + $0x258] sm:$0xf]
  %v180 = vld [vmem:[%s1 + $0x25c] sm:$0xf]
  %v181 = vld [vmem:[%s1 + $0x260] sm:$0xf]
  %v182 = vld [vmem:[%s1 + $0x264] sm:$0xf]
  %v183 = vld [vmem:[%s1 + $0x268] sm:$0xf]
  %v184 = vld [vmem:[%s1 + $0x26c] sm:$0xf]
  %v185 = vld [vmem:[%s1 + $0x270] sm:$0xf]
  %v186 = vld [vmem:[%s1 + $0x274] sm:$0xf]
  %v187 = vld [vmem:[%s1 + $0x278] sm:$0xf]
  %v188 = vld [vmem:[%s1 + $0x27c] sm:$0xf]
  %v189 = vld [vmem:[%s1 + $0x280] sm:$0xf]
  %v190 = vld [vmem:[%s1 + $0x284] sm:$0xf]
  %v191 = vld [vmem:[%s1 + $0x288] sm:$0xf]
  %v192 = vld [vmem:[%s1 + $0x28c] sm:$0xf]
  %v193 = vld [vmem:[%s1 + $0x290] sm:$0xf]
  %v194 = vld [vmem:[%s1 + $0x294] sm:$0xf]
  %v195 = vld [vmem:[%s1 + $0x298] sm:$0xf]
  %v196 = vld [vmem:[%s1 + $0x29c] sm:$0xf]
  %v197 = vld [vmem:[%s1 + $0x2a0] sm:$0xf]
  %v198 = vld [vmem:[%s1 + $0x2a4] sm:$0xf]
  %v199 = vld [vmem:[%s1 + $0x2a8] sm:$0xf]
  %v200 = vld [vmem:[%s1 + $0x2ac] sm:$0xf]
  %v201 = vld [vmem:[%s1 + $0x2b0] sm:$0xf]
  %v202 = vld [vmem:[%s1 + $0x2b4] sm:$0xf]
  %v203 = vld [vmem:[%s1 + $0x2b8] sm:$0xf]
  %v204 = vld [vmem:[%s1 + $0x2bc] sm:$0xf]
  %v205 = vld [vmem:[%s1 + $0x2c0] sm:$0xf]
  %v206 = vld [vmem:[%s1 + $0x2c4] sm:$0xf]
  %v207 = vld [vmem:[%s1 + $0x2c8] sm:$0xf]
  %v208 = vld [vmem:[%s1 + $0x2cc] sm:$0xf]
  %v209 = vld [vmem:[%s1 + $0x2d0] sm:$0xf]
  %v210 = vld [vmem:[%s1 + $0x2d4] sm:$0xf]
  %v211 = vld [vmem:[%s1 + $0x2d8] sm:$0xf]
  %v212 = vld [vmem:[%s1 + $0x2dc] sm:$0xf]
  %v213 = vld [vmem:[%s1 + $0x2e0] sm:$0xf]
  %v214 = vld [vmem:[%s1 + $0x2e4] sm:$0xf]
  %v215 = vld [vmem:[%s1 + $0x2e8] sm:$0xf]
  %v216 = vld [vmem:[%s1 + $0x2ec] sm:$0xf]
  %v217 = vld [vmem:[%s1 + $0x2f0] sm:$0xf]
  %v218 = vld [vmem:[%s1 + $0x2f4] sm:$0xf]
  %v219 = vld [vmem:[%s1 + $0x2f8] sm:$0xf]
  %v220 = vld [vmem:[%s1 + $0x2fc] sm:$0xf]
  %v221 = vld [vmem:[%s1 + $0x300] sm:$0xf]
  %v222 = vld [vmem:[%s1 + $0x304] sm:$0xf]
  %v223 = vld [vmem:[%s1 + $0x308] sm:$0xf]
  %v224 = vld [vmem:[%s1 + $0x30c] sm:$0xf]
  %v225 = vld [vmem:[%s2] sm:$0x1]
  %v227 = vlaneseq
  %v228 = vshrl.u32 %v227, 7
  %v229 = vsub.s32 0, %v228
  %v230 = vrot.slane %v225, %v229
  %v246 = vunpack.c.l.b16 %v15
  %v247 = vunpack.c.h.b16 %v15
  %v248 = vunpack.c.l.b16 %v16
  %v249 = vunpack.c.h.b16 %v16
  %v250 = vunpack.c.l.b16 %v17
  %v251 = vunpack.c.h.b16 %v17
  %v252 = vunpack.c.l.b16 %v18
  %v253 = vunpack.c.h.b16 %v18
  %v254 = vunpack.c.l.b16 %v19
  %v255 = vunpack.c.h.b16 %v19
  %v256 = vunpack.c.l.b16 %v20
  %v257 = vunpack.c.h.b16 %v20
  %v258 = vunpack.c.l.b16 %v21
  %v259 = vunpack.c.l.b16 %v22
  %v260 = vunpack.c.h.b16 %v22
  %v261 = vunpack.c.l.b16 %v23
  %v262 = vunpack.c.h.b16 %v23
  %v263 = vunpack.c.l.b16 %v24
  %v264 = vunpack.c.h.b16 %v24
  %v265 = vunpack.c.l.b16 %v25
  %v266 = vunpack.c.h.b16 %v25
  %v267 = vunpack.c.l.b16 %v26
  %v268 = vunpack.c.h.b16 %v26
  %v269 = vunpack.c.l.b16 %v27
  %v270 = vunpack.c.h.b16 %v27
  %v271 = vunpack.c.l.b16 %v28
  %v272 = vpack.c.b16 %v259, %v246
  %v273 = vpack.c.b16 %v260, %v247
  %v274 = vpack.c.b16 %v261, %v248
  %v275 = vpack.c.b16 %v262, %v249
  %v276 = vpack.c.b16 %v263, %v250
  %v277 = vpack.c.b16 %v264, %v251
  %v278 = vpack.c.b16 %v265, %v252
  %v279 = vpack.c.b16 %v266, %v253
  %v280 = vpack.c.b16 %v267, %v254
  %v281 = vpack.c.b16 %v268, %v255
  %v282 = vpack.c.b16 %v269, %v256
  %v283 = vpack.c.b16 %v270, %v257
  %v284 = vpack.c.b16 %v271, %v258
  %v493 = vunpack.c.l.b16 %v29
  %v494 = vunpack.c.l.b16 %v30
  %v495 = vunpack.c.l.b16 %v31
  %v496 = vunpack.c.l.b16 %v32
  %v497 = vunpack.c.l.b16 %v33
  %v498 = vunpack.c.l.b16 %v34
  %v499 = vunpack.c.l.b16 %v35
  %v500 = vunpack.c.l.b16 %v36
  %v501 = vunpack.c.l.b16 %v37
  %v502 = vunpack.c.l.b16 %v38
  %v503 = vunpack.c.l.b16 %v39
  %v504 = vunpack.c.l.b16 %v40
  %v505 = vunpack.c.l.b16 %v41
  %v506 = vunpack.c.l.b16 %v42
  %v507 = vunpack.c.l.b16 %v43
  %v508 = vunpack.c.l.b16 %v44
  %v509 = vunpack.c.l.b16 %v45
  %v510 = vunpack.c.l.b16 %v46
  %v511 = vunpack.c.l.b16 %v47
  %v512 = vunpack.c.l.b16 %v48
  %v513 = vunpack.c.l.b16 %v49
  %v514 = vunpack.c.l.b16 %v50
  %v515 = vunpack.c.l.b16 %v51
  %v516 = vunpack.c.l.b16 %v52
  %v517 = vunpack.c.l.b16 %v53
  %v518 = vunpack.c.l.b16 %v54
  %v519 = vunpack.c.l.b16 %v55
  %v520 = vunpack.c.l.b16 %v56
  %v521 = vunpack.c.l.b16 %v57
  %v522 = vunpack.c.l.b16 %v58
  %v523 = vunpack.c.l.b16 %v59
  %v524 = vunpack.c.l.b16 %v60
  %v525 = vunpack.c.l.b16 %v61
  %v526 = vunpack.c.l.b16 %v62
  %v527 = vunpack.c.l.b16 %v63
  %v528 = vunpack.c.l.b16 %v64
  %v529 = vunpack.c.l.b16 %v65
  %v530 = vunpack.c.l.b16 %v66
  %v531 = vunpack.c.l.b16 %v67
  %v532 = vunpack.c.l.b16 %v68
  %v533 = vunpack.c.l.b16 %v69
  %v534 = vunpack.c.l.b16 %v70
  %v535 = vunpack.c.l.b16 %v71
  %v536 = vunpack.c.l.b16 %v72
  %v537 = vunpack.c.l.b16 %v73
  %v538 = vunpack.c.l.b16 %v74
  %v539 = vunpack.c.l.b16 %v75
  %v540 = vunpack.c.l.b16 %v76
  %v541 = vunpack.c.l.b16 %v77
  %v542 = vunpack.c.l.b16 %v78
  %v543 = vunpack.c.l.b16 %v79
  %v544 = vunpack.c.l.b16 %v80
  %v545 = vunpack.c.l.b16 %v81
  %v546 = vunpack.c.l.b16 %v82
  %v547 = vunpack.c.l.b16 %v83
  %v548 = vunpack.c.l.b16 %v84
  %v549 = vunpack.c.l.b16 %v85
  %v550 = vunpack.c.l.b16 %v86
  %v551 = vunpack.c.l.b16 %v87
  %v552 = vunpack.c.l.b16 %v88
  %v553 = vunpack.c.l.b16 %v89
  %v554 = vunpack.c.l.b16 %v90
  %v555 = vunpack.c.l.b16 %v91
  %v556 = vunpack.c.l.b16 %v92
  %v557 = vunpack.c.l.b16 %v93
  %v558 = vunpack.c.l.b16 %v94
  %v559 = vunpack.c.l.b16 %v95
  %v560 = vunpack.c.l.b16 %v96
  %v561 = vunpack.c.l.b16 %v97
  %v562 = vunpack.c.l.b16 %v98
  %v563 = vunpack.c.l.b16 %v99
  %v564 = vunpack.c.l.b16 %v100
  %v565 = vunpack.c.l.b16 %v101
  %v566 = vunpack.c.l.b16 %v102
  %v567 = vunpack.c.l.b16 %v103
  %v568 = vunpack.c.l.b16 %v104
  %v569 = vunpack.c.l.b16 %v105
  %v570 = vunpack.c.l.b16 %v106
  %v571 = vunpack.c.l.b16 %v107
  %v572 = vunpack.c.l.b16 %v108
  %v573 = vunpack.c.l.b16 %v109
  %v574 = vunpack.c.l.b16 %v110
  %v575 = vunpack.c.l.b16 %v111
  %v576 = vunpack.c.l.b16 %v112
  %v577 = vunpack.c.l.b16 %v113
  %v578 = vunpack.c.l.b16 %v114
  %v579 = vunpack.c.l.b16 %v115
  %v580 = vunpack.c.l.b16 %v116
  %v581 = vunpack.c.l.b16 %v117
  %v582 = vunpack.c.l.b16 %v118
  %v583 = vunpack.c.l.b16 %v119
  %v584 = vunpack.c.l.b16 %v120
  %v585 = vunpack.c.l.b16 %v121
  %v586 = vunpack.c.l.b16 %v122
  %v587 = vunpack.c.l.b16 %v123
  %v588 = vunpack.c.l.b16 %v124
  %v589 = vunpack.c.l.b16 %v125
  %v590 = vunpack.c.l.b16 %v126
  %v591 = vunpack.c.l.b16 %v127
  %v592 = vunpack.c.l.b16 %v128
  %v593 = vunpack.c.l.b16 %v129
  %v594 = vunpack.c.l.b16 %v130
  %v595 = vunpack.c.l.b16 %v131
  %v596 = vunpack.c.l.b16 %v132
  %v597 = vunpack.c.l.b16 %v133
  %v598 = vunpack.c.l.b16 %v134
  %v599 = vunpack.c.l.b16 %v135
  %v600 = vunpack.c.l.b16 %v136
  %v601 = vunpack.c.l.b16 %v137
  %v602 = vunpack.c.l.b16 %v138
  %v603 = vunpack.c.l.b16 %v139
  %v604 = vunpack.c.l.b16 %v140
  %v605 = vunpack.c.l.b16 %v141
  %v606 = vunpack.c.l.b16 %v142
  %v607 = vunpack.c.l.b16 %v143
  %v608 = vunpack.c.l.b16 %v144
  %v609 = vunpack.c.l.b16 %v145
  %v610 = vunpack.c.l.b16 %v146
  %v611 = vunpack.c.l.b16 %v147
  %v612 = vunpack.c.l.b16 %v148
  %v613 = vunpack.c.l.b16 %v149
  %v614 = vunpack.c.l.b16 %v150
  %v615 = vunpack.c.l.b16 %v151
  %v616 = vunpack.c.l.b16 %v152
  %v617 = vunpack.c.l.b16 %v153
  %v618 = vunpack.c.l.b16 %v154
  %v619 = vunpack.c.l.b16 %v155
  %v620 = vunpack.c.l.b16 %v156
  %v621 = vunpack.c.l.b16 %v157
  %v622 = vunpack.c.l.b16 %v158
  %v623 = vunpack.c.l.b16 %v159
  %v624 = vunpack.c.l.b16 %v160
  %v625 = vunpack.c.l.b16 %v161
  %v626 = vunpack.c.l.b16 %v162
  %v627 = vunpack.c.l.b16 %v163
  %v628 = vunpack.c.l.b16 %v164
  %v629 = vunpack.c.l.b16 %v165
  %v630 = vunpack.c.l.b16 %v166
  %v631 = vunpack.c.l.b16 %v167
  %v632 = vunpack.c.l.b16 %v168
  %v633 = vunpack.c.l.b16 %v169
  %v634 = vunpack.c.l.b16 %v170
  %v635 = vunpack.c.l.b16 %v171
  %v636 = vunpack.c.l.b16 %v172
  %v637 = vunpack.c.l.b16 %v173
  %v638 = vunpack.c.l.b16 %v174
  %v639 = vunpack.c.l.b16 %v175
  %v640 = vunpack.c.l.b16 %v176
  %v641 = vunpack.c.l.b16 %v177
  %v642 = vunpack.c.l.b16 %v178
  %v643 = vunpack.c.l.b16 %v179
  %v644 = vunpack.c.l.b16 %v180
  %v645 = vunpack.c.l.b16 %v181
  %v646 = vunpack.c.l.b16 %v182
  %v647 = vunpack.c.l.b16 %v183
  %v648 = vunpack.c.l.b16 %v184
  %v649 = vunpack.c.l.b16 %v185
  %v650 = vunpack.c.l.b16 %v186
  %v651 = vunpack.c.l.b16 %v187
  %v652 = vunpack.c.l.b16 %v188
  %v653 = vunpack.c.l.b16 %v189
  %v654 = vunpack.c.l.b16 %v190
  %v655 = vunpack.c.l.b16 %v191
  %v656 = vunpack.c.l.b16 %v192
  %v657 = vunpack.c.l.b16 %v193
  %v658 = vunpack.c.l.b16 %v194
  %v659 = vunpack.c.l.b16 %v195
  %v660 = vunpack.c.l.b16 %v196
  %v661 = vunpack.c.l.b16 %v197
  %v662 = vunpack.c.l.b16 %v198
  %v663 = vunpack.c.l.b16 %v199
  %v664 = vunpack.c.l.b16 %v200
  %v665 = vunpack.c.l.b16 %v201
  %v666 = vunpack.c.l.b16 %v202
  %v667 = vunpack.c.l.b16 %v203
  %v668 = vunpack.c.l.b16 %v204
  %v669 = vunpack.c.l.b16 %v205
  %v670 = vunpack.c.l.b16 %v206
  %v671 = vunpack.c.l.b16 %v207
  %v672 = vunpack.c.l.b16 %v208
  %v673 = vunpack.c.l.b16 %v209
  %v674 = vunpack.c.l.b16 %v210
  %v675 = vunpack.c.l.b16 %v211
  %v676 = vunpack.c.l.b16 %v212
  %v677 = vunpack.c.l.b16 %v213
  %v678 = vunpack.c.l.b16 %v214
  %v679 = vunpack.c.l.b16 %v215
  %v680 = vunpack.c.l.b16 %v216
  %v681 = vunpack.c.l.b16 %v217
  %v682 = vunpack.c.l.b16 %v218
  %v683 = vunpack.c.l.b16 %v219
  %v684 = vunpack.c.l.b16 %v220
  %v685 = vunpack.c.l.b16 %v221
  %v686 = vunpack.c.l.b16 %v222
  %v687 = vunpack.c.l.b16 %v223
  %v688 = vunpack.c.l.b16 %v224
  %v689 = vpack.c.b16 %v494, %v493
  %v690 = vpack.c.b16 %v496, %v495
  %v691 = vpack.c.b16 %v498, %v497
  %v692 = vpack.c.b16 %v500, %v499
  %v693 = vpack.c.b16 %v502, %v501
  %v694 = vpack.c.b16 %v504, %v503
  %v695 = vpack.c.b16 %v506, %v505
  %v696 = vpack.c.b16 %v508, %v507
  %v697 = vpack.c.b16 %v510, %v509
  %v698 = vpack.c.b16 %v512, %v511
  %v699 = vpack.c.b16 %v514, %v513
  %v700 = vpack.c.b16 %v516, %v515
  %v701 = vpack.c.b16 %v518, %v517
  %v702 = vpack.c.b16 %v520, %v519
  %v703 = vpack.c.b16 %v522, %v521
  %v704 = vpack.c.b16 %v524, %v523
  %v705 = vpack.c.b16 %v526, %v525
  %v706 = vpack.c.b16 %v528, %v527
  %v707 = vpack.c.b16 %v530, %v529
  %v708 = vpack.c.b16 %v532, %v531
  %v709 = vpack.c.b16 %v534, %v533
  %v710 = vpack.c.b16 %v536, %v535
  %v711 = vpack.c.b16 %v538, %v537
  %v712 = vpack.c.b16 %v540, %v539
  %v713 = vpack.c.b16 %v542, %v541
  %v714 = vpack.c.b16 %v544, %v543
  %v715 = vpack.c.b16 %v546, %v545
  %v716 = vpack.c.b16 %v548, %v547
  %v717 = vpack.c.b16 %v550, %v549
  %v718 = vpack.c.b16 %v552, %v551
  %v719 = vpack.c.b16 %v554, %v553
  %v720 = vpack.c.b16 %v556, %v555
  %v721 = vpack.c.b16 %v558, %v557
  %v722 = vpack.c.b16 %v560, %v559
  %v723 = vpack.c.b16 %v562, %v561
  %v724 = vpack.c.b16 %v564, %v563
  %v725 = vpack.c.b16 %v566, %v565
  %v726 = vpack.c.b16 %v568, %v567
  %v727 = vpack.c.b16 %v570, %v569
  %v728 = vpack.c.b16 %v572, %v571
  %v729 = vpack.c.b16 %v574, %v573
  %v730 = vpack.c.b16 %v576, %v575
  %v731 = vpack.c.b16 %v578, %v577
  %v732 = vpack.c.b16 %v580, %v579
  %v733 = vpack.c.b16 %v582, %v581
  %v734 = vpack.c.b16 %v584, %v583
  %v735 = vpack.c.b16 %v586, %v585
  %v736 = vpack.c.b16 %v588, %v587
  %v737 = vpack.c.b16 %v590, %v589
  %v738 = vpack.c.b16 %v592, %v591
  %v739 = vpack.c.b16 %v594, %v593
  %v740 = vpack.c.b16 %v596, %v595
  %v741 = vpack.c.b16 %v598, %v597
  %v742 = vpack.c.b16 %v600, %v599
  %v743 = vpack.c.b16 %v602, %v601
  %v744 = vpack.c.b16 %v604, %v603
  %v745 = vpack.c.b16 %v606, %v605
  %v746 = vpack.c.b16 %v608, %v607
  %v747 = vpack.c.b16 %v610, %v609
  %v748 = vpack.c.b16 %v612, %v611
  %v749 = vpack.c.b16 %v614, %v613
  %v750 = vpack.c.b16 %v616, %v615
  %v751 = vpack.c.b16 %v618, %v617
  %v752 = vpack.c.b16 %v620, %v619
  %v753 = vpack.c.b16 %v622, %v621
  %v754 = vpack.c.b16 %v624, %v623
  %v755 = vpack.c.b16 %v626, %v625
  %v756 = vpack.c.b16 %v628, %v627
  %v757 = vpack.c.b16 %v630, %v629
  %v758 = vpack.c.b16 %v632, %v631
  %v759 = vpack.c.b16 %v634, %v633
  %v760 = vpack.c.b16 %v636, %v635
  %v761 = vpack.c.b16 %v638, %v637
  %v762 = vpack.c.b16 %v640, %v639
  %v763 = vpack.c.b16 %v642, %v641
  %v764 = vpack.c.b16 %v644, %v643
  %v765 = vpack.c.b16 %v646, %v645
  %v766 = vpack.c.b16 %v648, %v647
  %v767 = vpack.c.b16 %v650, %v649
  %v768 = vpack.c.b16 %v652, %v651
  %v769 = vpack.c.b16 %v654, %v653
  %v770 = vpack.c.b16 %v656, %v655
  %v771 = vpack.c.b16 %v658, %v657
  %v772 = vpack.c.b16 %v660, %v659
  %v773 = vpack.c.b16 %v662, %v661
  %v774 = vpack.c.b16 %v664, %v663
  %v775 = vpack.c.b16 %v666, %v665
  %v776 = vpack.c.b16 %v668, %v667
  %v777 = vpack.c.b16 %v670, %v669
  %v778 = vpack.c.b16 %v672, %v671
  %v779 = vpack.c.b16 %v674, %v673
  %v780 = vpack.c.b16 %v676, %v675
  %v781 = vpack.c.b16 %v678, %v677
  %v782 = vpack.c.b16 %v680, %v679
  %v783 = vpack.c.b16 %v682, %v681
  %v784 = vpack.c.b16 %v684, %v683
  %v785 = vpack.c.b16 %v686, %v685
  %v786 = vpack.c.b16 %v688, %v687
  %vm885 = vcmask 261120
  %v887 = vsel %vm885, %v284, 0
  %889 = vmatprep.subr.bf16.mxu0 0
  %890 = vmatpush1.bf16.msra.mxu0 %v689
  %891 = vmatprep.subr.bf16.mxu0 0
  %892 = vmatpush1.bf16.msra.mxu0 %v690
  %893 = vmatprep.subr.bf16.mxu0 0
  %894 = vmatpush1.bf16.msra.mxu0 %v691
  %895 = vmatprep.subr.bf16.mxu0 0
  %896 = vmatpush1.bf16.msra.mxu0 %v692
  %897 = vmatprep.subr.bf16.mxu0 0
  %898 = vmatpush1.bf16.msra.mxu0 %v693
  %899 = vmatprep.subr.bf16.mxu0 0
  %900 = vmatpush1.bf16.msra.mxu0 %v694
  %901 = vmatprep.subr.bf16.mxu0 0
  %902 = vmatpush1.bf16.msra.mxu0 %v695
  %903 = vmatprep.subr.bf16.mxu0 0
  %904 = vmatpush1.bf16.msra.mxu0 %v696
  %905 = vmatprep.subr.bf16.mxu0 0
  %906 = vmatpush1.bf16.msra.mxu0 %v697
  %907 = vmatprep.subr.bf16.mxu0 0
  %908 = vmatpush1.bf16.msra.mxu0 %v698
  %909 = vmatprep.subr.bf16.mxu0 0
  %910 = vmatpush1.bf16.msra.mxu0 %v699
  %911 = vmatprep.subr.bf16.mxu0 0
  %912 = vmatpush1.bf16.msra.mxu0 %v700
  %913 = vmatprep.subr.bf16.mxu0 0
  %914 = vmatpush1.bf16.msra.mxu0 %v701
  %915 = vmatprep.subr.bf16.mxu0 0
  %916 = vmatpush1.bf16.msra.mxu0 %v702
  %917 = vmatprep.subr.bf16.mxu0 0
  %918 = vmatpush1.bf16.msra.mxu0 %v703
  %919 = vmatprep.subr.bf16.mxu0 0
  %920 = vmatpush1.bf16.msra.mxu0 %v704
  %921 = vmatprep.mubr.bf16.mxu0 %v273
  %922 = vmatmul.mubr.bf16.gmra.mrb[0].mxu0 %v272
  %v923 = vpop.f32.mrb[0].mxu0
  %v924 = vadd.f32 %v230, %v923
  %v925 = vpop.f32.mrb[0].mxu0
  %v926 = vpop.f32.mrb[0].mxu0
  %v927 = vadd.f32 %v230, %v926
  %v928 = vpop.f32.mrb[0].mxu0
  %929 = vdwg.mxu0
  %930 = vmatprep.subr.bf16.mxu0 0
  %931 = vmatpush1.bf16.msra.mxu0 %v705
  %932 = vmatprep.subr.bf16.mxu0 0
  %933 = vmatpush1.bf16.msra.mxu0 %v706
  %934 = vmatprep.subr.bf16.mxu0 0
  %935 = vmatpush1.bf16.msra.mxu0 %v707
  %936 = vmatprep.subr.bf16.mxu0 0
  %937 = vmatpush1.bf16.msra.mxu0 %v708
  %938 = vmatprep.subr.bf16.mxu0 0
  %939 = vmatpush1.bf16.msra.mxu0 %v709
  %940 = vmatprep.subr.bf16.mxu0 0
  %941 = vmatpush1.bf16.msra.mxu0 %v710
  %942 = vmatprep.subr.bf16.mxu0 0
  %943 = vmatpush1.bf16.msra.mxu0 %v711
  %944 = vmatprep.subr.bf16.mxu0 0
  %945 = vmatpush1.bf16.msra.mxu0 %v712
  %946 = vmatprep.subr.bf16.mxu0 0
  %947 = vmatpush1.bf16.msra.mxu0 %v713
  %948 = vmatprep.subr.bf16.mxu0 0
  %949 = vmatpush1.bf16.msra.mxu0 %v714
  %950 = vmatprep.subr.bf16.mxu0 0
  %951 = vmatpush1.bf16.msra.mxu0 %v715
  %952 = vmatprep.subr.bf16.mxu0 0
  %953 = vmatpush1.bf16.msra.mxu0 %v716
  %954 = vmatprep.subr.bf16.mxu0 0
  %955 = vmatpush1.bf16.msra.mxu0 %v717
  %956 = vmatprep.subr.bf16.mxu0 0
  %957 = vmatpush1.bf16.msra.mxu0 %v718
  %958 = vmatprep.subr.bf16.mxu0 0
  %959 = vmatpush1.bf16.msra.mxu0 %v719
  %960 = vmatprep.subr.bf16.mxu0 0
  %961 = vmatpush1.bf16.msra.mxu0 %v720
  %962 = vmatprep.mubr.bf16.mxu0 %v275
  %963 = vmatmul.mubr.bf16.gmra.mrb[0].mxu0 %v274
  %v964 = vpop.f32.mrb[0].mxu0
  %v965 = vadd.f32 %v924, %v964
  %v966 = vpop.f32.mrb[0].mxu0
  %v967 = vpop.f32.mrb[0].mxu0
  %v968 = vadd.f32 %v927, %v967
  %v969 = vpop.f32.mrb[0].mxu0
  %970 = vdwg.mxu0
  %971 = vmatprep.subr.bf16.mxu0 0
  %972 = vmatpush1.bf16.msra.mxu0 %v721
  %973 = vmatprep.subr.bf16.mxu0 0
  %974 = vmatpush1.bf16.msra.mxu0 %v722
  %975 = vmatprep.subr.bf16.mxu0 0
  %976 = vmatpush1.bf16.msra.mxu0 %v723
  %977 = vmatprep.subr.bf16.mxu0 0
  %978 = vmatpush1.bf16.msra.mxu0 %v724
  %979 = vmatprep.subr.bf16.mxu0 0
  %980 = vmatpush1.bf16.msra.mxu0 %v725
  %981 = vmatprep.subr.bf16.mxu0 0
  %982 = vmatpush1.bf16.msra.mxu0 %v726
  %983 = vmatprep.subr.bf16.mxu0 0
  %984 = vmatpush1.bf16.msra.mxu0 %v727
  %985 = vmatprep.subr.bf16.mxu0 0
  %986 = vmatpush1.bf16.msra.mxu0 %v728
  %987 = vmatprep.subr.bf16.mxu0 0
  %988 = vmatpush1.bf16.msra.mxu0 %v729
  %989 = vmatprep.subr.bf16.mxu0 0
  %990 = vmatpush1.bf16.msra.mxu0 %v730
  %991 = vmatprep.subr.bf16.mxu0 0
  %992 = vmatpush1.bf16.msra.mxu0 %v731
  %993 = vmatprep.subr.bf16.mxu0 0
  %994 = vmatpush1.bf16.msra.mxu0 %v732
  %995 = vmatprep.subr.bf16.mxu0 0
  %996 = vmatpush1.bf16.msra.mxu0 %v733
  %997 = vmatprep.subr.bf16.mxu0 0
  %998 = vmatpush1.bf16.msra.mxu0 %v734
  %999 = vmatprep.subr.bf16.mxu0 0
  %1000 = vmatpush1.bf16.msra.mxu0 %v735
  %1001 = vmatprep.subr.bf16.mxu0 0
  %1002 = vmatpush1.bf16.msra.mxu0 %v736
  %1003 = vmatprep.mubr.bf16.mxu0 %v277
  %1004 = vmatmul.mubr.bf16.gmra.mrb[0].mxu0 %v276
  %v1005 = vpop.f32.mrb[0].mxu0
  %v1006 = vadd.f32 %v965, %v1005
  %v1007 = vpop.f32.mrb[0].mxu0
  %v1008 = vpop.f32.mrb[0].mxu0
  %v1009 = vadd.f32 %v968, %v1008
  %v1010 = vpop.f32.mrb[0].mxu0
  %1011 = vdwg.mxu0
  %1012 = vmatprep.subr.bf16.mxu0 0
  %1013 = vmatpush1.bf16.msra.mxu0 %v737
  %1014 = vmatprep.subr.bf16.mxu0 0
  %1015 = vmatpush1.bf16.msra.mxu0 %v738
  %1016 = vmatprep.subr.bf16.mxu0 0
  %1017 = vmatpush1.bf16.msra.mxu0 %v739
  %1018 = vmatprep.subr.bf16.mxu0 0
  %1019 = vmatpush1.bf16.msra.mxu0 %v740
  %1020 = vmatprep.subr.bf16.mxu0 0
  %1021 = vmatpush1.bf16.msra.mxu0 %v741
  %1022 = vmatprep.subr.bf16.mxu0 0
  %1023 = vmatpush1.bf16.msra.mxu0 %v742
  %1024 = vmatprep.subr.bf16.mxu0 0
  %1025 = vmatpush1.bf16.msra.mxu0 %v743
  %1026 = vmatprep.subr.bf16.mxu0 0
  %1027 = vmatpush1.bf16.msra.mxu0 %v744
  %1028 = vmatprep.subr.bf16.mxu0 0
  %1029 = vmatpush1.bf16.msra.mxu0 %v745
  %1030 = vmatprep.subr.bf16.mxu0 0
  %1031 = vmatpush1.bf16.msra.mxu0 %v746
  %1032 = vmatprep.subr.bf16.mxu0 0
  %1033 = vmatpush1.bf16.msra.mxu0 %v747
  %1034 = vmatprep.subr.bf16.mxu0 0
  %1035 = vmatpush1.bf16.msra.mxu0 %v748
  %1036 = vmatprep.subr.bf16.mxu0 0
  %1037 = vmatpush1.bf16.msra.mxu0 %v749
  %1038 = vmatprep.subr.bf16.mxu0 0
  %1039 = vmatpush1.bf16.msra.mxu0 %v750
  %1040 = vmatprep.subr.bf16.mxu0 0
  %1041 = vmatpush1.bf16.msra.mxu0 %v751
  %1042 = vmatprep.subr.bf16.mxu0 0
  %1043 = vmatpush1.bf16.msra.mxu0 %v752
  %1044 = vmatprep.mubr.bf16.mxu0 %v279
  %1045 = vmatmul.mubr.bf16.gmra.mrb[0].mxu0 %v278
  %v1046 = vpop.f32.mrb[0].mxu0
  %v1047 = vadd.f32 %v1006, %v1046
  %v1048 = vpop.f32.mrb[0].mxu0
  %v1049 = vpop.f32.mrb[0].mxu0
  %v1050 = vadd.f32 %v1009, %v1049
  %v1051 = vpop.f32.mrb[0].mxu0
  %1052 = vdwg.mxu0
  %1053 = vmatprep.subr.bf16.mxu0 0
  %1054 = vmatpush1.bf16.msra.mxu0 %v753
  %1055 = vmatprep.subr.bf16.mxu0 0
  %1056 = vmatpush1.bf16.msra.mxu0 %v754
  %1057 = vmatprep.subr.bf16.mxu0 0
  %1058 = vmatpush1.bf16.msra.mxu0 %v755
  %1059 = vmatprep.subr.bf16.mxu0 0
  %1060 = vmatpush1.bf16.msra.mxu0 %v756
  %1061 = vmatprep.subr.bf16.mxu0 0
  %1062 = vmatpush1.bf16.msra.mxu0 %v757
  %1063 = vmatprep.subr.bf16.mxu0 0
  %1064 = vmatpush1.bf16.msra.mxu0 %v758
  %1065 = vmatprep.subr.bf16.mxu0 0
  %1066 = vmatpush1.bf16.msra.mxu0 %v759
  %1067 = vmatprep.subr.bf16.mxu0 0
  %1068 = vmatpush1.bf16.msra.mxu0 %v760
  %1069 = vmatprep.subr.bf16.mxu0 0
  %1070 = vmatpush1.bf16.msra.mxu0 %v761
  %1071 = vmatprep.subr.bf16.mxu0 0
  %1072 = vmatpush1.bf16.msra.mxu0 %v762
  %1073 = vmatprep.subr.bf16.mxu0 0
  %1074 = vmatpush1.bf16.msra.mxu0 %v763
  %1075 = vmatprep.subr.bf16.mxu0 0
  %1076 = vmatpush1.bf16.msra.mxu0 %v764
  %1077 = vmatprep.subr.bf16.mxu0 0
  %1078 = vmatpush1.bf16.msra.mxu0 %v765
  %1079 = vmatprep.subr.bf16.mxu0 0
  %1080 = vmatpush1.bf16.msra.mxu0 %v766
  %1081 = vmatprep.subr.bf16.mxu0 0
  %1082 = vmatpush1.bf16.msra.mxu0 %v767
  %1083 = vmatprep.subr.bf16.mxu0 0
  %1084 = vmatpush1.bf16.msra.mxu0 %v768
  %1085 = vmatprep.mubr.bf16.mxu0 %v281
  %1086 = vmatmul.mubr.bf16.gmra.mrb[0].mxu0 %v280
  %v1087 = vpop.f32.mrb[0].mxu0
  %v1088 = vadd.f32 %v1047, %v1087
  %v1089 = vpop.f32.mrb[0].mxu0
  %v1090 = vpop.f32.mrb[0].mxu0
  %v1091 = vadd.f32 %v1050, %v1090
  %v1092 = vpop.f32.mrb[0].mxu0
  %1093 = vdwg.mxu0
  %1094 = vmatprep.subr.bf16.mxu0 0
  %1095 = vmatpush1.bf16.msra.mxu0 %v769
  %1096 = vmatprep.subr.bf16.mxu0 0
  %1097 = vmatpush1.bf16.msra.mxu0 %v770
  %1098 = vmatprep.subr.bf16.mxu0 0
  %1099 = vmatpush1.bf16.msra.mxu0 %v771
  %1100 = vmatprep.subr.bf16.mxu0 0
  %1101 = vmatpush1.bf16.msra.mxu0 %v772
  %1102 = vmatprep.subr.bf16.mxu0 0
  %1103 = vmatpush1.bf16.msra.mxu0 %v773
  %1104 = vmatprep.subr.bf16.mxu0 0
  %1105 = vmatpush1.bf16.msra.mxu0 %v774
  %1106 = vmatprep.subr.bf16.mxu0 0
  %1107 = vmatpush1.bf16.msra.mxu0 %v775
  %1108 = vmatprep.subr.bf16.mxu0 0
  %1109 = vmatpush1.bf16.msra.mxu0 %v776
  %1110 = vmatprep.subr.bf16.mxu0 0
  %1111 = vmatpush1.bf16.msra.mxu0 %v777
  %1112 = vmatprep.subr.bf16.mxu0 0
  %1113 = vmatpush1.bf16.msra.mxu0 %v778
  %1114 = vmatprep.subr.bf16.mxu0 0
  %1115 = vmatpush1.bf16.msra.mxu0 %v779
  %1116 = vmatprep.subr.bf16.mxu0 0
  %1117 = vmatpush1.bf16.msra.mxu0 %v780
  %1118 = vmatprep.subr.bf16.mxu0 0
  %1119 = vmatpush1.bf16.msra.mxu0 %v781
  %1120 = vmatprep.subr.bf16.mxu0 0
  %1121 = vmatpush1.bf16.msra.mxu0 %v782
  %1122 = vmatprep.subr.bf16.mxu0 0
  %1123 = vmatpush1.bf16.msra.mxu0 %v783
  %1124 = vmatprep.subr.bf16.mxu0 0
  %1125 = vmatpush1.bf16.msra.mxu0 %v784
  %1126 = vmatprep.mubr.bf16.mxu0 %v283
  %1127 = vmatmul.mubr.bf16.gmra.mrb[0].mxu0 %v282
  %v1128 = vpop.f32.mrb[0].mxu0
  %v1129 = vadd.f32 %v1088, %v1128
  %v1130 = vpop.f32.mrb[0].mxu0
  %v1131 = vpop.f32.mrb[0].mxu0
  %v1132 = vadd.f32 %v1091, %v1131
  %v1133 = vpop.f32.mrb[0].mxu0
  %1134 = vdwg.mxu0
  %1135 = vmatprep.subr.bf16.mxu0 0
  %1136 = vmatpush1.bf16.msra.mxu0 %v785
  %1137 = vmatprep.subr.bf16.mxu0 0
  %1138 = vmatpush1.bf16.msra.mxu0 %v786
  %1139 = vmatprep.subr.bf16.mxu0 0
  %1140 = vmatpush1.bf16.msra.mxu0 0
  %1141 = vmatprep.subr.bf16.mxu0 0
  %1142 = vmatpush1.bf16.msra.mxu0 0
  %1143 = vmatprep.subr.bf16.mxu0 0
  %1144 = vmatpush1.bf16.msra.mxu0 0
  %1145 = vmatprep.subr.bf16.mxu0 0
  %1146 = vmatpush1.bf16.msra.mxu0 0
  %1147 = vmatprep.subr.bf16.mxu0 0
  %1148 = vmatpush1.bf16.msra.mxu0 0
  %1149 = vmatprep.subr.bf16.mxu0 0
  %1150 = vmatpush1.bf16.msra.mxu0 0
  %1151 = vmatprep.subr.bf16.mxu0 0
  %1152 = vmatpush1.bf16.msra.mxu0 0
  %1153 = vmatprep.subr.bf16.mxu0 0
  %1154 = vmatpush1.bf16.msra.mxu0 0
  %1155 = vmatprep.subr.bf16.mxu0 0
  %1156 = vmatpush1.bf16.msra.mxu0 0
  %1157 = vmatprep.subr.bf16.mxu0 0
  %1158 = vmatpush1.bf16.msra.mxu0 0
  %1159 = vmatprep.subr.bf16.mxu0 0
  %1160 = vmatpush1.bf16.msra.mxu0 0
  %1161 = vmatprep.subr.bf16.mxu0 0
  %1162 = vmatpush1.bf16.msra.mxu0 0
  %1163 = vmatprep.subr.bf16.mxu0 0
  %1164 = vmatpush1.bf16.msra.mxu0 0
  %1165 = vmatprep.subr.bf16.mxu0 0
  %1166 = vmatpush1.bf16.msra.mxu0 0
  %1167 = vmatprep.mubr.bf16.mxu0 0
  %1168 = vmatmul.mubr.bf16.gmra.mrb[0].mxu0 %v887
  %v1169 = vpop.f32.mrb[0].mxu0
  %v1170 = vadd.f32 %v1129, %v1169
  %v1171 = vpop.f32.mrb[0].mxu0
  %v1172 = vpop.f32.mrb[0].mxu0
  %v1173 = vadd.f32 %v1132, %v1172
  %v1174 = vpop.f32.mrb[0].mxu0
  %1175 = vdwg.mxu0
  %1176 = vst [vmem:[%s3] sm:$0xff] %v1170
  %1177 = vst [vmem:[%s3 + $0x8] sm:$0xff] %v1173
  // Predicated region
  $region14: #{cnn_forward.5} parent=0 // pred_check
    _
  $region15: #{cnn_forward.5} parent=0 // pred_check_branch
    %1179 = sbr.rel (0) target = $region17
  $region16: #{cnn_forward.5} parent=0 // pred_region
    _
  $region17: #{cnn_forward.5} parent=0 // pred_fallthru
    _
  // Predicated region
  $region18: #{cnn_forward.5} parent=0 // pred_check
    _
  $region19: #{cnn_forward.5} parent=0 // pred_check_branch
    %1181 = sbr.rel (0) target = $region21
  $region20: #{cnn_forward.5} parent=0 // pred_region
    _
  $region21: #{cnn_forward.5} parent=0 // pred_fallthru
    _

</llo_original>
